<compile_context>
chip_gen: v7x
topology: tpu7x:2x2x1
jax: 0.10.0
libtpu: 0.0.40
codegen_flags: <defaults>
</compile_context>

<pallas_src>
import math

import jax
import jax.numpy as jnp
from jax.experimental import pallas as pl
from jax.experimental.pallas import tpu as pltpu


def _make_kernel(C_in, C_out, KH, KW, OH, OW, eps):
    inv_m = 1.0 / float(OH * OW)

    def kernel(xp_ref, w_ref, b_ref, y_ref):
        # xp_ref: (C_in, Hp, Wp)  padded input for this batch element (VMEM)
        # w_ref : (C_out*C_in*KH*KW,)  flat conv weights, torch OIHW order (SMEM)
        # b_ref : (C_out,)  conv bias (SMEM)
        # y_ref : (C_out, OH, OW)  normalized output (VMEM)

        # Conv accumulators: one (OH, OW) plane per output channel, bias folded in.
        planes = [jnp.zeros((OH, OW), jnp.float32) + b_ref[co] for co in range(C_out)]

        # Direct convolution: for each static (kh, kw, ci) load the shifted
        # window once from VMEM and fan it out to all output channels with
        # scalar-from-SMEM multiplies (pure VPU work, no reshapes).
        for kh in range(KH):
            for kw in range(KW):
                for ci in range(C_in):
                    xwin = xp_ref[ci, kh:kh + OH, kw:kw + OW].astype(jnp.float32)
                    for co in range(C_out):
                        widx = ((co * C_in + ci) * KH + kh) * KW + kw
                        planes[co] = planes[co] + w_ref[widx] * xwin

        # InstanceNorm2d finalize (biased variance, eps, no affine), fused.
        for co in range(C_out):
            p = planes[co]
            mean = jnp.sum(p) * jnp.float32(inv_m)
            c = p - mean
            var = jnp.sum(c * c) * jnp.float32(inv_m)
            inv_std = jax.lax.rsqrt(var + jnp.float32(eps))
            y_ref[co, :, :] = (c * inv_std).astype(y_ref.dtype)

    return kernel


def layernorm_conv2d_forward(x, weight, bias, *, stride=1, padding=0, eps=1e-5):
    """x: (N, C_in, H, W); weight: (C_out, C_in, KH, KW) (torch OIHW); bias: (C_out,)."""
    if stride != 1:
        # TODO(synk): stride > 1 not implemented (module default stride=1 is used).
        raise NotImplementedError("stride != 1 not supported")

    N, C_in, H, W = x.shape
    C_out, C_in_w, KH, KW = weight.shape
    assert C_in_w == C_in
    OH = H + 2 * padding - KH + 1
    OW = W + 2 * padding - KW + 1
    Hp, Wp = H + 2 * padding, W + 2 * padding

    xp = jnp.pad(x, ((0, 0), (0, 0), (padding, padding), (padding, padding)))
    w_flat = weight.astype(jnp.float32).reshape(-1)   # free reshape, OIHW order kept
    b = bias.astype(jnp.float32)

    kernel = _make_kernel(C_in, C_out, KH, KW, OH, OW, eps)

    flops = N * (2 * C_out * C_in * KH * KW * OH * OW + 6 * C_out * OH * OW)
    bytes_accessed = 4 * (xp.size + w_flat.size + b.size + N * C_out * OH * OW)
    cost = pl.CostEstimate(flops=flops,
                           transcendentals=N * C_out,
                           bytes_accessed=bytes_accessed)

    y = pl.pallas_call(
        kernel,
        out_shape=jax.ShapeDtypeStruct((N, C_out, OH, OW), x.dtype),
        grid=(N,),
        in_specs=[
            pl.BlockSpec((None, C_in, Hp, Wp), lambda n: (n, 0, 0, 0)),
            pl.BlockSpec(memory_space=pltpu.MemorySpace.SMEM),   # flat weights
            pl.BlockSpec(memory_space=pltpu.MemorySpace.SMEM),   # bias
        ],
        out_specs=pl.BlockSpec((None, C_out, OH, OW), lambda n: (n, 0, 0, 0)),
        compiler_params=pltpu.CompilerParams(
            dimension_semantics=("parallel",),
            vmem_limit_bytes=32 * 1024 * 1024),
        cost_estimate=cost,
    )(xp, w_flat, b)
    return y


def _reference(x, weight, bias, *, stride=1, padding=0, eps=1e-5):
    """Pure-JAX reference of Conv2d -> InstanceNorm2d (no affine)."""
    y = jax.lax.conv_general_dilated(
        x, weight,
        window_strides=(stride, stride),
        padding=((padding, padding), (padding, padding)),
        dimension_numbers=("NCHW", "OIHW", "NCHW"),
        precision=jax.lax.Precision.HIGHEST)
    y = y + bias[None, :, None, None]
    mean = jnp.mean(y, axis=(2, 3), keepdims=True)
    var = jnp.mean((y - mean) ** 2, axis=(2, 3), keepdims=True)  # biased, as in torch
    return (y - mean) / jnp.sqrt(var + eps)


if __name__ == "__main__":
    key = jax.random.PRNGKey(0)
    kx, kw, kb = jax.random.split(key, 3)

    N, C_in, C_out, H, W, K = 2, 4, 8, 16, 16, 3
    padding = 1   # keeps 16x16 spatial output

    x = jax.random.normal(kx, (N, C_in, H, W), dtype=jnp.float32)
    # Conv2d default init: U(-1/sqrt(fan_in), 1/sqrt(fan_in))
    fan_in = C_in * K * K
    bound = 1.0 / math.sqrt(fan_in)
    weight = jax.random.uniform(kw, (C_out, C_in, K, K), jnp.float32, -bound, bound)
    bias = jax.random.uniform(kb, (C_out,), jnp.float32, -bound, bound)

    y = layernorm_conv2d_forward(x, weight, bias, stride=1, padding=padding)
    y = jax.block_until_ready(y)

    y_ref = _reference(x, weight, bias, stride=1, padding=padding)
    assert y.shape == (N, C_out, H, W)
    assert jnp.allclose(y, y_ref, atol=1e-3, rtol=1e-3), "mismatch vs reference"

    print("KERNEL_OK")
</pallas_src>

<mosaic_0001>
module attributes {stable_mosaic.version = 11 : i64} {
  func.func @kernel(%arg0: i32, %arg1: memref<1x4x18x18xf32, #tpu.memory_space<vmem>>, %arg2: memref<288xf32, #tpu.memory_space<smem>>, %arg3: memref<8xf32, #tpu.memory_space<smem>>, %arg4: memref<1x8x16x16xf32, #tpu.memory_space<vmem>>) attributes {dimension_semantics = [#tpu.dimension_semantics<parallel>], iteration_bounds = array<i64: 2>, scalar_prefetch = 0 : i64, scratch_operands = 0 : i64, tpu.core_type = #tpu.core_type<tc>, window_params = [{transform_indices = @transform_0, window_bounds = array<i64: 1, 4, 18, 18>}, {transform_indices = @transform_1, window_bounds = array<i64: 288>}, {transform_indices = @transform_2, window_bounds = array<i64: 8>}, {transform_indices = @transform_3, window_bounds = array<i64: 1, 8, 16, 16>}]} {
    %cst = arith.constant 0.000000e+00 : f32
    %0 = vector.broadcast %cst : f32 to vector<16x16xf32>
    %c0 = arith.constant 0 : index
    %1 = memref.load %arg3[%c0] : memref<8xf32, #tpu.memory_space<smem>>
    %2 = vector.broadcast %1 : f32 to vector<16x16xf32>
    %3 = arith.addf %0, %2 : vector<16x16xf32>
    %cst_0 = arith.constant 0.000000e+00 : f32
    %4 = vector.broadcast %cst_0 : f32 to vector<16x16xf32>
    %c1 = arith.constant 1 : index
    %5 = memref.load %arg3[%c1] : memref<8xf32, #tpu.memory_space<smem>>
    %6 = vector.broadcast %5 : f32 to vector<16x16xf32>
    %7 = arith.addf %4, %6 : vector<16x16xf32>
    %cst_1 = arith.constant 0.000000e+00 : f32
    %8 = vector.broadcast %cst_1 : f32 to vector<16x16xf32>
    %c2 = arith.constant 2 : index
    %9 = memref.load %arg3[%c2] : memref<8xf32, #tpu.memory_space<smem>>
    %10 = vector.broadcast %9 : f32 to vector<16x16xf32>
    %11 = arith.addf %8, %10 : vector<16x16xf32>
    %cst_2 = arith.constant 0.000000e+00 : f32
    %12 = vector.broadcast %cst_2 : f32 to vector<16x16xf32>
    %c3 = arith.constant 3 : index
    %13 = memref.load %arg3[%c3] : memref<8xf32, #tpu.memory_space<smem>>
    %14 = vector.broadcast %13 : f32 to vector<16x16xf32>
    %15 = arith.addf %12, %14 : vector<16x16xf32>
    %cst_3 = arith.constant 0.000000e+00 : f32
    %16 = vector.broadcast %cst_3 : f32 to vector<16x16xf32>
    %c4 = arith.constant 4 : index
    %17 = memref.load %arg3[%c4] : memref<8xf32, #tpu.memory_space<smem>>
    %18 = vector.broadcast %17 : f32 to vector<16x16xf32>
    %19 = arith.addf %16, %18 : vector<16x16xf32>
    %cst_4 = arith.constant 0.000000e+00 : f32
    %20 = vector.broadcast %cst_4 : f32 to vector<16x16xf32>
    %c5 = arith.constant 5 : index
    %21 = memref.load %arg3[%c5] : memref<8xf32, #tpu.memory_space<smem>>
    %22 = vector.broadcast %21 : f32 to vector<16x16xf32>
    %23 = arith.addf %20, %22 : vector<16x16xf32>
    %cst_5 = arith.constant 0.000000e+00 : f32
    %24 = vector.broadcast %cst_5 : f32 to vector<16x16xf32>
    %c6 = arith.constant 6 : index
    %25 = memref.load %arg3[%c6] : memref<8xf32, #tpu.memory_space<smem>>
    %26 = vector.broadcast %25 : f32 to vector<16x16xf32>
    %27 = arith.addf %24, %26 : vector<16x16xf32>
    %cst_6 = arith.constant 0.000000e+00 : f32
    %28 = vector.broadcast %cst_6 : f32 to vector<16x16xf32>
    %c7 = arith.constant 7 : index
    %29 = memref.load %arg3[%c7] : memref<8xf32, #tpu.memory_space<smem>>
    %30 = vector.broadcast %29 : f32 to vector<16x16xf32>
    %31 = arith.addf %28, %30 : vector<16x16xf32>
    %c0_7 = arith.constant 0 : index
    %c0_8 = arith.constant 0 : index
    %c0_9 = arith.constant 0 : index
    %c0_10 = arith.constant 0 : index
    %32 = vector.load %arg1[%c0_7, %c0_8, %c0_9, %c0_10] : memref<1x4x18x18xf32, #tpu.memory_space<vmem>>, vector<1x1x16x16xf32>
    %33 = vector.shape_cast %32 : vector<1x1x16x16xf32> to vector<16x16xf32>
    %c0_11 = arith.constant 0 : index
    %34 = memref.load %arg2[%c0_11] : memref<288xf32, #tpu.memory_space<smem>>
    %35 = vector.broadcast %34 : f32 to vector<16x16xf32>
    %36 = arith.mulf %35, %33 : vector<16x16xf32>
    %37 = arith.addf %3, %36 : vector<16x16xf32>
    %c36 = arith.constant 36 : index
    %38 = memref.load %arg2[%c36] : memref<288xf32, #tpu.memory_space<smem>>
    %39 = vector.broadcast %38 : f32 to vector<16x16xf32>
    %40 = arith.mulf %39, %33 : vector<16x16xf32>
    %41 = arith.addf %7, %40 : vector<16x16xf32>
    %c72 = arith.constant 72 : index
    %42 = memref.load %arg2[%c72] : memref<288xf32, #tpu.memory_space<smem>>
    %43 = vector.broadcast %42 : f32 to vector<16x16xf32>
    %44 = arith.mulf %43, %33 : vector<16x16xf32>
    %45 = arith.addf %11, %44 : vector<16x16xf32>
    %c108 = arith.constant 108 : index
    %46 = memref.load %arg2[%c108] : memref<288xf32, #tpu.memory_space<smem>>
    %47 = vector.broadcast %46 : f32 to vector<16x16xf32>
    %48 = arith.mulf %47, %33 : vector<16x16xf32>
    %49 = arith.addf %15, %48 : vector<16x16xf32>
    %c144 = arith.constant 144 : index
    %50 = memref.load %arg2[%c144] : memref<288xf32, #tpu.memory_space<smem>>
    %51 = vector.broadcast %50 : f32 to vector<16x16xf32>
    %52 = arith.mulf %51, %33 : vector<16x16xf32>
    %53 = arith.addf %19, %52 : vector<16x16xf32>
    %c180 = arith.constant 180 : index
    %54 = memref.load %arg2[%c180] : memref<288xf32, #tpu.memory_space<smem>>
    %55 = vector.broadcast %54 : f32 to vector<16x16xf32>
    %56 = arith.mulf %55, %33 : vector<16x16xf32>
    %57 = arith.addf %23, %56 : vector<16x16xf32>
    %c216 = arith.constant 216 : index
    %58 = memref.load %arg2[%c216] : memref<288xf32, #tpu.memory_space<smem>>
    %59 = vector.broadcast %58 : f32 to vector<16x16xf32>
    %60 = arith.mulf %59, %33 : vector<16x16xf32>
    %61 = arith.addf %27, %60 : vector<16x16xf32>
    %c252 = arith.constant 252 : index
    %62 = memref.load %arg2[%c252] : memref<288xf32, #tpu.memory_space<smem>>
    %63 = vector.broadcast %62 : f32 to vector<16x16xf32>
    %64 = arith.mulf %63, %33 : vector<16x16xf32>
    %65 = arith.addf %31, %64 : vector<16x16xf32>
    %c0_12 = arith.constant 0 : index
    %c1_13 = arith.constant 1 : index
    %c0_14 = arith.constant 0 : index
    %c0_15 = arith.constant 0 : index
    %66 = vector.load %arg1[%c0_12, %c1_13, %c0_14, %c0_15] : memref<1x4x18x18xf32, #tpu.memory_space<vmem>>, vector<1x1x16x16xf32>
    %67 = vector.shape_cast %66 : vector<1x1x16x16xf32> to vector<16x16xf32>
    %c9 = arith.constant 9 : index
    %68 = memref.load %arg2[%c9] : memref<288xf32, #tpu.memory_space<smem>>
    %69 = vector.broadcast %68 : f32 to vector<16x16xf32>
    %70 = arith.mulf %69, %67 : vector<16x16xf32>
    %71 = arith.addf %37, %70 : vector<16x16xf32>
    %c45 = arith.constant 45 : index
    %72 = memref.load %arg2[%c45] : memref<288xf32, #tpu.memory_space<smem>>
    %73 = vector.broadcast %72 : f32 to vector<16x16xf32>
    %74 = arith.mulf %73, %67 : vector<16x16xf32>
    %75 = arith.addf %41, %74 : vector<16x16xf32>
    %c81 = arith.constant 81 : index
    %76 = memref.load %arg2[%c81] : memref<288xf32, #tpu.memory_space<smem>>
    %77 = vector.broadcast %76 : f32 to vector<16x16xf32>
    %78 = arith.mulf %77, %67 : vector<16x16xf32>
    %79 = arith.addf %45, %78 : vector<16x16xf32>
    %c117 = arith.constant 117 : index
    %80 = memref.load %arg2[%c117] : memref<288xf32, #tpu.memory_space<smem>>
    %81 = vector.broadcast %80 : f32 to vector<16x16xf32>
    %82 = arith.mulf %81, %67 : vector<16x16xf32>
    %83 = arith.addf %49, %82 : vector<16x16xf32>
    %c153 = arith.constant 153 : index
    %84 = memref.load %arg2[%c153] : memref<288xf32, #tpu.memory_space<smem>>
    %85 = vector.broadcast %84 : f32 to vector<16x16xf32>
    %86 = arith.mulf %85, %67 : vector<16x16xf32>
    %87 = arith.addf %53, %86 : vector<16x16xf32>
    %c189 = arith.constant 189 : index
    %88 = memref.load %arg2[%c189] : memref<288xf32, #tpu.memory_space<smem>>
    %89 = vector.broadcast %88 : f32 to vector<16x16xf32>
    %90 = arith.mulf %89, %67 : vector<16x16xf32>
    %91 = arith.addf %57, %90 : vector<16x16xf32>
    %c225 = arith.constant 225 : index
    %92 = memref.load %arg2[%c225] : memref<288xf32, #tpu.memory_space<smem>>
    %93 = vector.broadcast %92 : f32 to vector<16x16xf32>
    %94 = arith.mulf %93, %67 : vector<16x16xf32>
    %95 = arith.addf %61, %94 : vector<16x16xf32>
    %c261 = arith.constant 261 : index
    %96 = memref.load %arg2[%c261] : memref<288xf32, #tpu.memory_space<smem>>
    %97 = vector.broadcast %96 : f32 to vector<16x16xf32>
    %98 = arith.mulf %97, %67 : vector<16x16xf32>
    %99 = arith.addf %65, %98 : vector<16x16xf32>
    %c0_16 = arith.constant 0 : index
    %c2_17 = arith.constant 2 : index
    %c0_18 = arith.constant 0 : index
    %c0_19 = arith.constant 0 : index
    %100 = vector.load %arg1[%c0_16, %c2_17, %c0_18, %c0_19] : memref<1x4x18x18xf32, #tpu.memory_space<vmem>>, vector<1x1x16x16xf32>
    %101 = vector.shape_cast %100 : vector<1x1x16x16xf32> to vector<16x16xf32>
    %c18 = arith.constant 18 : index
    %102 = memref.load %arg2[%c18] : memref<288xf32, #tpu.memory_space<smem>>
    %103 = vector.broadcast %102 : f32 to vector<16x16xf32>
    %104 = arith.mulf %103, %101 : vector<16x16xf32>
    %105 = arith.addf %71, %104 : vector<16x16xf32>
    %c54 = arith.constant 54 : index
    %106 = memref.load %arg2[%c54] : memref<288xf32, #tpu.memory_space<smem>>
    %107 = vector.broadcast %106 : f32 to vector<16x16xf32>
    %108 = arith.mulf %107, %101 : vector<16x16xf32>
    %109 = arith.addf %75, %108 : vector<16x16xf32>
    %c90 = arith.constant 90 : index
    %110 = memref.load %arg2[%c90] : memref<288xf32, #tpu.memory_space<smem>>
    %111 = vector.broadcast %110 : f32 to vector<16x16xf32>
    %112 = arith.mulf %111, %101 : vector<16x16xf32>
    %113 = arith.addf %79, %112 : vector<16x16xf32>
    %c126 = arith.constant 126 : index
    %114 = memref.load %arg2[%c126] : memref<288xf32, #tpu.memory_space<smem>>
    %115 = vector.broadcast %114 : f32 to vector<16x16xf32>
    %116 = arith.mulf %115, %101 : vector<16x16xf32>
    %117 = arith.addf %83, %116 : vector<16x16xf32>
    %c162 = arith.constant 162 : index
    %118 = memref.load %arg2[%c162] : memref<288xf32, #tpu.memory_space<smem>>
    %119 = vector.broadcast %118 : f32 to vector<16x16xf32>
    %120 = arith.mulf %119, %101 : vector<16x16xf32>
    %121 = arith.addf %87, %120 : vector<16x16xf32>
    %c198 = arith.constant 198 : index
    %122 = memref.load %arg2[%c198] : memref<288xf32, #tpu.memory_space<smem>>
    %123 = vector.broadcast %122 : f32 to vector<16x16xf32>
    %124 = arith.mulf %123, %101 : vector<16x16xf32>
    %125 = arith.addf %91, %124 : vector<16x16xf32>
    %c234 = arith.constant 234 : index
    %126 = memref.load %arg2[%c234] : memref<288xf32, #tpu.memory_space<smem>>
    %127 = vector.broadcast %126 : f32 to vector<16x16xf32>
    %128 = arith.mulf %127, %101 : vector<16x16xf32>
    %129 = arith.addf %95, %128 : vector<16x16xf32>
    %c270 = arith.constant 270 : index
    %130 = memref.load %arg2[%c270] : memref<288xf32, #tpu.memory_space<smem>>
    %131 = vector.broadcast %130 : f32 to vector<16x16xf32>
    %132 = arith.mulf %131, %101 : vector<16x16xf32>
    %133 = arith.addf %99, %132 : vector<16x16xf32>
    %c0_20 = arith.constant 0 : index
    %c3_21 = arith.constant 3 : index
    %c0_22 = arith.constant 0 : index
    %c0_23 = arith.constant 0 : index
    %134 = vector.load %arg1[%c0_20, %c3_21, %c0_22, %c0_23] : memref<1x4x18x18xf32, #tpu.memory_space<vmem>>, vector<1x1x16x16xf32>
    %135 = vector.shape_cast %134 : vector<1x1x16x16xf32> to vector<16x16xf32>
    %c27 = arith.constant 27 : index
    %136 = memref.load %arg2[%c27] : memref<288xf32, #tpu.memory_space<smem>>
    %137 = vector.broadcast %136 : f32 to vector<16x16xf32>
    %138 = arith.mulf %137, %135 : vector<16x16xf32>
    %139 = arith.addf %105, %138 : vector<16x16xf32>
    %c63 = arith.constant 63 : index
    %140 = memref.load %arg2[%c63] : memref<288xf32, #tpu.memory_space<smem>>
    %141 = vector.broadcast %140 : f32 to vector<16x16xf32>
    %142 = arith.mulf %141, %135 : vector<16x16xf32>
    %143 = arith.addf %109, %142 : vector<16x16xf32>
    %c99 = arith.constant 99 : index
    %144 = memref.load %arg2[%c99] : memref<288xf32, #tpu.memory_space<smem>>
    %145 = vector.broadcast %144 : f32 to vector<16x16xf32>
    %146 = arith.mulf %145, %135 : vector<16x16xf32>
    %147 = arith.addf %113, %146 : vector<16x16xf32>
    %c135 = arith.constant 135 : index
    %148 = memref.load %arg2[%c135] : memref<288xf32, #tpu.memory_space<smem>>
    %149 = vector.broadcast %148 : f32 to vector<16x16xf32>
    %150 = arith.mulf %149, %135 : vector<16x16xf32>
    %151 = arith.addf %117, %150 : vector<16x16xf32>
    %c171 = arith.constant 171 : index
    %152 = memref.load %arg2[%c171] : memref<288xf32, #tpu.memory_space<smem>>
    %153 = vector.broadcast %152 : f32 to vector<16x16xf32>
    %154 = arith.mulf %153, %135 : vector<16x16xf32>
    %155 = arith.addf %121, %154 : vector<16x16xf32>
    %c207 = arith.constant 207 : index
    %156 = memref.load %arg2[%c207] : memref<288xf32, #tpu.memory_space<smem>>
    %157 = vector.broadcast %156 : f32 to vector<16x16xf32>
    %158 = arith.mulf %157, %135 : vector<16x16xf32>
    %159 = arith.addf %125, %158 : vector<16x16xf32>
    %c243 = arith.constant 243 : index
    %160 = memref.load %arg2[%c243] : memref<288xf32, #tpu.memory_space<smem>>
    %161 = vector.broadcast %160 : f32 to vector<16x16xf32>
    %162 = arith.mulf %161, %135 : vector<16x16xf32>
    %163 = arith.addf %129, %162 : vector<16x16xf32>
    %c279 = arith.constant 279 : index
    %164 = memref.load %arg2[%c279] : memref<288xf32, #tpu.memory_space<smem>>
    %165 = vector.broadcast %164 : f32 to vector<16x16xf32>
    %166 = arith.mulf %165, %135 : vector<16x16xf32>
    %167 = arith.addf %133, %166 : vector<16x16xf32>
    %c0_24 = arith.constant 0 : index
    %c0_25 = arith.constant 0 : index
    %c0_26 = arith.constant 0 : index
    %c1_27 = arith.constant 1 : index
    %168 = vector.load %arg1[%c0_24, %c0_25, %c0_26, %c1_27] : memref<1x4x18x18xf32, #tpu.memory_space<vmem>>, vector<1x1x16x16xf32>
    %169 = vector.shape_cast %168 : vector<1x1x16x16xf32> to vector<16x16xf32>
    %c1_28 = arith.constant 1 : index
    %170 = memref.load %arg2[%c1_28] : memref<288xf32, #tpu.memory_space<smem>>
    %171 = vector.broadcast %170 : f32 to vector<16x16xf32>
    %172 = arith.mulf %171, %169 : vector<16x16xf32>
    %173 = arith.addf %139, %172 : vector<16x16xf32>
    %c37 = arith.constant 37 : index
    %174 = memref.load %arg2[%c37] : memref<288xf32, #tpu.memory_space<smem>>
    %175 = vector.broadcast %174 : f32 to vector<16x16xf32>
    %176 = arith.mulf %175, %169 : vector<16x16xf32>
    %177 = arith.addf %143, %176 : vector<16x16xf32>
    %c73 = arith.constant 73 : index
    %178 = memref.load %arg2[%c73] : memref<288xf32, #tpu.memory_space<smem>>
    %179 = vector.broadcast %178 : f32 to vector<16x16xf32>
    %180 = arith.mulf %179, %169 : vector<16x16xf32>
    %181 = arith.addf %147, %180 : vector<16x16xf32>
    %c109 = arith.constant 109 : index
    %182 = memref.load %arg2[%c109] : memref<288xf32, #tpu.memory_space<smem>>
    %183 = vector.broadcast %182 : f32 to vector<16x16xf32>
    %184 = arith.mulf %183, %169 : vector<16x16xf32>
    %185 = arith.addf %151, %184 : vector<16x16xf32>
    %c145 = arith.constant 145 : index
    %186 = memref.load %arg2[%c145] : memref<288xf32, #tpu.memory_space<smem>>
    %187 = vector.broadcast %186 : f32 to vector<16x16xf32>
    %188 = arith.mulf %187, %169 : vector<16x16xf32>
    %189 = arith.addf %155, %188 : vector<16x16xf32>
    %c181 = arith.constant 181 : index
    %190 = memref.load %arg2[%c181] : memref<288xf32, #tpu.memory_space<smem>>
    %191 = vector.broadcast %190 : f32 to vector<16x16xf32>
    %192 = arith.mulf %191, %169 : vector<16x16xf32>
    %193 = arith.addf %159, %192 : vector<16x16xf32>
    %c217 = arith.constant 217 : index
    %194 = memref.load %arg2[%c217] : memref<288xf32, #tpu.memory_space<smem>>
    %195 = vector.broadcast %194 : f32 to vector<16x16xf32>
    %196 = arith.mulf %195, %169 : vector<16x16xf32>
    %197 = arith.addf %163, %196 : vector<16x16xf32>
    %c253 = arith.constant 253 : index
    %198 = memref.load %arg2[%c253] : memref<288xf32, #tpu.memory_space<smem>>
    %199 = vector.broadcast %198 : f32 to vector<16x16xf32>
    %200 = arith.mulf %199, %169 : vector<16x16xf32>
    %201 = arith.addf %167, %200 : vector<16x16xf32>
    %c0_29 = arith.constant 0 : index
    %c1_30 = arith.constant 1 : index
    %c0_31 = arith.constant 0 : index
    %c1_32 = arith.constant 1 : index
    %202 = vector.load %arg1[%c0_29, %c1_30, %c0_31, %c1_32] : memref<1x4x18x18xf32, #tpu.memory_space<vmem>>, vector<1x1x16x16xf32>
    %203 = vector.shape_cast %202 : vector<1x1x16x16xf32> to vector<16x16xf32>
    %c10 = arith.constant 10 : index
    %204 = memref.load %arg2[%c10] : memref<288xf32, #tpu.memory_space<smem>>
    %205 = vector.broadcast %204 : f32 to vector<16x16xf32>
    %206 = arith.mulf %205, %203 : vector<16x16xf32>
    %207 = arith.addf %173, %206 : vector<16x16xf32>
    %c46 = arith.constant 46 : index
    %208 = memref.load %arg2[%c46] : memref<288xf32, #tpu.memory_space<smem>>
    %209 = vector.broadcast %208 : f32 to vector<16x16xf32>
    %210 = arith.mulf %209, %203 : vector<16x16xf32>
    %211 = arith.addf %177, %210 : vector<16x16xf32>
    %c82 = arith.constant 82 : index
    %212 = memref.load %arg2[%c82] : memref<288xf32, #tpu.memory_space<smem>>
    %213 = vector.broadcast %212 : f32 to vector<16x16xf32>
    %214 = arith.mulf %213, %203 : vector<16x16xf32>
    %215 = arith.addf %181, %214 : vector<16x16xf32>
    %c118 = arith.constant 118 : index
    %216 = memref.load %arg2[%c118] : memref<288xf32, #tpu.memory_space<smem>>
    %217 = vector.broadcast %216 : f32 to vector<16x16xf32>
    %218 = arith.mulf %217, %203 : vector<16x16xf32>
    %219 = arith.addf %185, %218 : vector<16x16xf32>
    %c154 = arith.constant 154 : index
    %220 = memref.load %arg2[%c154] : memref<288xf32, #tpu.memory_space<smem>>
    %221 = vector.broadcast %220 : f32 to vector<16x16xf32>
    %222 = arith.mulf %221, %203 : vector<16x16xf32>
    %223 = arith.addf %189, %222 : vector<16x16xf32>
    %c190 = arith.constant 190 : index
    %224 = memref.load %arg2[%c190] : memref<288xf32, #tpu.memory_space<smem>>
    %225 = vector.broadcast %224 : f32 to vector<16x16xf32>
    %226 = arith.mulf %225, %203 : vector<16x16xf32>
    %227 = arith.addf %193, %226 : vector<16x16xf32>
    %c226 = arith.constant 226 : index
    %228 = memref.load %arg2[%c226] : memref<288xf32, #tpu.memory_space<smem>>
    %229 = vector.broadcast %228 : f32 to vector<16x16xf32>
    %230 = arith.mulf %229, %203 : vector<16x16xf32>
    %231 = arith.addf %197, %230 : vector<16x16xf32>
    %c262 = arith.constant 262 : index
    %232 = memref.load %arg2[%c262] : memref<288xf32, #tpu.memory_space<smem>>
    %233 = vector.broadcast %232 : f32 to vector<16x16xf32>
    %234 = arith.mulf %233, %203 : vector<16x16xf32>
    %235 = arith.addf %201, %234 : vector<16x16xf32>
    %c0_33 = arith.constant 0 : index
    %c2_34 = arith.constant 2 : index
    %c0_35 = arith.constant 0 : index
    %c1_36 = arith.constant 1 : index
    %236 = vector.load %arg1[%c0_33, %c2_34, %c0_35, %c1_36] : memref<1x4x18x18xf32, #tpu.memory_space<vmem>>, vector<1x1x16x16xf32>
    %237 = vector.shape_cast %236 : vector<1x1x16x16xf32> to vector<16x16xf32>
    %c19 = arith.constant 19 : index
    %238 = memref.load %arg2[%c19] : memref<288xf32, #tpu.memory_space<smem>>
    %239 = vector.broadcast %238 : f32 to vector<16x16xf32>
    %240 = arith.mulf %239, %237 : vector<16x16xf32>
    %241 = arith.addf %207, %240 : vector<16x16xf32>
    %c55 = arith.constant 55 : index
    %242 = memref.load %arg2[%c55] : memref<288xf32, #tpu.memory_space<smem>>
    %243 = vector.broadcast %242 : f32 to vector<16x16xf32>
    %244 = arith.mulf %243, %237 : vector<16x16xf32>
    %245 = arith.addf %211, %244 : vector<16x16xf32>
    %c91 = arith.constant 91 : index
    %246 = memref.load %arg2[%c91] : memref<288xf32, #tpu.memory_space<smem>>
    %247 = vector.broadcast %246 : f32 to vector<16x16xf32>
    %248 = arith.mulf %247, %237 : vector<16x16xf32>
    %249 = arith.addf %215, %248 : vector<16x16xf32>
    %c127 = arith.constant 127 : index
    %250 = memref.load %arg2[%c127] : memref<288xf32, #tpu.memory_space<smem>>
    %251 = vector.broadcast %250 : f32 to vector<16x16xf32>
    %252 = arith.mulf %251, %237 : vector<16x16xf32>
    %253 = arith.addf %219, %252 : vector<16x16xf32>
    %c163 = arith.constant 163 : index
    %254 = memref.load %arg2[%c163] : memref<288xf32, #tpu.memory_space<smem>>
    %255 = vector.broadcast %254 : f32 to vector<16x16xf32>
    %256 = arith.mulf %255, %237 : vector<16x16xf32>
    %257 = arith.addf %223, %256 : vector<16x16xf32>
    %c199 = arith.constant 199 : index
    %258 = memref.load %arg2[%c199] : memref<288xf32, #tpu.memory_space<smem>>
    %259 = vector.broadcast %258 : f32 to vector<16x16xf32>
    %260 = arith.mulf %259, %237 : vector<16x16xf32>
    %261 = arith.addf %227, %260 : vector<16x16xf32>
    %c235 = arith.constant 235 : index
    %262 = memref.load %arg2[%c235] : memref<288xf32, #tpu.memory_space<smem>>
    %263 = vector.broadcast %262 : f32 to vector<16x16xf32>
    %264 = arith.mulf %263, %237 : vector<16x16xf32>
    %265 = arith.addf %231, %264 : vector<16x16xf32>
    %c271 = arith.constant 271 : index
    %266 = memref.load %arg2[%c271] : memref<288xf32, #tpu.memory_space<smem>>
    %267 = vector.broadcast %266 : f32 to vector<16x16xf32>
    %268 = arith.mulf %267, %237 : vector<16x16xf32>
    %269 = arith.addf %235, %268 : vector<16x16xf32>
    %c0_37 = arith.constant 0 : index
    %c3_38 = arith.constant 3 : index
    %c0_39 = arith.constant 0 : index
    %c1_40 = arith.constant 1 : index
    %270 = vector.load %arg1[%c0_37, %c3_38, %c0_39, %c1_40] : memref<1x4x18x18xf32, #tpu.memory_space<vmem>>, vector<1x1x16x16xf32>
    %271 = vector.shape_cast %270 : vector<1x1x16x16xf32> to vector<16x16xf32>
    %c28 = arith.constant 28 : index
    %272 = memref.load %arg2[%c28] : memref<288xf32, #tpu.memory_space<smem>>
    %273 = vector.broadcast %272 : f32 to vector<16x16xf32>
    %274 = arith.mulf %273, %271 : vector<16x16xf32>
    %275 = arith.addf %241, %274 : vector<16x16xf32>
    %c64 = arith.constant 64 : index
    %276 = memref.load %arg2[%c64] : memref<288xf32, #tpu.memory_space<smem>>
    %277 = vector.broadcast %276 : f32 to vector<16x16xf32>
    %278 = arith.mulf %277, %271 : vector<16x16xf32>
    %279 = arith.addf %245, %278 : vector<16x16xf32>
    %c100 = arith.constant 100 : index
    %280 = memref.load %arg2[%c100] : memref<288xf32, #tpu.memory_space<smem>>
    %281 = vector.broadcast %280 : f32 to vector<16x16xf32>
    %282 = arith.mulf %281, %271 : vector<16x16xf32>
    %283 = arith.addf %249, %282 : vector<16x16xf32>
    %c136 = arith.constant 136 : index
    %284 = memref.load %arg2[%c136] : memref<288xf32, #tpu.memory_space<smem>>
    %285 = vector.broadcast %284 : f32 to vector<16x16xf32>
    %286 = arith.mulf %285, %271 : vector<16x16xf32>
    %287 = arith.addf %253, %286 : vector<16x16xf32>
    %c172 = arith.constant 172 : index
    %288 = memref.load %arg2[%c172] : memref<288xf32, #tpu.memory_space<smem>>
    %289 = vector.broadcast %288 : f32 to vector<16x16xf32>
    %290 = arith.mulf %289, %271 : vector<16x16xf32>
    %291 = arith.addf %257, %290 : vector<16x16xf32>
    %c208 = arith.constant 208 : index
    %292 = memref.load %arg2[%c208] : memref<288xf32, #tpu.memory_space<smem>>
    %293 = vector.broadcast %292 : f32 to vector<16x16xf32>
    %294 = arith.mulf %293, %271 : vector<16x16xf32>
    %295 = arith.addf %261, %294 : vector<16x16xf32>
    %c244 = arith.constant 244 : index
    %296 = memref.load %arg2[%c244] : memref<288xf32, #tpu.memory_space<smem>>
    %297 = vector.broadcast %296 : f32 to vector<16x16xf32>
    %298 = arith.mulf %297, %271 : vector<16x16xf32>
    %299 = arith.addf %265, %298 : vector<16x16xf32>
    %c280 = arith.constant 280 : index
    %300 = memref.load %arg2[%c280] : memref<288xf32, #tpu.memory_space<smem>>
    %301 = vector.broadcast %300 : f32 to vector<16x16xf32>
    %302 = arith.mulf %301, %271 : vector<16x16xf32>
    %303 = arith.addf %269, %302 : vector<16x16xf32>
    %c0_41 = arith.constant 0 : index
    %c0_42 = arith.constant 0 : index
    %c0_43 = arith.constant 0 : index
    %c2_44 = arith.constant 2 : index
    %304 = vector.load %arg1[%c0_41, %c0_42, %c0_43, %c2_44] : memref<1x4x18x18xf32, #tpu.memory_space<vmem>>, vector<1x1x16x16xf32>
    %305 = vector.shape_cast %304 : vector<1x1x16x16xf32> to vector<16x16xf32>
    %c2_45 = arith.constant 2 : index
    %306 = memref.load %arg2[%c2_45] : memref<288xf32, #tpu.memory_space<smem>>
    %307 = vector.broadcast %306 : f32 to vector<16x16xf32>
    %308 = arith.mulf %307, %305 : vector<16x16xf32>
    %309 = arith.addf %275, %308 : vector<16x16xf32>
    %c38 = arith.constant 38 : index
    %310 = memref.load %arg2[%c38] : memref<288xf32, #tpu.memory_space<smem>>
    %311 = vector.broadcast %310 : f32 to vector<16x16xf32>
    %312 = arith.mulf %311, %305 : vector<16x16xf32>
    %313 = arith.addf %279, %312 : vector<16x16xf32>
    %c74 = arith.constant 74 : index
    %314 = memref.load %arg2[%c74] : memref<288xf32, #tpu.memory_space<smem>>
    %315 = vector.broadcast %314 : f32 to vector<16x16xf32>
    %316 = arith.mulf %315, %305 : vector<16x16xf32>
    %317 = arith.addf %283, %316 : vector<16x16xf32>
    %c110 = arith.constant 110 : index
    %318 = memref.load %arg2[%c110] : memref<288xf32, #tpu.memory_space<smem>>
    %319 = vector.broadcast %318 : f32 to vector<16x16xf32>
    %320 = arith.mulf %319, %305 : vector<16x16xf32>
    %321 = arith.addf %287, %320 : vector<16x16xf32>
    %c146 = arith.constant 146 : index
    %322 = memref.load %arg2[%c146] : memref<288xf32, #tpu.memory_space<smem>>
    %323 = vector.broadcast %322 : f32 to vector<16x16xf32>
    %324 = arith.mulf %323, %305 : vector<16x16xf32>
    %325 = arith.addf %291, %324 : vector<16x16xf32>
    %c182 = arith.constant 182 : index
    %326 = memref.load %arg2[%c182] : memref<288xf32, #tpu.memory_space<smem>>
    %327 = vector.broadcast %326 : f32 to vector<16x16xf32>
    %328 = arith.mulf %327, %305 : vector<16x16xf32>
    %329 = arith.addf %295, %328 : vector<16x16xf32>
    %c218 = arith.constant 218 : index
    %330 = memref.load %arg2[%c218] : memref<288xf32, #tpu.memory_space<smem>>
    %331 = vector.broadcast %330 : f32 to vector<16x16xf32>
    %332 = arith.mulf %331, %305 : vector<16x16xf32>
    %333 = arith.addf %299, %332 : vector<16x16xf32>
    %c254 = arith.constant 254 : index
    %334 = memref.load %arg2[%c254] : memref<288xf32, #tpu.memory_space<smem>>
    %335 = vector.broadcast %334 : f32 to vector<16x16xf32>
    %336 = arith.mulf %335, %305 : vector<16x16xf32>
    %337 = arith.addf %303, %336 : vector<16x16xf32>
    %c0_46 = arith.constant 0 : index
    %c1_47 = arith.constant 1 : index
    %c0_48 = arith.constant 0 : index
    %c2_49 = arith.constant 2 : index
    %338 = vector.load %arg1[%c0_46, %c1_47, %c0_48, %c2_49] : memref<1x4x18x18xf32, #tpu.memory_space<vmem>>, vector<1x1x16x16xf32>
    %339 = vector.shape_cast %338 : vector<1x1x16x16xf32> to vector<16x16xf32>
    %c11 = arith.constant 11 : index
    %340 = memref.load %arg2[%c11] : memref<288xf32, #tpu.memory_space<smem>>
    %341 = vector.broadcast %340 : f32 to vector<16x16xf32>
    %342 = arith.mulf %341, %339 : vector<16x16xf32>
    %343 = arith.addf %309, %342 : vector<16x16xf32>
    %c47 = arith.constant 47 : index
    %344 = memref.load %arg2[%c47] : memref<288xf32, #tpu.memory_space<smem>>
    %345 = vector.broadcast %344 : f32 to vector<16x16xf32>
    %346 = arith.mulf %345, %339 : vector<16x16xf32>
    %347 = arith.addf %313, %346 : vector<16x16xf32>
    %c83 = arith.constant 83 : index
    %348 = memref.load %arg2[%c83] : memref<288xf32, #tpu.memory_space<smem>>
    %349 = vector.broadcast %348 : f32 to vector<16x16xf32>
    %350 = arith.mulf %349, %339 : vector<16x16xf32>
    %351 = arith.addf %317, %350 : vector<16x16xf32>
    %c119 = arith.constant 119 : index
    %352 = memref.load %arg2[%c119] : memref<288xf32, #tpu.memory_space<smem>>
    %353 = vector.broadcast %352 : f32 to vector<16x16xf32>
    %354 = arith.mulf %353, %339 : vector<16x16xf32>
    %355 = arith.addf %321, %354 : vector<16x16xf32>
    %c155 = arith.constant 155 : index
    %356 = memref.load %arg2[%c155] : memref<288xf32, #tpu.memory_space<smem>>
    %357 = vector.broadcast %356 : f32 to vector<16x16xf32>
    %358 = arith.mulf %357, %339 : vector<16x16xf32>
    %359 = arith.addf %325, %358 : vector<16x16xf32>
    %c191 = arith.constant 191 : index
    %360 = memref.load %arg2[%c191] : memref<288xf32, #tpu.memory_space<smem>>
    %361 = vector.broadcast %360 : f32 to vector<16x16xf32>
    %362 = arith.mulf %361, %339 : vector<16x16xf32>
    %363 = arith.addf %329, %362 : vector<16x16xf32>
    %c227 = arith.constant 227 : index
    %364 = memref.load %arg2[%c227] : memref<288xf32, #tpu.memory_space<smem>>
    %365 = vector.broadcast %364 : f32 to vector<16x16xf32>
    %366 = arith.mulf %365, %339 : vector<16x16xf32>
    %367 = arith.addf %333, %366 : vector<16x16xf32>
    %c263 = arith.constant 263 : index
    %368 = memref.load %arg2[%c263] : memref<288xf32, #tpu.memory_space<smem>>
    %369 = vector.broadcast %368 : f32 to vector<16x16xf32>
    %370 = arith.mulf %369, %339 : vector<16x16xf32>
    %371 = arith.addf %337, %370 : vector<16x16xf32>
    %c0_50 = arith.constant 0 : index
    %c2_51 = arith.constant 2 : index
    %c0_52 = arith.constant 0 : index
    %c2_53 = arith.constant 2 : index
    %372 = vector.load %arg1[%c0_50, %c2_51, %c0_52, %c2_53] : memref<1x4x18x18xf32, #tpu.memory_space<vmem>>, vector<1x1x16x16xf32>
    %373 = vector.shape_cast %372 : vector<1x1x16x16xf32> to vector<16x16xf32>
    %c20 = arith.constant 20 : index
    %374 = memref.load %arg2[%c20] : memref<288xf32, #tpu.memory_space<smem>>
    %375 = vector.broadcast %374 : f32 to vector<16x16xf32>
    %376 = arith.mulf %375, %373 : vector<16x16xf32>
    %377 = arith.addf %343, %376 : vector<16x16xf32>
    %c56 = arith.constant 56 : index
    %378 = memref.load %arg2[%c56] : memref<288xf32, #tpu.memory_space<smem>>
    %379 = vector.broadcast %378 : f32 to vector<16x16xf32>
    %380 = arith.mulf %379, %373 : vector<16x16xf32>
    %381 = arith.addf %347, %380 : vector<16x16xf32>
    %c92 = arith.constant 92 : index
    %382 = memref.load %arg2[%c92] : memref<288xf32, #tpu.memory_space<smem>>
    %383 = vector.broadcast %382 : f32 to vector<16x16xf32>
    %384 = arith.mulf %383, %373 : vector<16x16xf32>
    %385 = arith.addf %351, %384 : vector<16x16xf32>
    %c128 = arith.constant 128 : index
    %386 = memref.load %arg2[%c128] : memref<288xf32, #tpu.memory_space<smem>>
    %387 = vector.broadcast %386 : f32 to vector<16x16xf32>
    %388 = arith.mulf %387, %373 : vector<16x16xf32>
    %389 = arith.addf %355, %388 : vector<16x16xf32>
    %c164 = arith.constant 164 : index
    %390 = memref.load %arg2[%c164] : memref<288xf32, #tpu.memory_space<smem>>
    %391 = vector.broadcast %390 : f32 to vector<16x16xf32>
    %392 = arith.mulf %391, %373 : vector<16x16xf32>
    %393 = arith.addf %359, %392 : vector<16x16xf32>
    %c200 = arith.constant 200 : index
    %394 = memref.load %arg2[%c200] : memref<288xf32, #tpu.memory_space<smem>>
    %395 = vector.broadcast %394 : f32 to vector<16x16xf32>
    %396 = arith.mulf %395, %373 : vector<16x16xf32>
    %397 = arith.addf %363, %396 : vector<16x16xf32>
    %c236 = arith.constant 236 : index
    %398 = memref.load %arg2[%c236] : memref<288xf32, #tpu.memory_space<smem>>
    %399 = vector.broadcast %398 : f32 to vector<16x16xf32>
    %400 = arith.mulf %399, %373 : vector<16x16xf32>
    %401 = arith.addf %367, %400 : vector<16x16xf32>
    %c272 = arith.constant 272 : index
    %402 = memref.load %arg2[%c272] : memref<288xf32, #tpu.memory_space<smem>>
    %403 = vector.broadcast %402 : f32 to vector<16x16xf32>
    %404 = arith.mulf %403, %373 : vector<16x16xf32>
    %405 = arith.addf %371, %404 : vector<16x16xf32>
    %c0_54 = arith.constant 0 : index
    %c3_55 = arith.constant 3 : index
    %c0_56 = arith.constant 0 : index
    %c2_57 = arith.constant 2 : index
    %406 = vector.load %arg1[%c0_54, %c3_55, %c0_56, %c2_57] : memref<1x4x18x18xf32, #tpu.memory_space<vmem>>, vector<1x1x16x16xf32>
    %407 = vector.shape_cast %406 : vector<1x1x16x16xf32> to vector<16x16xf32>
    %c29 = arith.constant 29 : index
    %408 = memref.load %arg2[%c29] : memref<288xf32, #tpu.memory_space<smem>>
    %409 = vector.broadcast %408 : f32 to vector<16x16xf32>
    %410 = arith.mulf %409, %407 : vector<16x16xf32>
    %411 = arith.addf %377, %410 : vector<16x16xf32>
    %c65 = arith.constant 65 : index
    %412 = memref.load %arg2[%c65] : memref<288xf32, #tpu.memory_space<smem>>
    %413 = vector.broadcast %412 : f32 to vector<16x16xf32>
    %414 = arith.mulf %413, %407 : vector<16x16xf32>
    %415 = arith.addf %381, %414 : vector<16x16xf32>
    %c101 = arith.constant 101 : index
    %416 = memref.load %arg2[%c101] : memref<288xf32, #tpu.memory_space<smem>>
    %417 = vector.broadcast %416 : f32 to vector<16x16xf32>
    %418 = arith.mulf %417, %407 : vector<16x16xf32>
    %419 = arith.addf %385, %418 : vector<16x16xf32>
    %c137 = arith.constant 137 : index
    %420 = memref.load %arg2[%c137] : memref<288xf32, #tpu.memory_space<smem>>
    %421 = vector.broadcast %420 : f32 to vector<16x16xf32>
    %422 = arith.mulf %421, %407 : vector<16x16xf32>
    %423 = arith.addf %389, %422 : vector<16x16xf32>
    %c173 = arith.constant 173 : index
    %424 = memref.load %arg2[%c173] : memref<288xf32, #tpu.memory_space<smem>>
    %425 = vector.broadcast %424 : f32 to vector<16x16xf32>
    %426 = arith.mulf %425, %407 : vector<16x16xf32>
    %427 = arith.addf %393, %426 : vector<16x16xf32>
    %c209 = arith.constant 209 : index
    %428 = memref.load %arg2[%c209] : memref<288xf32, #tpu.memory_space<smem>>
    %429 = vector.broadcast %428 : f32 to vector<16x16xf32>
    %430 = arith.mulf %429, %407 : vector<16x16xf32>
    %431 = arith.addf %397, %430 : vector<16x16xf32>
    %c245 = arith.constant 245 : index
    %432 = memref.load %arg2[%c245] : memref<288xf32, #tpu.memory_space<smem>>
    %433 = vector.broadcast %432 : f32 to vector<16x16xf32>
    %434 = arith.mulf %433, %407 : vector<16x16xf32>
    %435 = arith.addf %401, %434 : vector<16x16xf32>
    %c281 = arith.constant 281 : index
    %436 = memref.load %arg2[%c281] : memref<288xf32, #tpu.memory_space<smem>>
    %437 = vector.broadcast %436 : f32 to vector<16x16xf32>
    %438 = arith.mulf %437, %407 : vector<16x16xf32>
    %439 = arith.addf %405, %438 : vector<16x16xf32>
    %c0_58 = arith.constant 0 : index
    %c0_59 = arith.constant 0 : index
    %c1_60 = arith.constant 1 : index
    %c0_61 = arith.constant 0 : index
    %440 = vector.load %arg1[%c0_58, %c0_59, %c1_60, %c0_61] : memref<1x4x18x18xf32, #tpu.memory_space<vmem>>, vector<1x1x16x16xf32>
    %441 = vector.shape_cast %440 : vector<1x1x16x16xf32> to vector<16x16xf32>
    %c3_62 = arith.constant 3 : index
    %442 = memref.load %arg2[%c3_62] : memref<288xf32, #tpu.memory_space<smem>>
    %443 = vector.broadcast %442 : f32 to vector<16x16xf32>
    %444 = arith.mulf %443, %441 : vector<16x16xf32>
    %445 = arith.addf %411, %444 : vector<16x16xf32>
    %c39 = arith.constant 39 : index
    %446 = memref.load %arg2[%c39] : memref<288xf32, #tpu.memory_space<smem>>
    %447 = vector.broadcast %446 : f32 to vector<16x16xf32>
    %448 = arith.mulf %447, %441 : vector<16x16xf32>
    %449 = arith.addf %415, %448 : vector<16x16xf32>
    %c75 = arith.constant 75 : index
    %450 = memref.load %arg2[%c75] : memref<288xf32, #tpu.memory_space<smem>>
    %451 = vector.broadcast %450 : f32 to vector<16x16xf32>
    %452 = arith.mulf %451, %441 : vector<16x16xf32>
    %453 = arith.addf %419, %452 : vector<16x16xf32>
    %c111 = arith.constant 111 : index
    %454 = memref.load %arg2[%c111] : memref<288xf32, #tpu.memory_space<smem>>
    %455 = vector.broadcast %454 : f32 to vector<16x16xf32>
    %456 = arith.mulf %455, %441 : vector<16x16xf32>
    %457 = arith.addf %423, %456 : vector<16x16xf32>
    %c147 = arith.constant 147 : index
    %458 = memref.load %arg2[%c147] : memref<288xf32, #tpu.memory_space<smem>>
    %459 = vector.broadcast %458 : f32 to vector<16x16xf32>
    %460 = arith.mulf %459, %441 : vector<16x16xf32>
    %461 = arith.addf %427, %460 : vector<16x16xf32>
    %c183 = arith.constant 183 : index
    %462 = memref.load %arg2[%c183] : memref<288xf32, #tpu.memory_space<smem>>
    %463 = vector.broadcast %462 : f32 to vector<16x16xf32>
    %464 = arith.mulf %463, %441 : vector<16x16xf32>
    %465 = arith.addf %431, %464 : vector<16x16xf32>
    %c219 = arith.constant 219 : index
    %466 = memref.load %arg2[%c219] : memref<288xf32, #tpu.memory_space<smem>>
    %467 = vector.broadcast %466 : f32 to vector<16x16xf32>
    %468 = arith.mulf %467, %441 : vector<16x16xf32>
    %469 = arith.addf %435, %468 : vector<16x16xf32>
    %c255 = arith.constant 255 : index
    %470 = memref.load %arg2[%c255] : memref<288xf32, #tpu.memory_space<smem>>
    %471 = vector.broadcast %470 : f32 to vector<16x16xf32>
    %472 = arith.mulf %471, %441 : vector<16x16xf32>
    %473 = arith.addf %439, %472 : vector<16x16xf32>
    %c0_63 = arith.constant 0 : index
    %c1_64 = arith.constant 1 : index
    %c1_65 = arith.constant 1 : index
    %c0_66 = arith.constant 0 : index
    %474 = vector.load %arg1[%c0_63, %c1_64, %c1_65, %c0_66] : memref<1x4x18x18xf32, #tpu.memory_space<vmem>>, vector<1x1x16x16xf32>
    %475 = vector.shape_cast %474 : vector<1x1x16x16xf32> to vector<16x16xf32>
    %c12 = arith.constant 12 : index
    %476 = memref.load %arg2[%c12] : memref<288xf32, #tpu.memory_space<smem>>
    %477 = vector.broadcast %476 : f32 to vector<16x16xf32>
    %478 = arith.mulf %477, %475 : vector<16x16xf32>
    %479 = arith.addf %445, %478 : vector<16x16xf32>
    %c48 = arith.constant 48 : index
    %480 = memref.load %arg2[%c48] : memref<288xf32, #tpu.memory_space<smem>>
    %481 = vector.broadcast %480 : f32 to vector<16x16xf32>
    %482 = arith.mulf %481, %475 : vector<16x16xf32>
    %483 = arith.addf %449, %482 : vector<16x16xf32>
    %c84 = arith.constant 84 : index
    %484 = memref.load %arg2[%c84] : memref<288xf32, #tpu.memory_space<smem>>
    %485 = vector.broadcast %484 : f32 to vector<16x16xf32>
    %486 = arith.mulf %485, %475 : vector<16x16xf32>
    %487 = arith.addf %453, %486 : vector<16x16xf32>
    %c120 = arith.constant 120 : index
    %488 = memref.load %arg2[%c120] : memref<288xf32, #tpu.memory_space<smem>>
    %489 = vector.broadcast %488 : f32 to vector<16x16xf32>
    %490 = arith.mulf %489, %475 : vector<16x16xf32>
    %491 = arith.addf %457, %490 : vector<16x16xf32>
    %c156 = arith.constant 156 : index
    %492 = memref.load %arg2[%c156] : memref<288xf32, #tpu.memory_space<smem>>
    %493 = vector.broadcast %492 : f32 to vector<16x16xf32>
    %494 = arith.mulf %493, %475 : vector<16x16xf32>
    %495 = arith.addf %461, %494 : vector<16x16xf32>
    %c192 = arith.constant 192 : index
    %496 = memref.load %arg2[%c192] : memref<288xf32, #tpu.memory_space<smem>>
    %497 = vector.broadcast %496 : f32 to vector<16x16xf32>
    %498 = arith.mulf %497, %475 : vector<16x16xf32>
    %499 = arith.addf %465, %498 : vector<16x16xf32>
    %c228 = arith.constant 228 : index
    %500 = memref.load %arg2[%c228] : memref<288xf32, #tpu.memory_space<smem>>
    %501 = vector.broadcast %500 : f32 to vector<16x16xf32>
    %502 = arith.mulf %501, %475 : vector<16x16xf32>
    %503 = arith.addf %469, %502 : vector<16x16xf32>
    %c264 = arith.constant 264 : index
    %504 = memref.load %arg2[%c264] : memref<288xf32, #tpu.memory_space<smem>>
    %505 = vector.broadcast %504 : f32 to vector<16x16xf32>
    %506 = arith.mulf %505, %475 : vector<16x16xf32>
    %507 = arith.addf %473, %506 : vector<16x16xf32>
    %c0_67 = arith.constant 0 : index
    %c2_68 = arith.constant 2 : index
    %c1_69 = arith.constant 1 : index
    %c0_70 = arith.constant 0 : index
    %508 = vector.load %arg1[%c0_67, %c2_68, %c1_69, %c0_70] : memref<1x4x18x18xf32, #tpu.memory_space<vmem>>, vector<1x1x16x16xf32>
    %509 = vector.shape_cast %508 : vector<1x1x16x16xf32> to vector<16x16xf32>
    %c21 = arith.constant 21 : index
    %510 = memref.load %arg2[%c21] : memref<288xf32, #tpu.memory_space<smem>>
    %511 = vector.broadcast %510 : f32 to vector<16x16xf32>
    %512 = arith.mulf %511, %509 : vector<16x16xf32>
    %513 = arith.addf %479, %512 : vector<16x16xf32>
    %c57 = arith.constant 57 : index
    %514 = memref.load %arg2[%c57] : memref<288xf32, #tpu.memory_space<smem>>
    %515 = vector.broadcast %514 : f32 to vector<16x16xf32>
    %516 = arith.mulf %515, %509 : vector<16x16xf32>
    %517 = arith.addf %483, %516 : vector<16x16xf32>
    %c93 = arith.constant 93 : index
    %518 = memref.load %arg2[%c93] : memref<288xf32, #tpu.memory_space<smem>>
    %519 = vector.broadcast %518 : f32 to vector<16x16xf32>
    %520 = arith.mulf %519, %509 : vector<16x16xf32>
    %521 = arith.addf %487, %520 : vector<16x16xf32>
    %c129 = arith.constant 129 : index
    %522 = memref.load %arg2[%c129] : memref<288xf32, #tpu.memory_space<smem>>
    %523 = vector.broadcast %522 : f32 to vector<16x16xf32>
    %524 = arith.mulf %523, %509 : vector<16x16xf32>
    %525 = arith.addf %491, %524 : vector<16x16xf32>
    %c165 = arith.constant 165 : index
    %526 = memref.load %arg2[%c165] : memref<288xf32, #tpu.memory_space<smem>>
    %527 = vector.broadcast %526 : f32 to vector<16x16xf32>
    %528 = arith.mulf %527, %509 : vector<16x16xf32>
    %529 = arith.addf %495, %528 : vector<16x16xf32>
    %c201 = arith.constant 201 : index
    %530 = memref.load %arg2[%c201] : memref<288xf32, #tpu.memory_space<smem>>
    %531 = vector.broadcast %530 : f32 to vector<16x16xf32>
    %532 = arith.mulf %531, %509 : vector<16x16xf32>
    %533 = arith.addf %499, %532 : vector<16x16xf32>
    %c237 = arith.constant 237 : index
    %534 = memref.load %arg2[%c237] : memref<288xf32, #tpu.memory_space<smem>>
    %535 = vector.broadcast %534 : f32 to vector<16x16xf32>
    %536 = arith.mulf %535, %509 : vector<16x16xf32>
    %537 = arith.addf %503, %536 : vector<16x16xf32>
    %c273 = arith.constant 273 : index
    %538 = memref.load %arg2[%c273] : memref<288xf32, #tpu.memory_space<smem>>
    %539 = vector.broadcast %538 : f32 to vector<16x16xf32>
    %540 = arith.mulf %539, %509 : vector<16x16xf32>
    %541 = arith.addf %507, %540 : vector<16x16xf32>
    %c0_71 = arith.constant 0 : index
    %c3_72 = arith.constant 3 : index
    %c1_73 = arith.constant 1 : index
    %c0_74 = arith.constant 0 : index
    %542 = vector.load %arg1[%c0_71, %c3_72, %c1_73, %c0_74] : memref<1x4x18x18xf32, #tpu.memory_space<vmem>>, vector<1x1x16x16xf32>
    %543 = vector.shape_cast %542 : vector<1x1x16x16xf32> to vector<16x16xf32>
    %c30 = arith.constant 30 : index
    %544 = memref.load %arg2[%c30] : memref<288xf32, #tpu.memory_space<smem>>
    %545 = vector.broadcast %544 : f32 to vector<16x16xf32>
    %546 = arith.mulf %545, %543 : vector<16x16xf32>
    %547 = arith.addf %513, %546 : vector<16x16xf32>
    %c66 = arith.constant 66 : index
    %548 = memref.load %arg2[%c66] : memref<288xf32, #tpu.memory_space<smem>>
    %549 = vector.broadcast %548 : f32 to vector<16x16xf32>
    %550 = arith.mulf %549, %543 : vector<16x16xf32>
    %551 = arith.addf %517, %550 : vector<16x16xf32>
    %c102 = arith.constant 102 : index
    %552 = memref.load %arg2[%c102] : memref<288xf32, #tpu.memory_space<smem>>
    %553 = vector.broadcast %552 : f32 to vector<16x16xf32>
    %554 = arith.mulf %553, %543 : vector<16x16xf32>
    %555 = arith.addf %521, %554 : vector<16x16xf32>
    %c138 = arith.constant 138 : index
    %556 = memref.load %arg2[%c138] : memref<288xf32, #tpu.memory_space<smem>>
    %557 = vector.broadcast %556 : f32 to vector<16x16xf32>
    %558 = arith.mulf %557, %543 : vector<16x16xf32>
    %559 = arith.addf %525, %558 : vector<16x16xf32>
    %c174 = arith.constant 174 : index
    %560 = memref.load %arg2[%c174] : memref<288xf32, #tpu.memory_space<smem>>
    %561 = vector.broadcast %560 : f32 to vector<16x16xf32>
    %562 = arith.mulf %561, %543 : vector<16x16xf32>
    %563 = arith.addf %529, %562 : vector<16x16xf32>
    %c210 = arith.constant 210 : index
    %564 = memref.load %arg2[%c210] : memref<288xf32, #tpu.memory_space<smem>>
    %565 = vector.broadcast %564 : f32 to vector<16x16xf32>
    %566 = arith.mulf %565, %543 : vector<16x16xf32>
    %567 = arith.addf %533, %566 : vector<16x16xf32>
    %c246 = arith.constant 246 : index
    %568 = memref.load %arg2[%c246] : memref<288xf32, #tpu.memory_space<smem>>
    %569 = vector.broadcast %568 : f32 to vector<16x16xf32>
    %570 = arith.mulf %569, %543 : vector<16x16xf32>
    %571 = arith.addf %537, %570 : vector<16x16xf32>
    %c282 = arith.constant 282 : index
    %572 = memref.load %arg2[%c282] : memref<288xf32, #tpu.memory_space<smem>>
    %573 = vector.broadcast %572 : f32 to vector<16x16xf32>
    %574 = arith.mulf %573, %543 : vector<16x16xf32>
    %575 = arith.addf %541, %574 : vector<16x16xf32>
    %c0_75 = arith.constant 0 : index
    %c0_76 = arith.constant 0 : index
    %c1_77 = arith.constant 1 : index
    %c1_78 = arith.constant 1 : index
    %576 = vector.load %arg1[%c0_75, %c0_76, %c1_77, %c1_78] : memref<1x4x18x18xf32, #tpu.memory_space<vmem>>, vector<1x1x16x16xf32>
    %577 = vector.shape_cast %576 : vector<1x1x16x16xf32> to vector<16x16xf32>
    %c4_79 = arith.constant 4 : index
    %578 = memref.load %arg2[%c4_79] : memref<288xf32, #tpu.memory_space<smem>>
    %579 = vector.broadcast %578 : f32 to vector<16x16xf32>
    %580 = arith.mulf %579, %577 : vector<16x16xf32>
    %581 = arith.addf %547, %580 : vector<16x16xf32>
    %c40 = arith.constant 40 : index
    %582 = memref.load %arg2[%c40] : memref<288xf32, #tpu.memory_space<smem>>
    %583 = vector.broadcast %582 : f32 to vector<16x16xf32>
    %584 = arith.mulf %583, %577 : vector<16x16xf32>
    %585 = arith.addf %551, %584 : vector<16x16xf32>
    %c76 = arith.constant 76 : index
    %586 = memref.load %arg2[%c76] : memref<288xf32, #tpu.memory_space<smem>>
    %587 = vector.broadcast %586 : f32 to vector<16x16xf32>
    %588 = arith.mulf %587, %577 : vector<16x16xf32>
    %589 = arith.addf %555, %588 : vector<16x16xf32>
    %c112 = arith.constant 112 : index
    %590 = memref.load %arg2[%c112] : memref<288xf32, #tpu.memory_space<smem>>
    %591 = vector.broadcast %590 : f32 to vector<16x16xf32>
    %592 = arith.mulf %591, %577 : vector<16x16xf32>
    %593 = arith.addf %559, %592 : vector<16x16xf32>
    %c148 = arith.constant 148 : index
    %594 = memref.load %arg2[%c148] : memref<288xf32, #tpu.memory_space<smem>>
    %595 = vector.broadcast %594 : f32 to vector<16x16xf32>
    %596 = arith.mulf %595, %577 : vector<16x16xf32>
    %597 = arith.addf %563, %596 : vector<16x16xf32>
    %c184 = arith.constant 184 : index
    %598 = memref.load %arg2[%c184] : memref<288xf32, #tpu.memory_space<smem>>
    %599 = vector.broadcast %598 : f32 to vector<16x16xf32>
    %600 = arith.mulf %599, %577 : vector<16x16xf32>
    %601 = arith.addf %567, %600 : vector<16x16xf32>
    %c220 = arith.constant 220 : index
    %602 = memref.load %arg2[%c220] : memref<288xf32, #tpu.memory_space<smem>>
    %603 = vector.broadcast %602 : f32 to vector<16x16xf32>
    %604 = arith.mulf %603, %577 : vector<16x16xf32>
    %605 = arith.addf %571, %604 : vector<16x16xf32>
    %c256 = arith.constant 256 : index
    %606 = memref.load %arg2[%c256] : memref<288xf32, #tpu.memory_space<smem>>
    %607 = vector.broadcast %606 : f32 to vector<16x16xf32>
    %608 = arith.mulf %607, %577 : vector<16x16xf32>
    %609 = arith.addf %575, %608 : vector<16x16xf32>
    %c0_80 = arith.constant 0 : index
    %c1_81 = arith.constant 1 : index
    %c1_82 = arith.constant 1 : index
    %c1_83 = arith.constant 1 : index
    %610 = vector.load %arg1[%c0_80, %c1_81, %c1_82, %c1_83] : memref<1x4x18x18xf32, #tpu.memory_space<vmem>>, vector<1x1x16x16xf32>
    %611 = vector.shape_cast %610 : vector<1x1x16x16xf32> to vector<16x16xf32>
    %c13 = arith.constant 13 : index
    %612 = memref.load %arg2[%c13] : memref<288xf32, #tpu.memory_space<smem>>
    %613 = vector.broadcast %612 : f32 to vector<16x16xf32>
    %614 = arith.mulf %613, %611 : vector<16x16xf32>
    %615 = arith.addf %581, %614 : vector<16x16xf32>
    %c49 = arith.constant 49 : index
    %616 = memref.load %arg2[%c49] : memref<288xf32, #tpu.memory_space<smem>>
    %617 = vector.broadcast %616 : f32 to vector<16x16xf32>
    %618 = arith.mulf %617, %611 : vector<16x16xf32>
    %619 = arith.addf %585, %618 : vector<16x16xf32>
    %c85 = arith.constant 85 : index
    %620 = memref.load %arg2[%c85] : memref<288xf32, #tpu.memory_space<smem>>
    %621 = vector.broadcast %620 : f32 to vector<16x16xf32>
    %622 = arith.mulf %621, %611 : vector<16x16xf32>
    %623 = arith.addf %589, %622 : vector<16x16xf32>
    %c121 = arith.constant 121 : index
    %624 = memref.load %arg2[%c121] : memref<288xf32, #tpu.memory_space<smem>>
    %625 = vector.broadcast %624 : f32 to vector<16x16xf32>
    %626 = arith.mulf %625, %611 : vector<16x16xf32>
    %627 = arith.addf %593, %626 : vector<16x16xf32>
    %c157 = arith.constant 157 : index
    %628 = memref.load %arg2[%c157] : memref<288xf32, #tpu.memory_space<smem>>
    %629 = vector.broadcast %628 : f32 to vector<16x16xf32>
    %630 = arith.mulf %629, %611 : vector<16x16xf32>
    %631 = arith.addf %597, %630 : vector<16x16xf32>
    %c193 = arith.constant 193 : index
    %632 = memref.load %arg2[%c193] : memref<288xf32, #tpu.memory_space<smem>>
    %633 = vector.broadcast %632 : f32 to vector<16x16xf32>
    %634 = arith.mulf %633, %611 : vector<16x16xf32>
    %635 = arith.addf %601, %634 : vector<16x16xf32>
    %c229 = arith.constant 229 : index
    %636 = memref.load %arg2[%c229] : memref<288xf32, #tpu.memory_space<smem>>
    %637 = vector.broadcast %636 : f32 to vector<16x16xf32>
    %638 = arith.mulf %637, %611 : vector<16x16xf32>
    %639 = arith.addf %605, %638 : vector<16x16xf32>
    %c265 = arith.constant 265 : index
    %640 = memref.load %arg2[%c265] : memref<288xf32, #tpu.memory_space<smem>>
    %641 = vector.broadcast %640 : f32 to vector<16x16xf32>
    %642 = arith.mulf %641, %611 : vector<16x16xf32>
    %643 = arith.addf %609, %642 : vector<16x16xf32>
    %c0_84 = arith.constant 0 : index
    %c2_85 = arith.constant 2 : index
    %c1_86 = arith.constant 1 : index
    %c1_87 = arith.constant 1 : index
    %644 = vector.load %arg1[%c0_84, %c2_85, %c1_86, %c1_87] : memref<1x4x18x18xf32, #tpu.memory_space<vmem>>, vector<1x1x16x16xf32>
    %645 = vector.shape_cast %644 : vector<1x1x16x16xf32> to vector<16x16xf32>
    %c22 = arith.constant 22 : index
    %646 = memref.load %arg2[%c22] : memref<288xf32, #tpu.memory_space<smem>>
    %647 = vector.broadcast %646 : f32 to vector<16x16xf32>
    %648 = arith.mulf %647, %645 : vector<16x16xf32>
    %649 = arith.addf %615, %648 : vector<16x16xf32>
    %c58 = arith.constant 58 : index
    %650 = memref.load %arg2[%c58] : memref<288xf32, #tpu.memory_space<smem>>
    %651 = vector.broadcast %650 : f32 to vector<16x16xf32>
    %652 = arith.mulf %651, %645 : vector<16x16xf32>
    %653 = arith.addf %619, %652 : vector<16x16xf32>
    %c94 = arith.constant 94 : index
    %654 = memref.load %arg2[%c94] : memref<288xf32, #tpu.memory_space<smem>>
    %655 = vector.broadcast %654 : f32 to vector<16x16xf32>
    %656 = arith.mulf %655, %645 : vector<16x16xf32>
    %657 = arith.addf %623, %656 : vector<16x16xf32>
    %c130 = arith.constant 130 : index
    %658 = memref.load %arg2[%c130] : memref<288xf32, #tpu.memory_space<smem>>
    %659 = vector.broadcast %658 : f32 to vector<16x16xf32>
    %660 = arith.mulf %659, %645 : vector<16x16xf32>
    %661 = arith.addf %627, %660 : vector<16x16xf32>
    %c166 = arith.constant 166 : index
    %662 = memref.load %arg2[%c166] : memref<288xf32, #tpu.memory_space<smem>>
    %663 = vector.broadcast %662 : f32 to vector<16x16xf32>
    %664 = arith.mulf %663, %645 : vector<16x16xf32>
    %665 = arith.addf %631, %664 : vector<16x16xf32>
    %c202 = arith.constant 202 : index
    %666 = memref.load %arg2[%c202] : memref<288xf32, #tpu.memory_space<smem>>
    %667 = vector.broadcast %666 : f32 to vector<16x16xf32>
    %668 = arith.mulf %667, %645 : vector<16x16xf32>
    %669 = arith.addf %635, %668 : vector<16x16xf32>
    %c238 = arith.constant 238 : index
    %670 = memref.load %arg2[%c238] : memref<288xf32, #tpu.memory_space<smem>>
    %671 = vector.broadcast %670 : f32 to vector<16x16xf32>
    %672 = arith.mulf %671, %645 : vector<16x16xf32>
    %673 = arith.addf %639, %672 : vector<16x16xf32>
    %c274 = arith.constant 274 : index
    %674 = memref.load %arg2[%c274] : memref<288xf32, #tpu.memory_space<smem>>
    %675 = vector.broadcast %674 : f32 to vector<16x16xf32>
    %676 = arith.mulf %675, %645 : vector<16x16xf32>
    %677 = arith.addf %643, %676 : vector<16x16xf32>
    %c0_88 = arith.constant 0 : index
    %c3_89 = arith.constant 3 : index
    %c1_90 = arith.constant 1 : index
    %c1_91 = arith.constant 1 : index
    %678 = vector.load %arg1[%c0_88, %c3_89, %c1_90, %c1_91] : memref<1x4x18x18xf32, #tpu.memory_space<vmem>>, vector<1x1x16x16xf32>
    %679 = vector.shape_cast %678 : vector<1x1x16x16xf32> to vector<16x16xf32>
    %c31 = arith.constant 31 : index
    %680 = memref.load %arg2[%c31] : memref<288xf32, #tpu.memory_space<smem>>
    %681 = vector.broadcast %680 : f32 to vector<16x16xf32>
    %682 = arith.mulf %681, %679 : vector<16x16xf32>
    %683 = arith.addf %649, %682 : vector<16x16xf32>
    %c67 = arith.constant 67 : index
    %684 = memref.load %arg2[%c67] : memref<288xf32, #tpu.memory_space<smem>>
    %685 = vector.broadcast %684 : f32 to vector<16x16xf32>
    %686 = arith.mulf %685, %679 : vector<16x16xf32>
    %687 = arith.addf %653, %686 : vector<16x16xf32>
    %c103 = arith.constant 103 : index
    %688 = memref.load %arg2[%c103] : memref<288xf32, #tpu.memory_space<smem>>
    %689 = vector.broadcast %688 : f32 to vector<16x16xf32>
    %690 = arith.mulf %689, %679 : vector<16x16xf32>
    %691 = arith.addf %657, %690 : vector<16x16xf32>
    %c139 = arith.constant 139 : index
    %692 = memref.load %arg2[%c139] : memref<288xf32, #tpu.memory_space<smem>>
    %693 = vector.broadcast %692 : f32 to vector<16x16xf32>
    %694 = arith.mulf %693, %679 : vector<16x16xf32>
    %695 = arith.addf %661, %694 : vector<16x16xf32>
    %c175 = arith.constant 175 : index
    %696 = memref.load %arg2[%c175] : memref<288xf32, #tpu.memory_space<smem>>
    %697 = vector.broadcast %696 : f32 to vector<16x16xf32>
    %698 = arith.mulf %697, %679 : vector<16x16xf32>
    %699 = arith.addf %665, %698 : vector<16x16xf32>
    %c211 = arith.constant 211 : index
    %700 = memref.load %arg2[%c211] : memref<288xf32, #tpu.memory_space<smem>>
    %701 = vector.broadcast %700 : f32 to vector<16x16xf32>
    %702 = arith.mulf %701, %679 : vector<16x16xf32>
    %703 = arith.addf %669, %702 : vector<16x16xf32>
    %c247 = arith.constant 247 : index
    %704 = memref.load %arg2[%c247] : memref<288xf32, #tpu.memory_space<smem>>
    %705 = vector.broadcast %704 : f32 to vector<16x16xf32>
    %706 = arith.mulf %705, %679 : vector<16x16xf32>
    %707 = arith.addf %673, %706 : vector<16x16xf32>
    %c283 = arith.constant 283 : index
    %708 = memref.load %arg2[%c283] : memref<288xf32, #tpu.memory_space<smem>>
    %709 = vector.broadcast %708 : f32 to vector<16x16xf32>
    %710 = arith.mulf %709, %679 : vector<16x16xf32>
    %711 = arith.addf %677, %710 : vector<16x16xf32>
    %c0_92 = arith.constant 0 : index
    %c0_93 = arith.constant 0 : index
    %c1_94 = arith.constant 1 : index
    %c2_95 = arith.constant 2 : index
    %712 = vector.load %arg1[%c0_92, %c0_93, %c1_94, %c2_95] : memref<1x4x18x18xf32, #tpu.memory_space<vmem>>, vector<1x1x16x16xf32>
    %713 = vector.shape_cast %712 : vector<1x1x16x16xf32> to vector<16x16xf32>
    %c5_96 = arith.constant 5 : index
    %714 = memref.load %arg2[%c5_96] : memref<288xf32, #tpu.memory_space<smem>>
    %715 = vector.broadcast %714 : f32 to vector<16x16xf32>
    %716 = arith.mulf %715, %713 : vector<16x16xf32>
    %717 = arith.addf %683, %716 : vector<16x16xf32>
    %c41 = arith.constant 41 : index
    %718 = memref.load %arg2[%c41] : memref<288xf32, #tpu.memory_space<smem>>
    %719 = vector.broadcast %718 : f32 to vector<16x16xf32>
    %720 = arith.mulf %719, %713 : vector<16x16xf32>
    %721 = arith.addf %687, %720 : vector<16x16xf32>
    %c77 = arith.constant 77 : index
    %722 = memref.load %arg2[%c77] : memref<288xf32, #tpu.memory_space<smem>>
    %723 = vector.broadcast %722 : f32 to vector<16x16xf32>
    %724 = arith.mulf %723, %713 : vector<16x16xf32>
    %725 = arith.addf %691, %724 : vector<16x16xf32>
    %c113 = arith.constant 113 : index
    %726 = memref.load %arg2[%c113] : memref<288xf32, #tpu.memory_space<smem>>
    %727 = vector.broadcast %726 : f32 to vector<16x16xf32>
    %728 = arith.mulf %727, %713 : vector<16x16xf32>
    %729 = arith.addf %695, %728 : vector<16x16xf32>
    %c149 = arith.constant 149 : index
    %730 = memref.load %arg2[%c149] : memref<288xf32, #tpu.memory_space<smem>>
    %731 = vector.broadcast %730 : f32 to vector<16x16xf32>
    %732 = arith.mulf %731, %713 : vector<16x16xf32>
    %733 = arith.addf %699, %732 : vector<16x16xf32>
    %c185 = arith.constant 185 : index
    %734 = memref.load %arg2[%c185] : memref<288xf32, #tpu.memory_space<smem>>
    %735 = vector.broadcast %734 : f32 to vector<16x16xf32>
    %736 = arith.mulf %735, %713 : vector<16x16xf32>
    %737 = arith.addf %703, %736 : vector<16x16xf32>
    %c221 = arith.constant 221 : index
    %738 = memref.load %arg2[%c221] : memref<288xf32, #tpu.memory_space<smem>>
    %739 = vector.broadcast %738 : f32 to vector<16x16xf32>
    %740 = arith.mulf %739, %713 : vector<16x16xf32>
    %741 = arith.addf %707, %740 : vector<16x16xf32>
    %c257 = arith.constant 257 : index
    %742 = memref.load %arg2[%c257] : memref<288xf32, #tpu.memory_space<smem>>
    %743 = vector.broadcast %742 : f32 to vector<16x16xf32>
    %744 = arith.mulf %743, %713 : vector<16x16xf32>
    %745 = arith.addf %711, %744 : vector<16x16xf32>
    %c0_97 = arith.constant 0 : index
    %c1_98 = arith.constant 1 : index
    %c1_99 = arith.constant 1 : index
    %c2_100 = arith.constant 2 : index
    %746 = vector.load %arg1[%c0_97, %c1_98, %c1_99, %c2_100] : memref<1x4x18x18xf32, #tpu.memory_space<vmem>>, vector<1x1x16x16xf32>
    %747 = vector.shape_cast %746 : vector<1x1x16x16xf32> to vector<16x16xf32>
    %c14 = arith.constant 14 : index
    %748 = memref.load %arg2[%c14] : memref<288xf32, #tpu.memory_space<smem>>
    %749 = vector.broadcast %748 : f32 to vector<16x16xf32>
    %750 = arith.mulf %749, %747 : vector<16x16xf32>
    %751 = arith.addf %717, %750 : vector<16x16xf32>
    %c50 = arith.constant 50 : index
    %752 = memref.load %arg2[%c50] : memref<288xf32, #tpu.memory_space<smem>>
    %753 = vector.broadcast %752 : f32 to vector<16x16xf32>
    %754 = arith.mulf %753, %747 : vector<16x16xf32>
    %755 = arith.addf %721, %754 : vector<16x16xf32>
    %c86 = arith.constant 86 : index
    %756 = memref.load %arg2[%c86] : memref<288xf32, #tpu.memory_space<smem>>
    %757 = vector.broadcast %756 : f32 to vector<16x16xf32>
    %758 = arith.mulf %757, %747 : vector<16x16xf32>
    %759 = arith.addf %725, %758 : vector<16x16xf32>
    %c122 = arith.constant 122 : index
    %760 = memref.load %arg2[%c122] : memref<288xf32, #tpu.memory_space<smem>>
    %761 = vector.broadcast %760 : f32 to vector<16x16xf32>
    %762 = arith.mulf %761, %747 : vector<16x16xf32>
    %763 = arith.addf %729, %762 : vector<16x16xf32>
    %c158 = arith.constant 158 : index
    %764 = memref.load %arg2[%c158] : memref<288xf32, #tpu.memory_space<smem>>
    %765 = vector.broadcast %764 : f32 to vector<16x16xf32>
    %766 = arith.mulf %765, %747 : vector<16x16xf32>
    %767 = arith.addf %733, %766 : vector<16x16xf32>
    %c194 = arith.constant 194 : index
    %768 = memref.load %arg2[%c194] : memref<288xf32, #tpu.memory_space<smem>>
    %769 = vector.broadcast %768 : f32 to vector<16x16xf32>
    %770 = arith.mulf %769, %747 : vector<16x16xf32>
    %771 = arith.addf %737, %770 : vector<16x16xf32>
    %c230 = arith.constant 230 : index
    %772 = memref.load %arg2[%c230] : memref<288xf32, #tpu.memory_space<smem>>
    %773 = vector.broadcast %772 : f32 to vector<16x16xf32>
    %774 = arith.mulf %773, %747 : vector<16x16xf32>
    %775 = arith.addf %741, %774 : vector<16x16xf32>
    %c266 = arith.constant 266 : index
    %776 = memref.load %arg2[%c266] : memref<288xf32, #tpu.memory_space<smem>>
    %777 = vector.broadcast %776 : f32 to vector<16x16xf32>
    %778 = arith.mulf %777, %747 : vector<16x16xf32>
    %779 = arith.addf %745, %778 : vector<16x16xf32>
    %c0_101 = arith.constant 0 : index
    %c2_102 = arith.constant 2 : index
    %c1_103 = arith.constant 1 : index
    %c2_104 = arith.constant 2 : index
    %780 = vector.load %arg1[%c0_101, %c2_102, %c1_103, %c2_104] : memref<1x4x18x18xf32, #tpu.memory_space<vmem>>, vector<1x1x16x16xf32>
    %781 = vector.shape_cast %780 : vector<1x1x16x16xf32> to vector<16x16xf32>
    %c23 = arith.constant 23 : index
    %782 = memref.load %arg2[%c23] : memref<288xf32, #tpu.memory_space<smem>>
    %783 = vector.broadcast %782 : f32 to vector<16x16xf32>
    %784 = arith.mulf %783, %781 : vector<16x16xf32>
    %785 = arith.addf %751, %784 : vector<16x16xf32>
    %c59 = arith.constant 59 : index
    %786 = memref.load %arg2[%c59] : memref<288xf32, #tpu.memory_space<smem>>
    %787 = vector.broadcast %786 : f32 to vector<16x16xf32>
    %788 = arith.mulf %787, %781 : vector<16x16xf32>
    %789 = arith.addf %755, %788 : vector<16x16xf32>
    %c95 = arith.constant 95 : index
    %790 = memref.load %arg2[%c95] : memref<288xf32, #tpu.memory_space<smem>>
    %791 = vector.broadcast %790 : f32 to vector<16x16xf32>
    %792 = arith.mulf %791, %781 : vector<16x16xf32>
    %793 = arith.addf %759, %792 : vector<16x16xf32>
    %c131 = arith.constant 131 : index
    %794 = memref.load %arg2[%c131] : memref<288xf32, #tpu.memory_space<smem>>
    %795 = vector.broadcast %794 : f32 to vector<16x16xf32>
    %796 = arith.mulf %795, %781 : vector<16x16xf32>
    %797 = arith.addf %763, %796 : vector<16x16xf32>
    %c167 = arith.constant 167 : index
    %798 = memref.load %arg2[%c167] : memref<288xf32, #tpu.memory_space<smem>>
    %799 = vector.broadcast %798 : f32 to vector<16x16xf32>
    %800 = arith.mulf %799, %781 : vector<16x16xf32>
    %801 = arith.addf %767, %800 : vector<16x16xf32>
    %c203 = arith.constant 203 : index
    %802 = memref.load %arg2[%c203] : memref<288xf32, #tpu.memory_space<smem>>
    %803 = vector.broadcast %802 : f32 to vector<16x16xf32>
    %804 = arith.mulf %803, %781 : vector<16x16xf32>
    %805 = arith.addf %771, %804 : vector<16x16xf32>
    %c239 = arith.constant 239 : index
    %806 = memref.load %arg2[%c239] : memref<288xf32, #tpu.memory_space<smem>>
    %807 = vector.broadcast %806 : f32 to vector<16x16xf32>
    %808 = arith.mulf %807, %781 : vector<16x16xf32>
    %809 = arith.addf %775, %808 : vector<16x16xf32>
    %c275 = arith.constant 275 : index
    %810 = memref.load %arg2[%c275] : memref<288xf32, #tpu.memory_space<smem>>
    %811 = vector.broadcast %810 : f32 to vector<16x16xf32>
    %812 = arith.mulf %811, %781 : vector<16x16xf32>
    %813 = arith.addf %779, %812 : vector<16x16xf32>
    %c0_105 = arith.constant 0 : index
    %c3_106 = arith.constant 3 : index
    %c1_107 = arith.constant 1 : index
    %c2_108 = arith.constant 2 : index
    %814 = vector.load %arg1[%c0_105, %c3_106, %c1_107, %c2_108] : memref<1x4x18x18xf32, #tpu.memory_space<vmem>>, vector<1x1x16x16xf32>
    %815 = vector.shape_cast %814 : vector<1x1x16x16xf32> to vector<16x16xf32>
    %c32 = arith.constant 32 : index
    %816 = memref.load %arg2[%c32] : memref<288xf32, #tpu.memory_space<smem>>
    %817 = vector.broadcast %816 : f32 to vector<16x16xf32>
    %818 = arith.mulf %817, %815 : vector<16x16xf32>
    %819 = arith.addf %785, %818 : vector<16x16xf32>
    %c68 = arith.constant 68 : index
    %820 = memref.load %arg2[%c68] : memref<288xf32, #tpu.memory_space<smem>>
    %821 = vector.broadcast %820 : f32 to vector<16x16xf32>
    %822 = arith.mulf %821, %815 : vector<16x16xf32>
    %823 = arith.addf %789, %822 : vector<16x16xf32>
    %c104 = arith.constant 104 : index
    %824 = memref.load %arg2[%c104] : memref<288xf32, #tpu.memory_space<smem>>
    %825 = vector.broadcast %824 : f32 to vector<16x16xf32>
    %826 = arith.mulf %825, %815 : vector<16x16xf32>
    %827 = arith.addf %793, %826 : vector<16x16xf32>
    %c140 = arith.constant 140 : index
    %828 = memref.load %arg2[%c140] : memref<288xf32, #tpu.memory_space<smem>>
    %829 = vector.broadcast %828 : f32 to vector<16x16xf32>
    %830 = arith.mulf %829, %815 : vector<16x16xf32>
    %831 = arith.addf %797, %830 : vector<16x16xf32>
    %c176 = arith.constant 176 : index
    %832 = memref.load %arg2[%c176] : memref<288xf32, #tpu.memory_space<smem>>
    %833 = vector.broadcast %832 : f32 to vector<16x16xf32>
    %834 = arith.mulf %833, %815 : vector<16x16xf32>
    %835 = arith.addf %801, %834 : vector<16x16xf32>
    %c212 = arith.constant 212 : index
    %836 = memref.load %arg2[%c212] : memref<288xf32, #tpu.memory_space<smem>>
    %837 = vector.broadcast %836 : f32 to vector<16x16xf32>
    %838 = arith.mulf %837, %815 : vector<16x16xf32>
    %839 = arith.addf %805, %838 : vector<16x16xf32>
    %c248 = arith.constant 248 : index
    %840 = memref.load %arg2[%c248] : memref<288xf32, #tpu.memory_space<smem>>
    %841 = vector.broadcast %840 : f32 to vector<16x16xf32>
    %842 = arith.mulf %841, %815 : vector<16x16xf32>
    %843 = arith.addf %809, %842 : vector<16x16xf32>
    %c284 = arith.constant 284 : index
    %844 = memref.load %arg2[%c284] : memref<288xf32, #tpu.memory_space<smem>>
    %845 = vector.broadcast %844 : f32 to vector<16x16xf32>
    %846 = arith.mulf %845, %815 : vector<16x16xf32>
    %847 = arith.addf %813, %846 : vector<16x16xf32>
    %c0_109 = arith.constant 0 : index
    %c0_110 = arith.constant 0 : index
    %c2_111 = arith.constant 2 : index
    %c0_112 = arith.constant 0 : index
    %848 = vector.load %arg1[%c0_109, %c0_110, %c2_111, %c0_112] : memref<1x4x18x18xf32, #tpu.memory_space<vmem>>, vector<1x1x16x16xf32>
    %849 = vector.shape_cast %848 : vector<1x1x16x16xf32> to vector<16x16xf32>
    %c6_113 = arith.constant 6 : index
    %850 = memref.load %arg2[%c6_113] : memref<288xf32, #tpu.memory_space<smem>>
    %851 = vector.broadcast %850 : f32 to vector<16x16xf32>
    %852 = arith.mulf %851, %849 : vector<16x16xf32>
    %853 = arith.addf %819, %852 : vector<16x16xf32>
    %c42 = arith.constant 42 : index
    %854 = memref.load %arg2[%c42] : memref<288xf32, #tpu.memory_space<smem>>
    %855 = vector.broadcast %854 : f32 to vector<16x16xf32>
    %856 = arith.mulf %855, %849 : vector<16x16xf32>
    %857 = arith.addf %823, %856 : vector<16x16xf32>
    %c78 = arith.constant 78 : index
    %858 = memref.load %arg2[%c78] : memref<288xf32, #tpu.memory_space<smem>>
    %859 = vector.broadcast %858 : f32 to vector<16x16xf32>
    %860 = arith.mulf %859, %849 : vector<16x16xf32>
    %861 = arith.addf %827, %860 : vector<16x16xf32>
    %c114 = arith.constant 114 : index
    %862 = memref.load %arg2[%c114] : memref<288xf32, #tpu.memory_space<smem>>
    %863 = vector.broadcast %862 : f32 to vector<16x16xf32>
    %864 = arith.mulf %863, %849 : vector<16x16xf32>
    %865 = arith.addf %831, %864 : vector<16x16xf32>
    %c150 = arith.constant 150 : index
    %866 = memref.load %arg2[%c150] : memref<288xf32, #tpu.memory_space<smem>>
    %867 = vector.broadcast %866 : f32 to vector<16x16xf32>
    %868 = arith.mulf %867, %849 : vector<16x16xf32>
    %869 = arith.addf %835, %868 : vector<16x16xf32>
    %c186 = arith.constant 186 : index
    %870 = memref.load %arg2[%c186] : memref<288xf32, #tpu.memory_space<smem>>
    %871 = vector.broadcast %870 : f32 to vector<16x16xf32>
    %872 = arith.mulf %871, %849 : vector<16x16xf32>
    %873 = arith.addf %839, %872 : vector<16x16xf32>
    %c222 = arith.constant 222 : index
    %874 = memref.load %arg2[%c222] : memref<288xf32, #tpu.memory_space<smem>>
    %875 = vector.broadcast %874 : f32 to vector<16x16xf32>
    %876 = arith.mulf %875, %849 : vector<16x16xf32>
    %877 = arith.addf %843, %876 : vector<16x16xf32>
    %c258 = arith.constant 258 : index
    %878 = memref.load %arg2[%c258] : memref<288xf32, #tpu.memory_space<smem>>
    %879 = vector.broadcast %878 : f32 to vector<16x16xf32>
    %880 = arith.mulf %879, %849 : vector<16x16xf32>
    %881 = arith.addf %847, %880 : vector<16x16xf32>
    %c0_114 = arith.constant 0 : index
    %c1_115 = arith.constant 1 : index
    %c2_116 = arith.constant 2 : index
    %c0_117 = arith.constant 0 : index
    %882 = vector.load %arg1[%c0_114, %c1_115, %c2_116, %c0_117] : memref<1x4x18x18xf32, #tpu.memory_space<vmem>>, vector<1x1x16x16xf32>
    %883 = vector.shape_cast %882 : vector<1x1x16x16xf32> to vector<16x16xf32>
    %c15 = arith.constant 15 : index
    %884 = memref.load %arg2[%c15] : memref<288xf32, #tpu.memory_space<smem>>
    %885 = vector.broadcast %884 : f32 to vector<16x16xf32>
    %886 = arith.mulf %885, %883 : vector<16x16xf32>
    %887 = arith.addf %853, %886 : vector<16x16xf32>
    %c51 = arith.constant 51 : index
    %888 = memref.load %arg2[%c51] : memref<288xf32, #tpu.memory_space<smem>>
    %889 = vector.broadcast %888 : f32 to vector<16x16xf32>
    %890 = arith.mulf %889, %883 : vector<16x16xf32>
    %891 = arith.addf %857, %890 : vector<16x16xf32>
    %c87 = arith.constant 87 : index
    %892 = memref.load %arg2[%c87] : memref<288xf32, #tpu.memory_space<smem>>
    %893 = vector.broadcast %892 : f32 to vector<16x16xf32>
    %894 = arith.mulf %893, %883 : vector<16x16xf32>
    %895 = arith.addf %861, %894 : vector<16x16xf32>
    %c123 = arith.constant 123 : index
    %896 = memref.load %arg2[%c123] : memref<288xf32, #tpu.memory_space<smem>>
    %897 = vector.broadcast %896 : f32 to vector<16x16xf32>
    %898 = arith.mulf %897, %883 : vector<16x16xf32>
    %899 = arith.addf %865, %898 : vector<16x16xf32>
    %c159 = arith.constant 159 : index
    %900 = memref.load %arg2[%c159] : memref<288xf32, #tpu.memory_space<smem>>
    %901 = vector.broadcast %900 : f32 to vector<16x16xf32>
    %902 = arith.mulf %901, %883 : vector<16x16xf32>
    %903 = arith.addf %869, %902 : vector<16x16xf32>
    %c195 = arith.constant 195 : index
    %904 = memref.load %arg2[%c195] : memref<288xf32, #tpu.memory_space<smem>>
    %905 = vector.broadcast %904 : f32 to vector<16x16xf32>
    %906 = arith.mulf %905, %883 : vector<16x16xf32>
    %907 = arith.addf %873, %906 : vector<16x16xf32>
    %c231 = arith.constant 231 : index
    %908 = memref.load %arg2[%c231] : memref<288xf32, #tpu.memory_space<smem>>
    %909 = vector.broadcast %908 : f32 to vector<16x16xf32>
    %910 = arith.mulf %909, %883 : vector<16x16xf32>
    %911 = arith.addf %877, %910 : vector<16x16xf32>
    %c267 = arith.constant 267 : index
    %912 = memref.load %arg2[%c267] : memref<288xf32, #tpu.memory_space<smem>>
    %913 = vector.broadcast %912 : f32 to vector<16x16xf32>
    %914 = arith.mulf %913, %883 : vector<16x16xf32>
    %915 = arith.addf %881, %914 : vector<16x16xf32>
    %c0_118 = arith.constant 0 : index
    %c2_119 = arith.constant 2 : index
    %c2_120 = arith.constant 2 : index
    %c0_121 = arith.constant 0 : index
    %916 = vector.load %arg1[%c0_118, %c2_119, %c2_120, %c0_121] : memref<1x4x18x18xf32, #tpu.memory_space<vmem>>, vector<1x1x16x16xf32>
    %917 = vector.shape_cast %916 : vector<1x1x16x16xf32> to vector<16x16xf32>
    %c24 = arith.constant 24 : index
    %918 = memref.load %arg2[%c24] : memref<288xf32, #tpu.memory_space<smem>>
    %919 = vector.broadcast %918 : f32 to vector<16x16xf32>
    %920 = arith.mulf %919, %917 : vector<16x16xf32>
    %921 = arith.addf %887, %920 : vector<16x16xf32>
    %c60 = arith.constant 60 : index
    %922 = memref.load %arg2[%c60] : memref<288xf32, #tpu.memory_space<smem>>
    %923 = vector.broadcast %922 : f32 to vector<16x16xf32>
    %924 = arith.mulf %923, %917 : vector<16x16xf32>
    %925 = arith.addf %891, %924 : vector<16x16xf32>
    %c96 = arith.constant 96 : index
    %926 = memref.load %arg2[%c96] : memref<288xf32, #tpu.memory_space<smem>>
    %927 = vector.broadcast %926 : f32 to vector<16x16xf32>
    %928 = arith.mulf %927, %917 : vector<16x16xf32>
    %929 = arith.addf %895, %928 : vector<16x16xf32>
    %c132 = arith.constant 132 : index
    %930 = memref.load %arg2[%c132] : memref<288xf32, #tpu.memory_space<smem>>
    %931 = vector.broadcast %930 : f32 to vector<16x16xf32>
    %932 = arith.mulf %931, %917 : vector<16x16xf32>
    %933 = arith.addf %899, %932 : vector<16x16xf32>
    %c168 = arith.constant 168 : index
    %934 = memref.load %arg2[%c168] : memref<288xf32, #tpu.memory_space<smem>>
    %935 = vector.broadcast %934 : f32 to vector<16x16xf32>
    %936 = arith.mulf %935, %917 : vector<16x16xf32>
    %937 = arith.addf %903, %936 : vector<16x16xf32>
    %c204 = arith.constant 204 : index
    %938 = memref.load %arg2[%c204] : memref<288xf32, #tpu.memory_space<smem>>
    %939 = vector.broadcast %938 : f32 to vector<16x16xf32>
    %940 = arith.mulf %939, %917 : vector<16x16xf32>
    %941 = arith.addf %907, %940 : vector<16x16xf32>
    %c240 = arith.constant 240 : index
    %942 = memref.load %arg2[%c240] : memref<288xf32, #tpu.memory_space<smem>>
    %943 = vector.broadcast %942 : f32 to vector<16x16xf32>
    %944 = arith.mulf %943, %917 : vector<16x16xf32>
    %945 = arith.addf %911, %944 : vector<16x16xf32>
    %c276 = arith.constant 276 : index
    %946 = memref.load %arg2[%c276] : memref<288xf32, #tpu.memory_space<smem>>
    %947 = vector.broadcast %946 : f32 to vector<16x16xf32>
    %948 = arith.mulf %947, %917 : vector<16x16xf32>
    %949 = arith.addf %915, %948 : vector<16x16xf32>
    %c0_122 = arith.constant 0 : index
    %c3_123 = arith.constant 3 : index
    %c2_124 = arith.constant 2 : index
    %c0_125 = arith.constant 0 : index
    %950 = vector.load %arg1[%c0_122, %c3_123, %c2_124, %c0_125] : memref<1x4x18x18xf32, #tpu.memory_space<vmem>>, vector<1x1x16x16xf32>
    %951 = vector.shape_cast %950 : vector<1x1x16x16xf32> to vector<16x16xf32>
    %c33 = arith.constant 33 : index
    %952 = memref.load %arg2[%c33] : memref<288xf32, #tpu.memory_space<smem>>
    %953 = vector.broadcast %952 : f32 to vector<16x16xf32>
    %954 = arith.mulf %953, %951 : vector<16x16xf32>
    %955 = arith.addf %921, %954 : vector<16x16xf32>
    %c69 = arith.constant 69 : index
    %956 = memref.load %arg2[%c69] : memref<288xf32, #tpu.memory_space<smem>>
    %957 = vector.broadcast %956 : f32 to vector<16x16xf32>
    %958 = arith.mulf %957, %951 : vector<16x16xf32>
    %959 = arith.addf %925, %958 : vector<16x16xf32>
    %c105 = arith.constant 105 : index
    %960 = memref.load %arg2[%c105] : memref<288xf32, #tpu.memory_space<smem>>
    %961 = vector.broadcast %960 : f32 to vector<16x16xf32>
    %962 = arith.mulf %961, %951 : vector<16x16xf32>
    %963 = arith.addf %929, %962 : vector<16x16xf32>
    %c141 = arith.constant 141 : index
    %964 = memref.load %arg2[%c141] : memref<288xf32, #tpu.memory_space<smem>>
    %965 = vector.broadcast %964 : f32 to vector<16x16xf32>
    %966 = arith.mulf %965, %951 : vector<16x16xf32>
    %967 = arith.addf %933, %966 : vector<16x16xf32>
    %c177 = arith.constant 177 : index
    %968 = memref.load %arg2[%c177] : memref<288xf32, #tpu.memory_space<smem>>
    %969 = vector.broadcast %968 : f32 to vector<16x16xf32>
    %970 = arith.mulf %969, %951 : vector<16x16xf32>
    %971 = arith.addf %937, %970 : vector<16x16xf32>
    %c213 = arith.constant 213 : index
    %972 = memref.load %arg2[%c213] : memref<288xf32, #tpu.memory_space<smem>>
    %973 = vector.broadcast %972 : f32 to vector<16x16xf32>
    %974 = arith.mulf %973, %951 : vector<16x16xf32>
    %975 = arith.addf %941, %974 : vector<16x16xf32>
    %c249 = arith.constant 249 : index
    %976 = memref.load %arg2[%c249] : memref<288xf32, #tpu.memory_space<smem>>
    %977 = vector.broadcast %976 : f32 to vector<16x16xf32>
    %978 = arith.mulf %977, %951 : vector<16x16xf32>
    %979 = arith.addf %945, %978 : vector<16x16xf32>
    %c285 = arith.constant 285 : index
    %980 = memref.load %arg2[%c285] : memref<288xf32, #tpu.memory_space<smem>>
    %981 = vector.broadcast %980 : f32 to vector<16x16xf32>
    %982 = arith.mulf %981, %951 : vector<16x16xf32>
    %983 = arith.addf %949, %982 : vector<16x16xf32>
    %c0_126 = arith.constant 0 : index
    %c0_127 = arith.constant 0 : index
    %c2_128 = arith.constant 2 : index
    %c1_129 = arith.constant 1 : index
    %984 = vector.load %arg1[%c0_126, %c0_127, %c2_128, %c1_129] : memref<1x4x18x18xf32, #tpu.memory_space<vmem>>, vector<1x1x16x16xf32>
    %985 = vector.shape_cast %984 : vector<1x1x16x16xf32> to vector<16x16xf32>
    %c7_130 = arith.constant 7 : index
    %986 = memref.load %arg2[%c7_130] : memref<288xf32, #tpu.memory_space<smem>>
    %987 = vector.broadcast %986 : f32 to vector<16x16xf32>
    %988 = arith.mulf %987, %985 : vector<16x16xf32>
    %989 = arith.addf %955, %988 : vector<16x16xf32>
    %c43 = arith.constant 43 : index
    %990 = memref.load %arg2[%c43] : memref<288xf32, #tpu.memory_space<smem>>
    %991 = vector.broadcast %990 : f32 to vector<16x16xf32>
    %992 = arith.mulf %991, %985 : vector<16x16xf32>
    %993 = arith.addf %959, %992 : vector<16x16xf32>
    %c79 = arith.constant 79 : index
    %994 = memref.load %arg2[%c79] : memref<288xf32, #tpu.memory_space<smem>>
    %995 = vector.broadcast %994 : f32 to vector<16x16xf32>
    %996 = arith.mulf %995, %985 : vector<16x16xf32>
    %997 = arith.addf %963, %996 : vector<16x16xf32>
    %c115 = arith.constant 115 : index
    %998 = memref.load %arg2[%c115] : memref<288xf32, #tpu.memory_space<smem>>
    %999 = vector.broadcast %998 : f32 to vector<16x16xf32>
    %1000 = arith.mulf %999, %985 : vector<16x16xf32>
    %1001 = arith.addf %967, %1000 : vector<16x16xf32>
    %c151 = arith.constant 151 : index
    %1002 = memref.load %arg2[%c151] : memref<288xf32, #tpu.memory_space<smem>>
    %1003 = vector.broadcast %1002 : f32 to vector<16x16xf32>
    %1004 = arith.mulf %1003, %985 : vector<16x16xf32>
    %1005 = arith.addf %971, %1004 : vector<16x16xf32>
    %c187 = arith.constant 187 : index
    %1006 = memref.load %arg2[%c187] : memref<288xf32, #tpu.memory_space<smem>>
    %1007 = vector.broadcast %1006 : f32 to vector<16x16xf32>
    %1008 = arith.mulf %1007, %985 : vector<16x16xf32>
    %1009 = arith.addf %975, %1008 : vector<16x16xf32>
    %c223 = arith.constant 223 : index
    %1010 = memref.load %arg2[%c223] : memref<288xf32, #tpu.memory_space<smem>>
    %1011 = vector.broadcast %1010 : f32 to vector<16x16xf32>
    %1012 = arith.mulf %1011, %985 : vector<16x16xf32>
    %1013 = arith.addf %979, %1012 : vector<16x16xf32>
    %c259 = arith.constant 259 : index
    %1014 = memref.load %arg2[%c259] : memref<288xf32, #tpu.memory_space<smem>>
    %1015 = vector.broadcast %1014 : f32 to vector<16x16xf32>
    %1016 = arith.mulf %1015, %985 : vector<16x16xf32>
    %1017 = arith.addf %983, %1016 : vector<16x16xf32>
    %c0_131 = arith.constant 0 : index
    %c1_132 = arith.constant 1 : index
    %c2_133 = arith.constant 2 : index
    %c1_134 = arith.constant 1 : index
    %1018 = vector.load %arg1[%c0_131, %c1_132, %c2_133, %c1_134] : memref<1x4x18x18xf32, #tpu.memory_space<vmem>>, vector<1x1x16x16xf32>
    %1019 = vector.shape_cast %1018 : vector<1x1x16x16xf32> to vector<16x16xf32>
    %c16 = arith.constant 16 : index
    %1020 = memref.load %arg2[%c16] : memref<288xf32, #tpu.memory_space<smem>>
    %1021 = vector.broadcast %1020 : f32 to vector<16x16xf32>
    %1022 = arith.mulf %1021, %1019 : vector<16x16xf32>
    %1023 = arith.addf %989, %1022 : vector<16x16xf32>
    %c52 = arith.constant 52 : index
    %1024 = memref.load %arg2[%c52] : memref<288xf32, #tpu.memory_space<smem>>
    %1025 = vector.broadcast %1024 : f32 to vector<16x16xf32>
    %1026 = arith.mulf %1025, %1019 : vector<16x16xf32>
    %1027 = arith.addf %993, %1026 : vector<16x16xf32>
    %c88 = arith.constant 88 : index
    %1028 = memref.load %arg2[%c88] : memref<288xf32, #tpu.memory_space<smem>>
    %1029 = vector.broadcast %1028 : f32 to vector<16x16xf32>
    %1030 = arith.mulf %1029, %1019 : vector<16x16xf32>
    %1031 = arith.addf %997, %1030 : vector<16x16xf32>
    %c124 = arith.constant 124 : index
    %1032 = memref.load %arg2[%c124] : memref<288xf32, #tpu.memory_space<smem>>
    %1033 = vector.broadcast %1032 : f32 to vector<16x16xf32>
    %1034 = arith.mulf %1033, %1019 : vector<16x16xf32>
    %1035 = arith.addf %1001, %1034 : vector<16x16xf32>
    %c160 = arith.constant 160 : index
    %1036 = memref.load %arg2[%c160] : memref<288xf32, #tpu.memory_space<smem>>
    %1037 = vector.broadcast %1036 : f32 to vector<16x16xf32>
    %1038 = arith.mulf %1037, %1019 : vector<16x16xf32>
    %1039 = arith.addf %1005, %1038 : vector<16x16xf32>
    %c196 = arith.constant 196 : index
    %1040 = memref.load %arg2[%c196] : memref<288xf32, #tpu.memory_space<smem>>
    %1041 = vector.broadcast %1040 : f32 to vector<16x16xf32>
    %1042 = arith.mulf %1041, %1019 : vector<16x16xf32>
    %1043 = arith.addf %1009, %1042 : vector<16x16xf32>
    %c232 = arith.constant 232 : index
    %1044 = memref.load %arg2[%c232] : memref<288xf32, #tpu.memory_space<smem>>
    %1045 = vector.broadcast %1044 : f32 to vector<16x16xf32>
    %1046 = arith.mulf %1045, %1019 : vector<16x16xf32>
    %1047 = arith.addf %1013, %1046 : vector<16x16xf32>
    %c268 = arith.constant 268 : index
    %1048 = memref.load %arg2[%c268] : memref<288xf32, #tpu.memory_space<smem>>
    %1049 = vector.broadcast %1048 : f32 to vector<16x16xf32>
    %1050 = arith.mulf %1049, %1019 : vector<16x16xf32>
    %1051 = arith.addf %1017, %1050 : vector<16x16xf32>
    %c0_135 = arith.constant 0 : index
    %c2_136 = arith.constant 2 : index
    %c2_137 = arith.constant 2 : index
    %c1_138 = arith.constant 1 : index
    %1052 = vector.load %arg1[%c0_135, %c2_136, %c2_137, %c1_138] : memref<1x4x18x18xf32, #tpu.memory_space<vmem>>, vector<1x1x16x16xf32>
    %1053 = vector.shape_cast %1052 : vector<1x1x16x16xf32> to vector<16x16xf32>
    %c25 = arith.constant 25 : index
    %1054 = memref.load %arg2[%c25] : memref<288xf32, #tpu.memory_space<smem>>
    %1055 = vector.broadcast %1054 : f32 to vector<16x16xf32>
    %1056 = arith.mulf %1055, %1053 : vector<16x16xf32>
    %1057 = arith.addf %1023, %1056 : vector<16x16xf32>
    %c61 = arith.constant 61 : index
    %1058 = memref.load %arg2[%c61] : memref<288xf32, #tpu.memory_space<smem>>
    %1059 = vector.broadcast %1058 : f32 to vector<16x16xf32>
    %1060 = arith.mulf %1059, %1053 : vector<16x16xf32>
    %1061 = arith.addf %1027, %1060 : vector<16x16xf32>
    %c97 = arith.constant 97 : index
    %1062 = memref.load %arg2[%c97] : memref<288xf32, #tpu.memory_space<smem>>
    %1063 = vector.broadcast %1062 : f32 to vector<16x16xf32>
    %1064 = arith.mulf %1063, %1053 : vector<16x16xf32>
    %1065 = arith.addf %1031, %1064 : vector<16x16xf32>
    %c133 = arith.constant 133 : index
    %1066 = memref.load %arg2[%c133] : memref<288xf32, #tpu.memory_space<smem>>
    %1067 = vector.broadcast %1066 : f32 to vector<16x16xf32>
    %1068 = arith.mulf %1067, %1053 : vector<16x16xf32>
    %1069 = arith.addf %1035, %1068 : vector<16x16xf32>
    %c169 = arith.constant 169 : index
    %1070 = memref.load %arg2[%c169] : memref<288xf32, #tpu.memory_space<smem>>
    %1071 = vector.broadcast %1070 : f32 to vector<16x16xf32>
    %1072 = arith.mulf %1071, %1053 : vector<16x16xf32>
    %1073 = arith.addf %1039, %1072 : vector<16x16xf32>
    %c205 = arith.constant 205 : index
    %1074 = memref.load %arg2[%c205] : memref<288xf32, #tpu.memory_space<smem>>
    %1075 = vector.broadcast %1074 : f32 to vector<16x16xf32>
    %1076 = arith.mulf %1075, %1053 : vector<16x16xf32>
    %1077 = arith.addf %1043, %1076 : vector<16x16xf32>
    %c241 = arith.constant 241 : index
    %1078 = memref.load %arg2[%c241] : memref<288xf32, #tpu.memory_space<smem>>
    %1079 = vector.broadcast %1078 : f32 to vector<16x16xf32>
    %1080 = arith.mulf %1079, %1053 : vector<16x16xf32>
    %1081 = arith.addf %1047, %1080 : vector<16x16xf32>
    %c277 = arith.constant 277 : index
    %1082 = memref.load %arg2[%c277] : memref<288xf32, #tpu.memory_space<smem>>
    %1083 = vector.broadcast %1082 : f32 to vector<16x16xf32>
    %1084 = arith.mulf %1083, %1053 : vector<16x16xf32>
    %1085 = arith.addf %1051, %1084 : vector<16x16xf32>
    %c0_139 = arith.constant 0 : index
    %c3_140 = arith.constant 3 : index
    %c2_141 = arith.constant 2 : index
    %c1_142 = arith.constant 1 : index
    %1086 = vector.load %arg1[%c0_139, %c3_140, %c2_141, %c1_142] : memref<1x4x18x18xf32, #tpu.memory_space<vmem>>, vector<1x1x16x16xf32>
    %1087 = vector.shape_cast %1086 : vector<1x1x16x16xf32> to vector<16x16xf32>
    %c34 = arith.constant 34 : index
    %1088 = memref.load %arg2[%c34] : memref<288xf32, #tpu.memory_space<smem>>
    %1089 = vector.broadcast %1088 : f32 to vector<16x16xf32>
    %1090 = arith.mulf %1089, %1087 : vector<16x16xf32>
    %1091 = arith.addf %1057, %1090 : vector<16x16xf32>
    %c70 = arith.constant 70 : index
    %1092 = memref.load %arg2[%c70] : memref<288xf32, #tpu.memory_space<smem>>
    %1093 = vector.broadcast %1092 : f32 to vector<16x16xf32>
    %1094 = arith.mulf %1093, %1087 : vector<16x16xf32>
    %1095 = arith.addf %1061, %1094 : vector<16x16xf32>
    %c106 = arith.constant 106 : index
    %1096 = memref.load %arg2[%c106] : memref<288xf32, #tpu.memory_space<smem>>
    %1097 = vector.broadcast %1096 : f32 to vector<16x16xf32>
    %1098 = arith.mulf %1097, %1087 : vector<16x16xf32>
    %1099 = arith.addf %1065, %1098 : vector<16x16xf32>
    %c142 = arith.constant 142 : index
    %1100 = memref.load %arg2[%c142] : memref<288xf32, #tpu.memory_space<smem>>
    %1101 = vector.broadcast %1100 : f32 to vector<16x16xf32>
    %1102 = arith.mulf %1101, %1087 : vector<16x16xf32>
    %1103 = arith.addf %1069, %1102 : vector<16x16xf32>
    %c178 = arith.constant 178 : index
    %1104 = memref.load %arg2[%c178] : memref<288xf32, #tpu.memory_space<smem>>
    %1105 = vector.broadcast %1104 : f32 to vector<16x16xf32>
    %1106 = arith.mulf %1105, %1087 : vector<16x16xf32>
    %1107 = arith.addf %1073, %1106 : vector<16x16xf32>
    %c214 = arith.constant 214 : index
    %1108 = memref.load %arg2[%c214] : memref<288xf32, #tpu.memory_space<smem>>
    %1109 = vector.broadcast %1108 : f32 to vector<16x16xf32>
    %1110 = arith.mulf %1109, %1087 : vector<16x16xf32>
    %1111 = arith.addf %1077, %1110 : vector<16x16xf32>
    %c250 = arith.constant 250 : index
    %1112 = memref.load %arg2[%c250] : memref<288xf32, #tpu.memory_space<smem>>
    %1113 = vector.broadcast %1112 : f32 to vector<16x16xf32>
    %1114 = arith.mulf %1113, %1087 : vector<16x16xf32>
    %1115 = arith.addf %1081, %1114 : vector<16x16xf32>
    %c286 = arith.constant 286 : index
    %1116 = memref.load %arg2[%c286] : memref<288xf32, #tpu.memory_space<smem>>
    %1117 = vector.broadcast %1116 : f32 to vector<16x16xf32>
    %1118 = arith.mulf %1117, %1087 : vector<16x16xf32>
    %1119 = arith.addf %1085, %1118 : vector<16x16xf32>
    %c0_143 = arith.constant 0 : index
    %c0_144 = arith.constant 0 : index
    %c2_145 = arith.constant 2 : index
    %c2_146 = arith.constant 2 : index
    %1120 = vector.load %arg1[%c0_143, %c0_144, %c2_145, %c2_146] : memref<1x4x18x18xf32, #tpu.memory_space<vmem>>, vector<1x1x16x16xf32>
    %1121 = vector.shape_cast %1120 : vector<1x1x16x16xf32> to vector<16x16xf32>
    %c8 = arith.constant 8 : index
    %1122 = memref.load %arg2[%c8] : memref<288xf32, #tpu.memory_space<smem>>
    %1123 = vector.broadcast %1122 : f32 to vector<16x16xf32>
    %1124 = arith.mulf %1123, %1121 : vector<16x16xf32>
    %1125 = arith.addf %1091, %1124 : vector<16x16xf32>
    %c44 = arith.constant 44 : index
    %1126 = memref.load %arg2[%c44] : memref<288xf32, #tpu.memory_space<smem>>
    %1127 = vector.broadcast %1126 : f32 to vector<16x16xf32>
    %1128 = arith.mulf %1127, %1121 : vector<16x16xf32>
    %1129 = arith.addf %1095, %1128 : vector<16x16xf32>
    %c80 = arith.constant 80 : index
    %1130 = memref.load %arg2[%c80] : memref<288xf32, #tpu.memory_space<smem>>
    %1131 = vector.broadcast %1130 : f32 to vector<16x16xf32>
    %1132 = arith.mulf %1131, %1121 : vector<16x16xf32>
    %1133 = arith.addf %1099, %1132 : vector<16x16xf32>
    %c116 = arith.constant 116 : index
    %1134 = memref.load %arg2[%c116] : memref<288xf32, #tpu.memory_space<smem>>
    %1135 = vector.broadcast %1134 : f32 to vector<16x16xf32>
    %1136 = arith.mulf %1135, %1121 : vector<16x16xf32>
    %1137 = arith.addf %1103, %1136 : vector<16x16xf32>
    %c152 = arith.constant 152 : index
    %1138 = memref.load %arg2[%c152] : memref<288xf32, #tpu.memory_space<smem>>
    %1139 = vector.broadcast %1138 : f32 to vector<16x16xf32>
    %1140 = arith.mulf %1139, %1121 : vector<16x16xf32>
    %1141 = arith.addf %1107, %1140 : vector<16x16xf32>
    %c188 = arith.constant 188 : index
    %1142 = memref.load %arg2[%c188] : memref<288xf32, #tpu.memory_space<smem>>
    %1143 = vector.broadcast %1142 : f32 to vector<16x16xf32>
    %1144 = arith.mulf %1143, %1121 : vector<16x16xf32>
    %1145 = arith.addf %1111, %1144 : vector<16x16xf32>
    %c224 = arith.constant 224 : index
    %1146 = memref.load %arg2[%c224] : memref<288xf32, #tpu.memory_space<smem>>
    %1147 = vector.broadcast %1146 : f32 to vector<16x16xf32>
    %1148 = arith.mulf %1147, %1121 : vector<16x16xf32>
    %1149 = arith.addf %1115, %1148 : vector<16x16xf32>
    %c260 = arith.constant 260 : index
    %1150 = memref.load %arg2[%c260] : memref<288xf32, #tpu.memory_space<smem>>
    %1151 = vector.broadcast %1150 : f32 to vector<16x16xf32>
    %1152 = arith.mulf %1151, %1121 : vector<16x16xf32>
    %1153 = arith.addf %1119, %1152 : vector<16x16xf32>
    %c0_147 = arith.constant 0 : index
    %c1_148 = arith.constant 1 : index
    %c2_149 = arith.constant 2 : index
    %c2_150 = arith.constant 2 : index
    %1154 = vector.load %arg1[%c0_147, %c1_148, %c2_149, %c2_150] : memref<1x4x18x18xf32, #tpu.memory_space<vmem>>, vector<1x1x16x16xf32>
    %1155 = vector.shape_cast %1154 : vector<1x1x16x16xf32> to vector<16x16xf32>
    %c17 = arith.constant 17 : index
    %1156 = memref.load %arg2[%c17] : memref<288xf32, #tpu.memory_space<smem>>
    %1157 = vector.broadcast %1156 : f32 to vector<16x16xf32>
    %1158 = arith.mulf %1157, %1155 : vector<16x16xf32>
    %1159 = arith.addf %1125, %1158 : vector<16x16xf32>
    %c53 = arith.constant 53 : index
    %1160 = memref.load %arg2[%c53] : memref<288xf32, #tpu.memory_space<smem>>
    %1161 = vector.broadcast %1160 : f32 to vector<16x16xf32>
    %1162 = arith.mulf %1161, %1155 : vector<16x16xf32>
    %1163 = arith.addf %1129, %1162 : vector<16x16xf32>
    %c89 = arith.constant 89 : index
    %1164 = memref.load %arg2[%c89] : memref<288xf32, #tpu.memory_space<smem>>
    %1165 = vector.broadcast %1164 : f32 to vector<16x16xf32>
    %1166 = arith.mulf %1165, %1155 : vector<16x16xf32>
    %1167 = arith.addf %1133, %1166 : vector<16x16xf32>
    %c125 = arith.constant 125 : index
    %1168 = memref.load %arg2[%c125] : memref<288xf32, #tpu.memory_space<smem>>
    %1169 = vector.broadcast %1168 : f32 to vector<16x16xf32>
    %1170 = arith.mulf %1169, %1155 : vector<16x16xf32>
    %1171 = arith.addf %1137, %1170 : vector<16x16xf32>
    %c161 = arith.constant 161 : index
    %1172 = memref.load %arg2[%c161] : memref<288xf32, #tpu.memory_space<smem>>
    %1173 = vector.broadcast %1172 : f32 to vector<16x16xf32>
    %1174 = arith.mulf %1173, %1155 : vector<16x16xf32>
    %1175 = arith.addf %1141, %1174 : vector<16x16xf32>
    %c197 = arith.constant 197 : index
    %1176 = memref.load %arg2[%c197] : memref<288xf32, #tpu.memory_space<smem>>
    %1177 = vector.broadcast %1176 : f32 to vector<16x16xf32>
    %1178 = arith.mulf %1177, %1155 : vector<16x16xf32>
    %1179 = arith.addf %1145, %1178 : vector<16x16xf32>
    %c233 = arith.constant 233 : index
    %1180 = memref.load %arg2[%c233] : memref<288xf32, #tpu.memory_space<smem>>
    %1181 = vector.broadcast %1180 : f32 to vector<16x16xf32>
    %1182 = arith.mulf %1181, %1155 : vector<16x16xf32>
    %1183 = arith.addf %1149, %1182 : vector<16x16xf32>
    %c269 = arith.constant 269 : index
    %1184 = memref.load %arg2[%c269] : memref<288xf32, #tpu.memory_space<smem>>
    %1185 = vector.broadcast %1184 : f32 to vector<16x16xf32>
    %1186 = arith.mulf %1185, %1155 : vector<16x16xf32>
    %1187 = arith.addf %1153, %1186 : vector<16x16xf32>
    %c0_151 = arith.constant 0 : index
    %c2_152 = arith.constant 2 : index
    %c2_153 = arith.constant 2 : index
    %c2_154 = arith.constant 2 : index
    %1188 = vector.load %arg1[%c0_151, %c2_152, %c2_153, %c2_154] : memref<1x4x18x18xf32, #tpu.memory_space<vmem>>, vector<1x1x16x16xf32>
    %1189 = vector.shape_cast %1188 : vector<1x1x16x16xf32> to vector<16x16xf32>
    %c26 = arith.constant 26 : index
    %1190 = memref.load %arg2[%c26] : memref<288xf32, #tpu.memory_space<smem>>
    %1191 = vector.broadcast %1190 : f32 to vector<16x16xf32>
    %1192 = arith.mulf %1191, %1189 : vector<16x16xf32>
    %1193 = arith.addf %1159, %1192 : vector<16x16xf32>
    %c62 = arith.constant 62 : index
    %1194 = memref.load %arg2[%c62] : memref<288xf32, #tpu.memory_space<smem>>
    %1195 = vector.broadcast %1194 : f32 to vector<16x16xf32>
    %1196 = arith.mulf %1195, %1189 : vector<16x16xf32>
    %1197 = arith.addf %1163, %1196 : vector<16x16xf32>
    %c98 = arith.constant 98 : index
    %1198 = memref.load %arg2[%c98] : memref<288xf32, #tpu.memory_space<smem>>
    %1199 = vector.broadcast %1198 : f32 to vector<16x16xf32>
    %1200 = arith.mulf %1199, %1189 : vector<16x16xf32>
    %1201 = arith.addf %1167, %1200 : vector<16x16xf32>
    %c134 = arith.constant 134 : index
    %1202 = memref.load %arg2[%c134] : memref<288xf32, #tpu.memory_space<smem>>
    %1203 = vector.broadcast %1202 : f32 to vector<16x16xf32>
    %1204 = arith.mulf %1203, %1189 : vector<16x16xf32>
    %1205 = arith.addf %1171, %1204 : vector<16x16xf32>
    %c170 = arith.constant 170 : index
    %1206 = memref.load %arg2[%c170] : memref<288xf32, #tpu.memory_space<smem>>
    %1207 = vector.broadcast %1206 : f32 to vector<16x16xf32>
    %1208 = arith.mulf %1207, %1189 : vector<16x16xf32>
    %1209 = arith.addf %1175, %1208 : vector<16x16xf32>
    %c206 = arith.constant 206 : index
    %1210 = memref.load %arg2[%c206] : memref<288xf32, #tpu.memory_space<smem>>
    %1211 = vector.broadcast %1210 : f32 to vector<16x16xf32>
    %1212 = arith.mulf %1211, %1189 : vector<16x16xf32>
    %1213 = arith.addf %1179, %1212 : vector<16x16xf32>
    %c242 = arith.constant 242 : index
    %1214 = memref.load %arg2[%c242] : memref<288xf32, #tpu.memory_space<smem>>
    %1215 = vector.broadcast %1214 : f32 to vector<16x16xf32>
    %1216 = arith.mulf %1215, %1189 : vector<16x16xf32>
    %1217 = arith.addf %1183, %1216 : vector<16x16xf32>
    %c278 = arith.constant 278 : index
    %1218 = memref.load %arg2[%c278] : memref<288xf32, #tpu.memory_space<smem>>
    %1219 = vector.broadcast %1218 : f32 to vector<16x16xf32>
    %1220 = arith.mulf %1219, %1189 : vector<16x16xf32>
    %1221 = arith.addf %1187, %1220 : vector<16x16xf32>
    %c0_155 = arith.constant 0 : index
    %c3_156 = arith.constant 3 : index
    %c2_157 = arith.constant 2 : index
    %c2_158 = arith.constant 2 : index
    %1222 = vector.load %arg1[%c0_155, %c3_156, %c2_157, %c2_158] : memref<1x4x18x18xf32, #tpu.memory_space<vmem>>, vector<1x1x16x16xf32>
    %1223 = vector.shape_cast %1222 : vector<1x1x16x16xf32> to vector<16x16xf32>
    %c35 = arith.constant 35 : index
    %1224 = memref.load %arg2[%c35] : memref<288xf32, #tpu.memory_space<smem>>
    %1225 = vector.broadcast %1224 : f32 to vector<16x16xf32>
    %1226 = arith.mulf %1225, %1223 : vector<16x16xf32>
    %1227 = arith.addf %1193, %1226 : vector<16x16xf32>
    %c71 = arith.constant 71 : index
    %1228 = memref.load %arg2[%c71] : memref<288xf32, #tpu.memory_space<smem>>
    %1229 = vector.broadcast %1228 : f32 to vector<16x16xf32>
    %1230 = arith.mulf %1229, %1223 : vector<16x16xf32>
    %1231 = arith.addf %1197, %1230 : vector<16x16xf32>
    %c107 = arith.constant 107 : index
    %1232 = memref.load %arg2[%c107] : memref<288xf32, #tpu.memory_space<smem>>
    %1233 = vector.broadcast %1232 : f32 to vector<16x16xf32>
    %1234 = arith.mulf %1233, %1223 : vector<16x16xf32>
    %1235 = arith.addf %1201, %1234 : vector<16x16xf32>
    %c143 = arith.constant 143 : index
    %1236 = memref.load %arg2[%c143] : memref<288xf32, #tpu.memory_space<smem>>
    %1237 = vector.broadcast %1236 : f32 to vector<16x16xf32>
    %1238 = arith.mulf %1237, %1223 : vector<16x16xf32>
    %1239 = arith.addf %1205, %1238 : vector<16x16xf32>
    %c179 = arith.constant 179 : index
    %1240 = memref.load %arg2[%c179] : memref<288xf32, #tpu.memory_space<smem>>
    %1241 = vector.broadcast %1240 : f32 to vector<16x16xf32>
    %1242 = arith.mulf %1241, %1223 : vector<16x16xf32>
    %1243 = arith.addf %1209, %1242 : vector<16x16xf32>
    %c215 = arith.constant 215 : index
    %1244 = memref.load %arg2[%c215] : memref<288xf32, #tpu.memory_space<smem>>
    %1245 = vector.broadcast %1244 : f32 to vector<16x16xf32>
    %1246 = arith.mulf %1245, %1223 : vector<16x16xf32>
    %1247 = arith.addf %1213, %1246 : vector<16x16xf32>
    %c251 = arith.constant 251 : index
    %1248 = memref.load %arg2[%c251] : memref<288xf32, #tpu.memory_space<smem>>
    %1249 = vector.broadcast %1248 : f32 to vector<16x16xf32>
    %1250 = arith.mulf %1249, %1223 : vector<16x16xf32>
    %1251 = arith.addf %1217, %1250 : vector<16x16xf32>
    %c287 = arith.constant 287 : index
    %1252 = memref.load %arg2[%c287] : memref<288xf32, #tpu.memory_space<smem>>
    %1253 = vector.broadcast %1252 : f32 to vector<16x16xf32>
    %1254 = arith.mulf %1253, %1223 : vector<16x16xf32>
    %1255 = arith.addf %1221, %1254 : vector<16x16xf32>
    %1256 = vector.shape_cast %1227 : vector<16x16xf32> to vector<1x16x16xf32>
    %cst_159 = arith.constant dense<0.000000e+00> : vector<1xf32>
    %1257 = vector.multi_reduction <add>, %1256, %cst_159 [1, 2] : vector<1x16x16xf32> to vector<1xf32>
    %1258 = vector.shape_cast %1257 : vector<1xf32> to vector<1x1x1xf32>
    %1259 = vector.extract %1258[0, 0, 0] : f32 from vector<1x1x1xf32>
    %cst_160 = arith.constant 3.906250e-03 : f32
    %1260 = arith.mulf %1259, %cst_160 : f32
    %1261 = vector.broadcast %1260 : f32 to vector<16x16xf32>
    %1262 = arith.subf %1227, %1261 : vector<16x16xf32>
    %1263 = arith.mulf %1262, %1262 : vector<16x16xf32>
    %1264 = vector.shape_cast %1263 : vector<16x16xf32> to vector<1x16x16xf32>
    %cst_161 = arith.constant dense<0.000000e+00> : vector<1xf32>
    %1265 = vector.multi_reduction <add>, %1264, %cst_161 [1, 2] : vector<1x16x16xf32> to vector<1xf32>
    %1266 = vector.shape_cast %1265 : vector<1xf32> to vector<1x1x1xf32>
    %1267 = vector.extract %1266[0, 0, 0] : f32 from vector<1x1x1xf32>
    %cst_162 = arith.constant 3.906250e-03 : f32
    %1268 = arith.mulf %1267, %cst_162 : f32
    %cst_163 = arith.constant 9.99999974E-6 : f32
    %1269 = arith.addf %1268, %cst_163 : f32
    %1270 = math.rsqrt %1269 : f32
    %1271 = vector.broadcast %1270 : f32 to vector<16x16xf32>
    %1272 = arith.mulf %1262, %1271 : vector<16x16xf32>
    %c0_164 = arith.constant 0 : index
    %c0_165 = arith.constant 0 : index
    %c0_166 = arith.constant 0 : index
    %c0_167 = arith.constant 0 : index
    %1273 = vector.load %arg4[%c0_164, %c0_165, %c0_166, %c0_167] : memref<1x8x16x16xf32, #tpu.memory_space<vmem>>, vector<1x1x16x16xf32>
    %1274 = vector.shape_cast %1273 : vector<1x1x16x16xf32> to vector<16x16xf32>
    %1275 = vector.shape_cast %1272 : vector<16x16xf32> to vector<1x1x16x16xf32>
    tpu.vector_store %arg4[%c0_164, %c0_165, %c0_166, %c0_167], %1275 {strides = array<i32>} : memref<1x8x16x16xf32, #tpu.memory_space<vmem>>, vector<1x1x16x16xf32>,
    %1276 = vector.shape_cast %1231 : vector<16x16xf32> to vector<1x16x16xf32>
    %cst_168 = arith.constant dense<0.000000e+00> : vector<1xf32>
    %1277 = vector.multi_reduction <add>, %1276, %cst_168 [1, 2] : vector<1x16x16xf32> to vector<1xf32>
    %1278 = vector.shape_cast %1277 : vector<1xf32> to vector<1x1x1xf32>
    %1279 = vector.extract %1278[0, 0, 0] : f32 from vector<1x1x1xf32>
    %cst_169 = arith.constant 3.906250e-03 : f32
    %1280 = arith.mulf %1279, %cst_169 : f32
    %1281 = vector.broadcast %1280 : f32 to vector<16x16xf32>
    %1282 = arith.subf %1231, %1281 : vector<16x16xf32>
    %1283 = arith.mulf %1282, %1282 : vector<16x16xf32>
    %1284 = vector.shape_cast %1283 : vector<16x16xf32> to vector<1x16x16xf32>
    %cst_170 = arith.constant dense<0.000000e+00> : vector<1xf32>
    %1285 = vector.multi_reduction <add>, %1284, %cst_170 [1, 2] : vector<1x16x16xf32> to vector<1xf32>
    %1286 = vector.shape_cast %1285 : vector<1xf32> to vector<1x1x1xf32>
    %1287 = vector.extract %1286[0, 0, 0] : f32 from vector<1x1x1xf32>
    %cst_171 = arith.constant 3.906250e-03 : f32
    %1288 = arith.mulf %1287, %cst_171 : f32
    %cst_172 = arith.constant 9.99999974E-6 : f32
    %1289 = arith.addf %1288, %cst_172 : f32
    %1290 = math.rsqrt %1289 : f32
    %1291 = vector.broadcast %1290 : f32 to vector<16x16xf32>
    %1292 = arith.mulf %1282, %1291 : vector<16x16xf32>
    %c0_173 = arith.constant 0 : index
    %c1_174 = arith.constant 1 : index
    %c0_175 = arith.constant 0 : index
    %c0_176 = arith.constant 0 : index
    %1293 = vector.load %arg4[%c0_173, %c1_174, %c0_175, %c0_176] : memref<1x8x16x16xf32, #tpu.memory_space<vmem>>, vector<1x1x16x16xf32>
    %1294 = vector.shape_cast %1293 : vector<1x1x16x16xf32> to vector<16x16xf32>
    %1295 = vector.shape_cast %1292 : vector<16x16xf32> to vector<1x1x16x16xf32>
    tpu.vector_store %arg4[%c0_173, %c1_174, %c0_175, %c0_176], %1295 {strides = array<i32>} : memref<1x8x16x16xf32, #tpu.memory_space<vmem>>, vector<1x1x16x16xf32>,
    %1296 = vector.shape_cast %1235 : vector<16x16xf32> to vector<1x16x16xf32>
    %cst_177 = arith.constant dense<0.000000e+00> : vector<1xf32>
    %1297 = vector.multi_reduction <add>, %1296, %cst_177 [1, 2] : vector<1x16x16xf32> to vector<1xf32>
    %1298 = vector.shape_cast %1297 : vector<1xf32> to vector<1x1x1xf32>
    %1299 = vector.extract %1298[0, 0, 0] : f32 from vector<1x1x1xf32>
    %cst_178 = arith.constant 3.906250e-03 : f32
    %1300 = arith.mulf %1299, %cst_178 : f32
    %1301 = vector.broadcast %1300 : f32 to vector<16x16xf32>
    %1302 = arith.subf %1235, %1301 : vector<16x16xf32>
    %1303 = arith.mulf %1302, %1302 : vector<16x16xf32>
    %1304 = vector.shape_cast %1303 : vector<16x16xf32> to vector<1x16x16xf32>
    %cst_179 = arith.constant dense<0.000000e+00> : vector<1xf32>
    %1305 = vector.multi_reduction <add>, %1304, %cst_179 [1, 2] : vector<1x16x16xf32> to vector<1xf32>
    %1306 = vector.shape_cast %1305 : vector<1xf32> to vector<1x1x1xf32>
    %1307 = vector.extract %1306[0, 0, 0] : f32 from vector<1x1x1xf32>
    %cst_180 = arith.constant 3.906250e-03 : f32
    %1308 = arith.mulf %1307, %cst_180 : f32
    %cst_181 = arith.constant 9.99999974E-6 : f32
    %1309 = arith.addf %1308, %cst_181 : f32
    %1310 = math.rsqrt %1309 : f32
    %1311 = vector.broadcast %1310 : f32 to vector<16x16xf32>
    %1312 = arith.mulf %1302, %1311 : vector<16x16xf32>
    %c0_182 = arith.constant 0 : index
    %c2_183 = arith.constant 2 : index
    %c0_184 = arith.constant 0 : index
    %c0_185 = arith.constant 0 : index
    %1313 = vector.load %arg4[%c0_182, %c2_183, %c0_184, %c0_185] : memref<1x8x16x16xf32, #tpu.memory_space<vmem>>, vector<1x1x16x16xf32>
    %1314 = vector.shape_cast %1313 : vector<1x1x16x16xf32> to vector<16x16xf32>
    %1315 = vector.shape_cast %1312 : vector<16x16xf32> to vector<1x1x16x16xf32>
    tpu.vector_store %arg4[%c0_182, %c2_183, %c0_184, %c0_185], %1315 {strides = array<i32>} : memref<1x8x16x16xf32, #tpu.memory_space<vmem>>, vector<1x1x16x16xf32>,
    %1316 = vector.shape_cast %1239 : vector<16x16xf32> to vector<1x16x16xf32>
    %cst_186 = arith.constant dense<0.000000e+00> : vector<1xf32>
    %1317 = vector.multi_reduction <add>, %1316, %cst_186 [1, 2] : vector<1x16x16xf32> to vector<1xf32>
    %1318 = vector.shape_cast %1317 : vector<1xf32> to vector<1x1x1xf32>
    %1319 = vector.extract %1318[0, 0, 0] : f32 from vector<1x1x1xf32>
    %cst_187 = arith.constant 3.906250e-03 : f32
    %1320 = arith.mulf %1319, %cst_187 : f32
    %1321 = vector.broadcast %1320 : f32 to vector<16x16xf32>
    %1322 = arith.subf %1239, %1321 : vector<16x16xf32>
    %1323 = arith.mulf %1322, %1322 : vector<16x16xf32>
    %1324 = vector.shape_cast %1323 : vector<16x16xf32> to vector<1x16x16xf32>
    %cst_188 = arith.constant dense<0.000000e+00> : vector<1xf32>
    %1325 = vector.multi_reduction <add>, %1324, %cst_188 [1, 2] : vector<1x16x16xf32> to vector<1xf32>
    %1326 = vector.shape_cast %1325 : vector<1xf32> to vector<1x1x1xf32>
    %1327 = vector.extract %1326[0, 0, 0] : f32 from vector<1x1x1xf32>
    %cst_189 = arith.constant 3.906250e-03 : f32
    %1328 = arith.mulf %1327, %cst_189 : f32
    %cst_190 = arith.constant 9.99999974E-6 : f32
    %1329 = arith.addf %1328, %cst_190 : f32
    %1330 = math.rsqrt %1329 : f32
    %1331 = vector.broadcast %1330 : f32 to vector<16x16xf32>
    %1332 = arith.mulf %1322, %1331 : vector<16x16xf32>
    %c0_191 = arith.constant 0 : index
    %c3_192 = arith.constant 3 : index
    %c0_193 = arith.constant 0 : index
    %c0_194 = arith.constant 0 : index
    %1333 = vector.load %arg4[%c0_191, %c3_192, %c0_193, %c0_194] : memref<1x8x16x16xf32, #tpu.memory_space<vmem>>, vector<1x1x16x16xf32>
    %1334 = vector.shape_cast %1333 : vector<1x1x16x16xf32> to vector<16x16xf32>
    %1335 = vector.shape_cast %1332 : vector<16x16xf32> to vector<1x1x16x16xf32>
    tpu.vector_store %arg4[%c0_191, %c3_192, %c0_193, %c0_194], %1335 {strides = array<i32>} : memref<1x8x16x16xf32, #tpu.memory_space<vmem>>, vector<1x1x16x16xf32>,
    %1336 = vector.shape_cast %1243 : vector<16x16xf32> to vector<1x16x16xf32>
    %cst_195 = arith.constant dense<0.000000e+00> : vector<1xf32>
    %1337 = vector.multi_reduction <add>, %1336, %cst_195 [1, 2] : vector<1x16x16xf32> to vector<1xf32>
    %1338 = vector.shape_cast %1337 : vector<1xf32> to vector<1x1x1xf32>
    %1339 = vector.extract %1338[0, 0, 0] : f32 from vector<1x1x1xf32>
    %cst_196 = arith.constant 3.906250e-03 : f32
    %1340 = arith.mulf %1339, %cst_196 : f32
    %1341 = vector.broadcast %1340 : f32 to vector<16x16xf32>
    %1342 = arith.subf %1243, %1341 : vector<16x16xf32>
    %1343 = arith.mulf %1342, %1342 : vector<16x16xf32>
    %1344 = vector.shape_cast %1343 : vector<16x16xf32> to vector<1x16x16xf32>
    %cst_197 = arith.constant dense<0.000000e+00> : vector<1xf32>
    %1345 = vector.multi_reduction <add>, %1344, %cst_197 [1, 2] : vector<1x16x16xf32> to vector<1xf32>
    %1346 = vector.shape_cast %1345 : vector<1xf32> to vector<1x1x1xf32>
    %1347 = vector.extract %1346[0, 0, 0] : f32 from vector<1x1x1xf32>
    %cst_198 = arith.constant 3.906250e-03 : f32
    %1348 = arith.mulf %1347, %cst_198 : f32
    %cst_199 = arith.constant 9.99999974E-6 : f32
    %1349 = arith.addf %1348, %cst_199 : f32
    %1350 = math.rsqrt %1349 : f32
    %1351 = vector.broadcast %1350 : f32 to vector<16x16xf32>
    %1352 = arith.mulf %1342, %1351 : vector<16x16xf32>
    %c0_200 = arith.constant 0 : index
    %c4_201 = arith.constant 4 : index
    %c0_202 = arith.constant 0 : index
    %c0_203 = arith.constant 0 : index
    %1353 = vector.load %arg4[%c0_200, %c4_201, %c0_202, %c0_203] : memref<1x8x16x16xf32, #tpu.memory_space<vmem>>, vector<1x1x16x16xf32>
    %1354 = vector.shape_cast %1353 : vector<1x1x16x16xf32> to vector<16x16xf32>
    %1355 = vector.shape_cast %1352 : vector<16x16xf32> to vector<1x1x16x16xf32>
    tpu.vector_store %arg4[%c0_200, %c4_201, %c0_202, %c0_203], %1355 {strides = array<i32>} : memref<1x8x16x16xf32, #tpu.memory_space<vmem>>, vector<1x1x16x16xf32>,
    %1356 = vector.shape_cast %1247 : vector<16x16xf32> to vector<1x16x16xf32>
    %cst_204 = arith.constant dense<0.000000e+00> : vector<1xf32>
    %1357 = vector.multi_reduction <add>, %1356, %cst_204 [1, 2] : vector<1x16x16xf32> to vector<1xf32>
    %1358 = vector.shape_cast %1357 : vector<1xf32> to vector<1x1x1xf32>
    %1359 = vector.extract %1358[0, 0, 0] : f32 from vector<1x1x1xf32>
    %cst_205 = arith.constant 3.906250e-03 : f32
    %1360 = arith.mulf %1359, %cst_205 : f32
    %1361 = vector.broadcast %1360 : f32 to vector<16x16xf32>
    %1362 = arith.subf %1247, %1361 : vector<16x16xf32>
    %1363 = arith.mulf %1362, %1362 : vector<16x16xf32>
    %1364 = vector.shape_cast %1363 : vector<16x16xf32> to vector<1x16x16xf32>
    %cst_206 = arith.constant dense<0.000000e+00> : vector<1xf32>
    %1365 = vector.multi_reduction <add>, %1364, %cst_206 [1, 2] : vector<1x16x16xf32> to vector<1xf32>
    %1366 = vector.shape_cast %1365 : vector<1xf32> to vector<1x1x1xf32>
    %1367 = vector.extract %1366[0, 0, 0] : f32 from vector<1x1x1xf32>
    %cst_207 = arith.constant 3.906250e-03 : f32
    %1368 = arith.mulf %1367, %cst_207 : f32
    %cst_208 = arith.constant 9.99999974E-6 : f32
    %1369 = arith.addf %1368, %cst_208 : f32
    %1370 = math.rsqrt %1369 : f32
    %1371 = vector.broadcast %1370 : f32 to vector<16x16xf32>
    %1372 = arith.mulf %1362, %1371 : vector<16x16xf32>
    %c0_209 = arith.constant 0 : index
    %c5_210 = arith.constant 5 : index
    %c0_211 = arith.constant 0 : index
    %c0_212 = arith.constant 0 : index
    %1373 = vector.load %arg4[%c0_209, %c5_210, %c0_211, %c0_212] : memref<1x8x16x16xf32, #tpu.memory_space<vmem>>, vector<1x1x16x16xf32>
    %1374 = vector.shape_cast %1373 : vector<1x1x16x16xf32> to vector<16x16xf32>
    %1375 = vector.shape_cast %1372 : vector<16x16xf32> to vector<1x1x16x16xf32>
    tpu.vector_store %arg4[%c0_209, %c5_210, %c0_211, %c0_212], %1375 {strides = array<i32>} : memref<1x8x16x16xf32, #tpu.memory_space<vmem>>, vector<1x1x16x16xf32>,
    %1376 = vector.shape_cast %1251 : vector<16x16xf32> to vector<1x16x16xf32>
    %cst_213 = arith.constant dense<0.000000e+00> : vector<1xf32>
    %1377 = vector.multi_reduction <add>, %1376, %cst_213 [1, 2] : vector<1x16x16xf32> to vector<1xf32>
    %1378 = vector.shape_cast %1377 : vector<1xf32> to vector<1x1x1xf32>
    %1379 = vector.extract %1378[0, 0, 0] : f32 from vector<1x1x1xf32>
    %cst_214 = arith.constant 3.906250e-03 : f32
    %1380 = arith.mulf %1379, %cst_214 : f32
    %1381 = vector.broadcast %1380 : f32 to vector<16x16xf32>
    %1382 = arith.subf %1251, %1381 : vector<16x16xf32>
    %1383 = arith.mulf %1382, %1382 : vector<16x16xf32>
    %1384 = vector.shape_cast %1383 : vector<16x16xf32> to vector<1x16x16xf32>
    %cst_215 = arith.constant dense<0.000000e+00> : vector<1xf32>
    %1385 = vector.multi_reduction <add>, %1384, %cst_215 [1, 2] : vector<1x16x16xf32> to vector<1xf32>
    %1386 = vector.shape_cast %1385 : vector<1xf32> to vector<1x1x1xf32>
    %1387 = vector.extract %1386[0, 0, 0] : f32 from vector<1x1x1xf32>
    %cst_216 = arith.constant 3.906250e-03 : f32
    %1388 = arith.mulf %1387, %cst_216 : f32
    %cst_217 = arith.constant 9.99999974E-6 : f32
    %1389 = arith.addf %1388, %cst_217 : f32
    %1390 = math.rsqrt %1389 : f32
    %1391 = vector.broadcast %1390 : f32 to vector<16x16xf32>
    %1392 = arith.mulf %1382, %1391 : vector<16x16xf32>
    %c0_218 = arith.constant 0 : index
    %c6_219 = arith.constant 6 : index
    %c0_220 = arith.constant 0 : index
    %c0_221 = arith.constant 0 : index
    %1393 = vector.load %arg4[%c0_218, %c6_219, %c0_220, %c0_221] : memref<1x8x16x16xf32, #tpu.memory_space<vmem>>, vector<1x1x16x16xf32>
    %1394 = vector.shape_cast %1393 : vector<1x1x16x16xf32> to vector<16x16xf32>
    %1395 = vector.shape_cast %1392 : vector<16x16xf32> to vector<1x1x16x16xf32>
    tpu.vector_store %arg4[%c0_218, %c6_219, %c0_220, %c0_221], %1395 {strides = array<i32>} : memref<1x8x16x16xf32, #tpu.memory_space<vmem>>, vector<1x1x16x16xf32>,
    %1396 = vector.shape_cast %1255 : vector<16x16xf32> to vector<1x16x16xf32>
    %cst_222 = arith.constant dense<0.000000e+00> : vector<1xf32>
    %1397 = vector.multi_reduction <add>, %1396, %cst_222 [1, 2] : vector<1x16x16xf32> to vector<1xf32>
    %1398 = vector.shape_cast %1397 : vector<1xf32> to vector<1x1x1xf32>
    %1399 = vector.extract %1398[0, 0, 0] : f32 from vector<1x1x1xf32>
    %cst_223 = arith.constant 3.906250e-03 : f32
    %1400 = arith.mulf %1399, %cst_223 : f32
    %1401 = vector.broadcast %1400 : f32 to vector<16x16xf32>
    %1402 = arith.subf %1255, %1401 : vector<16x16xf32>
    %1403 = arith.mulf %1402, %1402 : vector<16x16xf32>
    %1404 = vector.shape_cast %1403 : vector<16x16xf32> to vector<1x16x16xf32>
    %cst_224 = arith.constant dense<0.000000e+00> : vector<1xf32>
    %1405 = vector.multi_reduction <add>, %1404, %cst_224 [1, 2] : vector<1x16x16xf32> to vector<1xf32>
    %1406 = vector.shape_cast %1405 : vector<1xf32> to vector<1x1x1xf32>
    %1407 = vector.extract %1406[0, 0, 0] : f32 from vector<1x1x1xf32>
    %cst_225 = arith.constant 3.906250e-03 : f32
    %1408 = arith.mulf %1407, %cst_225 : f32
    %cst_226 = arith.constant 9.99999974E-6 : f32
    %1409 = arith.addf %1408, %cst_226 : f32
    %1410 = math.rsqrt %1409 : f32
    %1411 = vector.broadcast %1410 : f32 to vector<16x16xf32>
    %1412 = arith.mulf %1402, %1411 : vector<16x16xf32>
    %c0_227 = arith.constant 0 : index
    %c7_228 = arith.constant 7 : index
    %c0_229 = arith.constant 0 : index
    %c0_230 = arith.constant 0 : index
    %1413 = vector.load %arg4[%c0_227, %c7_228, %c0_229, %c0_230] : memref<1x8x16x16xf32, #tpu.memory_space<vmem>>, vector<1x1x16x16xf32>
    %1414 = vector.shape_cast %1413 : vector<1x1x16x16xf32> to vector<16x16xf32>
    %1415 = vector.shape_cast %1412 : vector<16x16xf32> to vector<1x1x16x16xf32>
    tpu.vector_store %arg4[%c0_227, %c7_228, %c0_229, %c0_230], %1415 {strides = array<i32>} : memref<1x8x16x16xf32, #tpu.memory_space<vmem>>, vector<1x1x16x16xf32>,
    return
  }
  func.func @transform_0(%arg0: i32) -> (i32, i32, i32, i32) {
    %c0_i32 = arith.constant 0 : i32
    %c0_i32_0 = arith.constant 0 : i32
    %c0_i32_1 = arith.constant 0 : i32
    %c0_i32_2 = arith.constant 0 : i32
    return %arg0, %c0_i32, %c0_i32_0, %c0_i32_1 : i32, i32, i32, i32
  }
  func.func @transform_1(%arg0: i32) -> i32 {
    %c0_i32 = arith.constant 0 : i32
    %c0_i32_0 = arith.constant 0 : i32
    return %c0_i32 : i32
  }
  func.func @transform_2(%arg0: i32) -> i32 {
    %c0_i32 = arith.constant 0 : i32
    %c0_i32_0 = arith.constant 0 : i32
    return %c0_i32 : i32
  }
  func.func @transform_3(%arg0: i32) -> (i32, i32, i32, i32) {
    %c0_i32 = arith.constant 0 : i32
    %c0_i32_0 = arith.constant 0 : i32
    %c0_i32_1 = arith.constant 0 : i32
    %c0_i32_2 = arith.constant 0 : i32
    return %arg0, %c0_i32, %c0_i32_0, %c0_i32_1 : i32, i32, i32, i32
  }
}

</mosaic_0001>

<llo_original>
// kernel: tpu_custom_call.1
$region0: #{tpu_custom_call.1}
  #allocation0 [shape = 'u32[]', space=smem, size = 0x4, offset = 0x4, fixed_abs, tag = 'smem constant byte address 0x4 - core index']
  #allocation1 [shape = 'u32[144,128]{1,0:T(1,128)}', space=vmem, size = 0x12000, scoped, tag = 'internal scratch']
  %s0 = inlined_call_operand.vmem [shape: f32[2,4,18,18], index: 0, kind: input, shape index: {}]
  %s1 = inlined_call_operand.vmem [shape: f32[288], index: 1, kind: input, shape index: {}]
  %s2 = inlined_call_operand.vmem [shape: f32[8], index: 2, kind: input, shape index: {}]
  %s3 = inlined_call_operand.hbm [shape: f32[2,8,16,16], index: 3, kind: output, shape index: {}]
  %s4 = sld [smem:[#allocation0]]
  $region53: #{tpu_custom_call.1} parent=0
    _
  %s6 = ssub.s32 1, %s4
  %s7 = scalar_select 0, %s6, %s4
  $region1: #{tpu_custom_call.1} parent=0
    #allocation2 [shape = 'u8[1536]{0}', space=smem, size = 0x600, scoped, tag = 'input window, operand 1, single buffered']
    #allocation3 [shape = 's32[2]{0}', space=sflag, size = 0x8, scoped, tag = 'scoped memory for tpu_custom_call.1']
    #allocation4 [shape = 's32[2]{0}', space=sflag, size = 0x8, scoped, tag = 'scoped memory for tpu_custom_call.1']
    #allocation5 [shape = 'u8[512]{0}', space=smem, size = 0x200, scoped, tag = 'input window, operand 2, single buffered']
    #allocation6 [shape = 's32[1]{0}', space=sflag, size = 0x4, scoped, tag = 'scoped memory for tpu_custom_call.1']
    #allocation7 [shape = 'u8[131072]{0}', space=vmem, size = 0x20000, scoped, tag = 'output window, operand 0']
    %8 = vsyncpa [#allocation4], 0
    %9 = vsyncpa [#allocation6], 0
    %10 = vsyncpa [#allocation3], 0
    %s11 = scalar_lea.sflag [#allocation3], 1
    %12 = vsyncpa %s11, 0
    loop: start=0, step=1, limit=4
    $region2: #{tpu_custom_call.1} parent=1 // loop_pre_header
      _
    $region3: #{tpu_custom_call.1} parent=1 // loop_header
      %s14 = sphi 0, %s18
      %p15 = scmp.ge.s32.totalorder %s14, 4
      %s24 = sphi 0, %s26
      %s27 = sphi 0, %s24
      %s28 = sphi 0, %s27
      %s44 = sphi 0, %s28
      %s48 = sphi 0, %s48
      %s50 = sphi 0, %s48
      %s51 = sphi 0, %s50
      %s65 = sphi 0, %s51
      %s69 = sphi 0, %s69
      %s71 = sphi 0, %s69
      %s72 = sphi 0, %s71
      %s86 = sphi 0, %s72
      %s92 = sphi 0, %s94
      %s95 = sphi 0, %s92
      %s96 = sphi 0, %s95
      %s112 = sphi 0, %s96
    $region4: #{tpu_custom_call.1} parent=1 // loop_header_branch
      %17 = sbr.rel (%p15) target = $region8
    $region5: #{tpu_custom_call.1} parent=1 // loop_body
      %s19 = ssub.s32 %s14, 1
      %s20 = ssub.s32 %s14, 2
      %s21 = sadd.s32 %s14, 1
      %s22 = ssub.s32 %s14, %s21
      %p23 = scmp.eq.s32.totalorder %s22, 0
      %s25 = sadd.s32 %s24, 1
      %s26 = scalar_select %p23, %s24, %s25
      %p29 = pneg %p23
      %p30 = scmp.eq.s32.totalorder %s14, 1
      %p31 = por %p29, %p30
      %p32 = scmp.ne.s32.totalorder %s24, %s27
      %p33 = scmp.eq.s32.totalorder %s14, 0
      %p34 = por %p32, %p33
      %p35 = scmp.ne.s32.totalorder %s24, %s27
      %p36 = scmp.eq.s32.totalorder %s19, 1
      %p37 = por %p35, %p36
      %p38 = scmp.ne.s32.totalorder %s27, %s28
      %p39 = scmp.eq.s32.totalorder %s19, 0
      %p40 = por %p38, %p39
      %p41 = scmp.ne.s32.totalorder %s27, %s28
      %p42 = scmp.eq.s32.totalorder %s20, 1
      %p43 = por %p41, %p42
      %p45 = scmp.ne.s32.totalorder %s28, %s44
      %p46 = scmp.eq.s32.totalorder %s20, 0
      %p47 = por %p45, %p46
      %s49 = sadd.s32 %s48, 1
      %p52 = scmp.eq.s32.totalorder %s14, 1
      %p53 = scmp.ne.s32.totalorder %s48, %s50
      %p54 = scmp.eq.s32.totalorder %s14, 0
      %p55 = por %p53, %p54
      %p56 = scmp.ne.s32.totalorder %s48, %s50
      %p57 = scmp.eq.s32.totalorder %s19, 1
      %p58 = por %p56, %p57
      %p59 = scmp.ne.s32.totalorder %s50, %s51
      %p60 = scmp.eq.s32.totalorder %s19, 0
      %p61 = por %p59, %p60
      %p62 = scmp.ne.s32.totalorder %s50, %s51
      %p63 = scmp.eq.s32.totalorder %s20, 1
      %p64 = por %p62, %p63
      %p66 = scmp.ne.s32.totalorder %s51, %s65
      %p67 = scmp.eq.s32.totalorder %s20, 0
      %p68 = por %p66, %p67
      %s70 = sadd.s32 %s69, 1
      %p73 = scmp.eq.s32.totalorder %s14, 1
      %p74 = scmp.ne.s32.totalorder %s69, %s71
      %p75 = scmp.eq.s32.totalorder %s14, 0
      %p76 = por %p74, %p75
      %p77 = scmp.ne.s32.totalorder %s69, %s71
      %p78 = scmp.eq.s32.totalorder %s19, 1
      %p79 = por %p77, %p78
      %p80 = scmp.ne.s32.totalorder %s71, %s72
      %p81 = scmp.eq.s32.totalorder %s19, 0
      %p82 = por %p80, %p81
      %p83 = scmp.ne.s32.totalorder %s71, %s72
      %p84 = scmp.eq.s32.totalorder %s20, 1
      %p85 = por %p83, %p84
      %p87 = scmp.ne.s32.totalorder %s72, %s86
      %p88 = scmp.eq.s32.totalorder %s20, 0
      %p89 = por %p87, %p88
      %s90 = ssub.s32 %s14, %s21
      %p91 = scmp.eq.s32.totalorder %s90, 0
      %s93 = sadd.s32 %s92, 1
      %s94 = scalar_select %p91, %s92, %s93
      %p97 = pneg %p91
      %p98 = scmp.eq.s32.totalorder %s14, 1
      %p99 = por %p97, %p98
      %p100 = scmp.ne.s32.totalorder %s92, %s95
      %p101 = scmp.eq.s32.totalorder %s14, 0
      %p102 = por %p100, %p101
      %p103 = scmp.ne.s32.totalorder %s92, %s95
      %p104 = scmp.eq.s32.totalorder %s19, 1
      %p105 = por %p103, %p104
      %p106 = scmp.ne.s32.totalorder %s95, %s96
      %p107 = scmp.eq.s32.totalorder %s19, 0
      %p108 = por %p106, %p107
      %p109 = scmp.ne.s32.totalorder %s95, %s96
      %p110 = scmp.eq.s32.totalorder %s20, 1
      %p111 = por %p109, %p110
      %p113 = scmp.ne.s32.totalorder %s96, %s112
      %p114 = scmp.eq.s32.totalorder %s20, 0
      %p115 = por %p113, %p114
      %p116 = scmp.le.s32.totalorder 1, %s14
      %p117 = scmp.lt.s32.totalorder %s14, 3
      %p118 = pnand %p116, %p117
      %p119 = pneg %p118
      // Predicated region
      $region9: #{tpu_custom_call.1} parent=5 // pred_check
        _
      $region10: #{tpu_custom_call.1} parent=5 // pred_check_branch
        %121 = sbr.rel (%p118) target = $region12
      $region11: #{tpu_custom_call.1} parent=5 // pred_region
        %s122 = ssub.s32 %s14, 1
        // Predicated region
        $region13: #{tpu_custom_call.1} parent=11 // pred_check
          %p123 = pneg %p61
        $region14: #{tpu_custom_call.1} parent=11 // pred_check_branch
          %125 = sbr.rel (%p123) target = $region16
        $region15: #{tpu_custom_call.1} parent=11 // pred_region
          %s127 = ssub.s32 48, 48
          %128 = vsyncadd [#allocation4], %s127
          %s130 = sshll.u32 %s1, 4
          %s131 = int_to_ptr.vmem [resolvable:$true] %s130
          %133 = dma.vmem_to_smem %s131, 48, [#allocation2], [#allocation4]
        $region16: #{tpu_custom_call.1} parent=11 // pred_fallthru
          _
        // Predicated region
        $region17: #{tpu_custom_call.1} parent=11 // pred_check
          %p134 = pneg %p82
        $region18: #{tpu_custom_call.1} parent=11 // pred_check_branch
          %136 = sbr.rel (%p134) target = $region20
        $region19: #{tpu_custom_call.1} parent=11 // pred_region
          %s138 = ssub.s32 16, 16
          %139 = vsyncadd [#allocation6], %s138
          %s141 = sshll.u32 %s2, 4
          %s142 = int_to_ptr.vmem [resolvable:$true] %s141
          %144 = dma.vmem_to_smem %s142, 16, [#allocation5], [#allocation6]
        $region20: #{tpu_custom_call.1} parent=11 // pred_fallthru
          _
      $region12: #{tpu_custom_call.1} parent=5 // pred_fallthru
        _
      %p145 = scmp.lt.s32.totalorder %s14, 2
      // Predicated region
      $region21: #{tpu_custom_call.1} parent=5 // pred_check
        %p146 = pneg %p145
      $region22: #{tpu_custom_call.1} parent=5 // pred_check_branch
        %148 = sbr.rel (%p146) target = $region24
      $region23: #{tpu_custom_call.1} parent=5 // pred_region
        // Predicated region
        $region25: #{tpu_custom_call.1} parent=23 // pred_check
          %p149 = pneg %p34
        $region26: #{tpu_custom_call.1} parent=23 // pred_check_branch
          %151 = sbr.rel (%p149) target = $region28
        $region27: #{tpu_custom_call.1} parent=23 // pred_region
          %p152 = scmp.lt.s32.totalorder %s14, 1
          %s153 = scalar_select %p152, %s14, 1
          %s154 = smul.addr %s153, 12
          %s155 = smul.addr %s154, 8
          %s156 = scalar_lea.vmem %s0, %s155
        $region28: #{tpu_custom_call.1} parent=23 // pred_fallthru
          _
      $region24: #{tpu_custom_call.1} parent=5 // pred_fallthru
        _
      %p157 = scmp.le.s32.totalorder 1, %s14
      %p158 = scmp.lt.s32.totalorder %s14, 3
      %p159 = pnand %p157, %p158
      %p160 = pneg %p159
      // Predicated region
      $region29: #{tpu_custom_call.1} parent=5 // pred_check
        _
      $region30: #{tpu_custom_call.1} parent=5 // pred_check_branch
        %162 = sbr.rel (%p159) target = $region32
      $region31: #{tpu_custom_call.1} parent=5 // pred_region
        %s163 = ssub.s32 %s14, 1
        // Predicated region
        $region33: #{tpu_custom_call.1} parent=31 // pred_check
          %p164 = pneg %p61
        $region34: #{tpu_custom_call.1} parent=31 // pred_check_branch
          %166 = sbr.rel (%p164) target = $region36
        $region35: #{tpu_custom_call.1} parent=31 // pred_region
          %167 = dma.done [#allocation4], 48
        $region36: #{tpu_custom_call.1} parent=31 // pred_fallthru
          _
        // Predicated region
        $region37: #{tpu_custom_call.1} parent=31 // pred_check
          %p168 = pneg %p82
        $region38: #{tpu_custom_call.1} parent=31 // pred_check_branch
          %170 = sbr.rel (%p168) target = $region40
        $region39: #{tpu_custom_call.1} parent=31 // pred_region
          %171 = dma.done [#allocation6], 16
        $region40: #{tpu_custom_call.1} parent=31 // pred_fallthru
          _
        %172 = sfence
        %p173 = scmp.lt.s32.totalorder %s19, 1
        %s174 = scalar_select %p173, %s19, 1
        %s175 = smul.addr %s174, 12
        %s176 = smul.addr %s175, 8
        %s177 = scalar_lea.vmem %s0, %s176
        %p178 = pneg %p40
        %p179 = pneg %p37
        %p180 = pneg %p61
        %p181 = pneg %p58
        %p182 = pneg %p82
        %p183 = pneg %p79
        %p184 = pneg %p108
        %p185 = pneg %p105
        %s186 = sand.u32 %s95, 1
        %s187 = scalar_lea.sflag [#allocation3], %s186
        %s188 = sand.u32 %s95, 1
        %s189 = smul.addr %s188, 128
        %s190 = scalar_lea.vmem [#allocation7], %s189
        %p191 = scmp.lt.s32.totalorder %s19, 1
        %s192 = scalar_select %p191, %s19, 1
        %s193 = smul.addr %s192, 12
        %s194 = smul.addr %s193, 8
        %s195 = scalar_lea.vmem %s0, %s194
        %s196 = sld [smem:[#allocation5]]
        %v197 = vstv %s196
        %v198 = vadd.f32 %v197, 0.0
        %s199 = sld [smem:[#allocation5 + $0x1]]
        %v200 = vstv %s199
        %v201 = vadd.f32 %v200, 0.0
        %s202 = sld [smem:[#allocation5 + $0x2]]
        %v203 = vstv %s202
        %v204 = vadd.f32 %v203, 0.0
        %s205 = sld [smem:[#allocation5 + $0x3]]
        %v206 = vstv %s205
        %v207 = vadd.f32 %v206, 0.0
        %s208 = sld [smem:[#allocation5 + $0x4]]
        %v209 = vstv %s208
        %v210 = vadd.f32 %v209, 0.0
        %s211 = sld [smem:[#allocation5 + $0x5]]
        %v212 = vstv %s211
        %v213 = vadd.f32 %v212, 0.0
        %s214 = sld [smem:[#allocation5 + $0x6]]
        %v215 = vstv %s214
        %v216 = vadd.f32 %v215, 0.0
        %s217 = sld [smem:[#allocation5 + $0x7]]
        %v218 = vstv %s217
        %v219 = vadd.f32 %v218, 0.0
        %v220 = vld [vmem:[%s195] sm:$0xff]
        %v221 = vld [vmem:[%s195 + $0x8] sm:$0xff]
        %s222 = sld [smem:[#allocation2]]
        %v223 = vstv %s222
        %v224 = vmul.f32 %v223, %v220
        %v225 = vmul.f32 %v223, %v221
        %v226 = vadd.f32 %v198, %v224
        %v227 = vadd.f32 %v198, %v225
        %s228 = sld [smem:[#allocation2 + $0x24]]
        %v229 = vstv %s228
        %v230 = vmul.f32 %v229, %v220
        %v231 = vmul.f32 %v229, %v221
        %v232 = vadd.f32 %v201, %v230
        %v233 = vadd.f32 %v201, %v231
        %s234 = sld [smem:[#allocation2 + $0x48]]
        %v235 = vstv %s234
        %v236 = vmul.f32 %v235, %v220
        %v237 = vmul.f32 %v235, %v221
        %v238 = vadd.f32 %v204, %v236
        %v239 = vadd.f32 %v204, %v237
        %s240 = sld [smem:[#allocation2 + $0x6c]]
        %v241 = vstv %s240
        %v242 = vmul.f32 %v241, %v220
        %v243 = vmul.f32 %v241, %v221
        %v244 = vadd.f32 %v207, %v242
        %v245 = vadd.f32 %v207, %v243
        %s246 = sld [smem:[#allocation2 + $0x90]]
        %v247 = vstv %s246
        %v248 = vmul.f32 %v247, %v220
        %v249 = vmul.f32 %v247, %v221
        %v250 = vadd.f32 %v210, %v248
        %v251 = vadd.f32 %v210, %v249
        %s252 = sld [smem:[#allocation2 + $0xb4]]
        %v253 = vstv %s252
        %v254 = vmul.f32 %v253, %v220
        %v255 = vmul.f32 %v253, %v221
        %v256 = vadd.f32 %v213, %v254
        %v257 = vadd.f32 %v213, %v255
        %s258 = sld [smem:[#allocation2 + $0xd8]]
        %v259 = vstv %s258
        %v260 = vmul.f32 %v259, %v220
        %v261 = vmul.f32 %v259, %v221
        %v262 = vadd.f32 %v216, %v260
        %v263 = vadd.f32 %v216, %v261
        %s264 = sld [smem:[#allocation2 + $0xfc]]
        %v265 = vstv %s264
        %v266 = vmul.f32 %v265, %v220
        %v267 = vmul.f32 %v265, %v221
        %v268 = vadd.f32 %v219, %v266
        %v269 = vadd.f32 %v219, %v267
        %s270 = scalar_lea.vmem %s195, 24
        %v271 = vld [vmem:[%s270] sm:$0xff]
        %v272 = vld [vmem:[%s270 + $0x8] sm:$0xff]
        %s273 = sld [smem:[#allocation2 + $0x9]]
        %v274 = vstv %s273
        %v275 = vmul.f32 %v274, %v271
        %v276 = vmul.f32 %v274, %v272
        %v277 = vadd.f32 %v226, %v275
        %v278 = vadd.f32 %v227, %v276
        %s279 = sld [smem:[#allocation2 + $0x2d]]
        %v280 = vstv %s279
        %v281 = vmul.f32 %v280, %v271
        %v282 = vmul.f32 %v280, %v272
        %v283 = vadd.f32 %v232, %v281
        %v284 = vadd.f32 %v233, %v282
        %s285 = sld [smem:[#allocation2 + $0x51]]
        %v286 = vstv %s285
        %v287 = vmul.f32 %v286, %v271
        %v288 = vmul.f32 %v286, %v272
        %v289 = vadd.f32 %v238, %v287
        %v290 = vadd.f32 %v239, %v288
        %s291 = sld [smem:[#allocation2 + $0x75]]
        %v292 = vstv %s291
        %v293 = vmul.f32 %v292, %v271
        %v294 = vmul.f32 %v292, %v272
        %v295 = vadd.f32 %v244, %v293
        %v296 = vadd.f32 %v245, %v294
        %s297 = sld [smem:[#allocation2 + $0x99]]
        %v298 = vstv %s297
        %v299 = vmul.f32 %v298, %v271
        %v300 = vmul.f32 %v298, %v272
        %v301 = vadd.f32 %v250, %v299
        %v302 = vadd.f32 %v251, %v300
        %s303 = sld [smem:[#allocation2 + $0xbd]]
        %v304 = vstv %s303
        %v305 = vmul.f32 %v304, %v271
        %v306 = vmul.f32 %v304, %v272
        %v307 = vadd.f32 %v256, %v305
        %v308 = vadd.f32 %v257, %v306
        %s309 = sld [smem:[#allocation2 + $0xe1]]
        %v310 = vstv %s309
        %v311 = vmul.f32 %v310, %v271
        %v312 = vmul.f32 %v310, %v272
        %v313 = vadd.f32 %v262, %v311
        %v314 = vadd.f32 %v263, %v312
        %s315 = sld [smem:[#allocation2 + $0x105]]
        %v316 = vstv %s315
        %v317 = vmul.f32 %v316, %v271
        %v318 = vmul.f32 %v316, %v272
        %v319 = vadd.f32 %v268, %v317
        %v320 = vadd.f32 %v269, %v318
        %s321 = scalar_lea.vmem %s195, 48
        %v322 = vld [vmem:[%s321] sm:$0xff]
        %v323 = vld [vmem:[%s321 + $0x8] sm:$0xff]
        %s324 = sld [smem:[#allocation2 + $0x12]]
        %v325 = vstv %s324
        %v326 = vmul.f32 %v325, %v322
        %v327 = vmul.f32 %v325, %v323
        %v328 = vadd.f32 %v277, %v326
        %v329 = vadd.f32 %v278, %v327
        %s330 = sld [smem:[#allocation2 + $0x36]]
        %v331 = vstv %s330
        %v332 = vmul.f32 %v331, %v322
        %v333 = vmul.f32 %v331, %v323
        %v334 = vadd.f32 %v283, %v332
        %v335 = vadd.f32 %v284, %v333
        %s336 = sld [smem:[#allocation2 + $0x5a]]
        %v337 = vstv %s336
        %v338 = vmul.f32 %v337, %v322
        %v339 = vmul.f32 %v337, %v323
        %v340 = vadd.f32 %v289, %v338
        %v341 = vadd.f32 %v290, %v339
        %s342 = sld [smem:[#allocation2 + $0x7e]]
        %v343 = vstv %s342
        %v344 = vmul.f32 %v343, %v322
        %v345 = vmul.f32 %v343, %v323
        %v346 = vadd.f32 %v295, %v344
        %v347 = vadd.f32 %v296, %v345
        %s348 = sld [smem:[#allocation2 + $0xa2]]
        %v349 = vstv %s348
        %v350 = vmul.f32 %v349, %v322
        %v351 = vmul.f32 %v349, %v323
        %v352 = vadd.f32 %v301, %v350
        %v353 = vadd.f32 %v302, %v351
        %s354 = sld [smem:[#allocation2 + $0xc6]]
        %v355 = vstv %s354
        %v356 = vmul.f32 %v355, %v322
        %v357 = vmul.f32 %v355, %v323
        %v358 = vadd.f32 %v307, %v356
        %v359 = vadd.f32 %v308, %v357
        %s360 = sld [smem:[#allocation2 + $0xea]]
        %v361 = vstv %s360
        %v362 = vmul.f32 %v361, %v322
        %v363 = vmul.f32 %v361, %v323
        %v364 = vadd.f32 %v313, %v362
        %v365 = vadd.f32 %v314, %v363
        %s366 = sld [smem:[#allocation2 + $0x10e]]
        %v367 = vstv %s366
        %v368 = vmul.f32 %v367, %v322
        %v369 = vmul.f32 %v367, %v323
        %v370 = vadd.f32 %v319, %v368
        %v371 = vadd.f32 %v320, %v369
        %s372 = scalar_lea.vmem %s195, 72
        %v373 = vld [vmem:[%s372] sm:$0xff]
        %v374 = vld [vmem:[%s372 + $0x8] sm:$0xff]
        %s375 = sld [smem:[#allocation2 + $0x1b]]
        %v376 = vstv %s375
        %v377 = vmul.f32 %v376, %v373
        %v378 = vmul.f32 %v376, %v374
        %v379 = vadd.f32 %v328, %v377
        %v380 = vadd.f32 %v329, %v378
        %s381 = sld [smem:[#allocation2 + $0x3f]]
        %v382 = vstv %s381
        %v383 = vmul.f32 %v382, %v373
        %v384 = vmul.f32 %v382, %v374
        %v385 = vadd.f32 %v334, %v383
        %v386 = vadd.f32 %v335, %v384
        %s387 = sld [smem:[#allocation2 + $0x63]]
        %v388 = vstv %s387
        %v389 = vmul.f32 %v388, %v373
        %v390 = vmul.f32 %v388, %v374
        %v391 = vadd.f32 %v340, %v389
        %v392 = vadd.f32 %v341, %v390
        %s393 = sld [smem:[#allocation2 + $0x87]]
        %v394 = vstv %s393
        %v395 = vmul.f32 %v394, %v373
        %v396 = vmul.f32 %v394, %v374
        %v397 = vadd.f32 %v346, %v395
        %v398 = vadd.f32 %v347, %v396
        %s399 = sld [smem:[#allocation2 + $0xab]]
        %v400 = vstv %s399
        %v401 = vmul.f32 %v400, %v373
        %v402 = vmul.f32 %v400, %v374
        %v403 = vadd.f32 %v352, %v401
        %v404 = vadd.f32 %v353, %v402
        %s405 = sld [smem:[#allocation2 + $0xcf]]
        %v406 = vstv %s405
        %v407 = vmul.f32 %v406, %v373
        %v408 = vmul.f32 %v406, %v374
        %v409 = vadd.f32 %v358, %v407
        %v410 = vadd.f32 %v359, %v408
        %s411 = sld [smem:[#allocation2 + $0xf3]]
        %v412 = vstv %s411
        %v413 = vmul.f32 %v412, %v373
        %v414 = vmul.f32 %v412, %v374
        %v415 = vadd.f32 %v364, %v413
        %v416 = vadd.f32 %v365, %v414
        %s417 = sld [smem:[#allocation2 + $0x117]]
        %v418 = vstv %s417
        %v419 = vmul.f32 %v418, %v373
        %v420 = vmul.f32 %v418, %v374
        %v421 = vadd.f32 %v370, %v419
        %v422 = vadd.f32 %v371, %v420
        %s423 = sld [smem:[#allocation2 + $0x1]]
        %v424 = vstv %s423
        %v425 = vmul.f32 %v424, %v220
        %v426 = vmul.f32 %v424, %v221
        %429 = vrot.lane.b32.xlu0 %v425, 127
        %v430 = vpop.permute.xlu0 %429
        %431 = vrot.lane.b32.xlu0 %v426, 127
        %v432 = vpop.permute.xlu0 %431
        %v435 = vadd.f32 %v379, %v430
        %v436 = vadd.f32 %v380, %v432
        %s437 = sld [smem:[#allocation2 + $0x25]]
        %v438 = vstv %s437
        %v439 = vmul.f32 %v438, %v220
        %v440 = vmul.f32 %v438, %v221
        %443 = vrot.lane.b32.xlu0 %v439, 127
        %v444 = vpop.permute.xlu0 %443
        %445 = vrot.lane.b32.xlu0 %v440, 127
        %v446 = vpop.permute.xlu0 %445
        %v449 = vadd.f32 %v385, %v444
        %v450 = vadd.f32 %v386, %v446
        %s451 = sld [smem:[#allocation2 + $0x49]]
        %v452 = vstv %s451
        %v453 = vmul.f32 %v452, %v220
        %v454 = vmul.f32 %v452, %v221
        %457 = vrot.lane.b32.xlu0 %v453, 127
        %v458 = vpop.permute.xlu0 %457
        %459 = vrot.lane.b32.xlu0 %v454, 127
        %v460 = vpop.permute.xlu0 %459
        %v463 = vadd.f32 %v391, %v458
        %v464 = vadd.f32 %v392, %v460
        %s465 = sld [smem:[#allocation2 + $0x6d]]
        %v466 = vstv %s465
        %v467 = vmul.f32 %v466, %v220
        %v468 = vmul.f32 %v466, %v221
        %471 = vrot.lane.b32.xlu0 %v467, 127
        %v472 = vpop.permute.xlu0 %471
        %473 = vrot.lane.b32.xlu0 %v468, 127
        %v474 = vpop.permute.xlu0 %473
        %v477 = vadd.f32 %v397, %v472
        %v478 = vadd.f32 %v398, %v474
        %s479 = sld [smem:[#allocation2 + $0x91]]
        %v480 = vstv %s479
        %v481 = vmul.f32 %v480, %v220
        %v482 = vmul.f32 %v480, %v221
        %485 = vrot.lane.b32.xlu0 %v481, 127
        %v486 = vpop.permute.xlu0 %485
        %487 = vrot.lane.b32.xlu0 %v482, 127
        %v488 = vpop.permute.xlu0 %487
        %v491 = vadd.f32 %v403, %v486
        %v492 = vadd.f32 %v404, %v488
        %s493 = sld [smem:[#allocation2 + $0xb5]]
        %v494 = vstv %s493
        %v495 = vmul.f32 %v494, %v220
        %v496 = vmul.f32 %v494, %v221
        %499 = vrot.lane.b32.xlu0 %v495, 127
        %v500 = vpop.permute.xlu0 %499
        %501 = vrot.lane.b32.xlu0 %v496, 127
        %v502 = vpop.permute.xlu0 %501
        %v505 = vadd.f32 %v409, %v500
        %v506 = vadd.f32 %v410, %v502
        %s507 = sld [smem:[#allocation2 + $0xd9]]
        %v508 = vstv %s507
        %v509 = vmul.f32 %v508, %v220
        %v510 = vmul.f32 %v508, %v221
        %513 = vrot.lane.b32.xlu0 %v509, 127
        %v514 = vpop.permute.xlu0 %513
        %515 = vrot.lane.b32.xlu0 %v510, 127
        %v516 = vpop.permute.xlu0 %515
        %v519 = vadd.f32 %v415, %v514
        %v520 = vadd.f32 %v416, %v516
        %s521 = sld [smem:[#allocation2 + $0xfd]]
        %v522 = vstv %s521
        %v523 = vmul.f32 %v522, %v220
        %v524 = vmul.f32 %v522, %v221
        %527 = vrot.lane.b32.xlu0 %v523, 127
        %v528 = vpop.permute.xlu0 %527
        %529 = vrot.lane.b32.xlu0 %v524, 127
        %v530 = vpop.permute.xlu0 %529
        %v533 = vadd.f32 %v421, %v528
        %v534 = vadd.f32 %v422, %v530
        %s535 = sld [smem:[#allocation2 + $0xa]]
        %v536 = vstv %s535
        %v537 = vmul.f32 %v536, %v271
        %v538 = vmul.f32 %v536, %v272
        %541 = vrot.lane.b32.xlu0 %v537, 127
        %v542 = vpop.permute.xlu0 %541
        %543 = vrot.lane.b32.xlu0 %v538, 127
        %v544 = vpop.permute.xlu0 %543
        %v547 = vadd.f32 %v435, %v542
        %v548 = vadd.f32 %v436, %v544
        %s549 = sld [smem:[#allocation2 + $0x2e]]
        %v550 = vstv %s549
        %v551 = vmul.f32 %v550, %v271
        %v552 = vmul.f32 %v550, %v272
        %555 = vrot.lane.b32.xlu0 %v551, 127
        %v556 = vpop.permute.xlu0 %555
        %557 = vrot.lane.b32.xlu0 %v552, 127
        %v558 = vpop.permute.xlu0 %557
        %v561 = vadd.f32 %v449, %v556
        %v562 = vadd.f32 %v450, %v558
        %s563 = sld [smem:[#allocation2 + $0x52]]
        %v564 = vstv %s563
        %v565 = vmul.f32 %v564, %v271
        %v566 = vmul.f32 %v564, %v272
        %569 = vrot.lane.b32.xlu0 %v565, 127
        %v570 = vpop.permute.xlu0 %569
        %571 = vrot.lane.b32.xlu0 %v566, 127
        %v572 = vpop.permute.xlu0 %571
        %v575 = vadd.f32 %v463, %v570
        %v576 = vadd.f32 %v464, %v572
        %s577 = sld [smem:[#allocation2 + $0x76]]
        %v578 = vstv %s577
        %v579 = vmul.f32 %v578, %v271
        %v580 = vmul.f32 %v578, %v272
        %583 = vrot.lane.b32.xlu0 %v579, 127
        %v584 = vpop.permute.xlu0 %583
        %585 = vrot.lane.b32.xlu0 %v580, 127
        %v586 = vpop.permute.xlu0 %585
        %v589 = vadd.f32 %v477, %v584
        %v590 = vadd.f32 %v478, %v586
        %s591 = sld [smem:[#allocation2 + $0x9a]]
        %v592 = vstv %s591
        %v593 = vmul.f32 %v592, %v271
        %v594 = vmul.f32 %v592, %v272
        %597 = vrot.lane.b32.xlu0 %v593, 127
        %v598 = vpop.permute.xlu0 %597
        %599 = vrot.lane.b32.xlu0 %v594, 127
        %v600 = vpop.permute.xlu0 %599
        %v603 = vadd.f32 %v491, %v598
        %v604 = vadd.f32 %v492, %v600
        %s605 = sld [smem:[#allocation2 + $0xbe]]
        %v606 = vstv %s605
        %v607 = vmul.f32 %v606, %v271
        %v608 = vmul.f32 %v606, %v272
        %611 = vrot.lane.b32.xlu0 %v607, 127
        %v612 = vpop.permute.xlu0 %611
        %613 = vrot.lane.b32.xlu0 %v608, 127
        %v614 = vpop.permute.xlu0 %613
        %v617 = vadd.f32 %v505, %v612
        %v618 = vadd.f32 %v506, %v614
        %s619 = sld [smem:[#allocation2 + $0xe2]]
        %v620 = vstv %s619
        %v621 = vmul.f32 %v620, %v271
        %v622 = vmul.f32 %v620, %v272
        %625 = vrot.lane.b32.xlu0 %v621, 127
        %v626 = vpop.permute.xlu0 %625
        %627 = vrot.lane.b32.xlu0 %v622, 127
        %v628 = vpop.permute.xlu0 %627
        %v631 = vadd.f32 %v519, %v626
        %v632 = vadd.f32 %v520, %v628
        %s633 = sld [smem:[#allocation2 + $0x106]]
        %v634 = vstv %s633
        %v635 = vmul.f32 %v634, %v271
        %v636 = vmul.f32 %v634, %v272
        %639 = vrot.lane.b32.xlu0 %v635, 127
        %v640 = vpop.permute.xlu0 %639
        %641 = vrot.lane.b32.xlu0 %v636, 127
        %v642 = vpop.permute.xlu0 %641
        %v645 = vadd.f32 %v533, %v640
        %v646 = vadd.f32 %v534, %v642
        %s647 = sld [smem:[#allocation2 + $0x13]]
        %v648 = vstv %s647
        %v649 = vmul.f32 %v648, %v322
        %v650 = vmul.f32 %v648, %v323
        %653 = vrot.lane.b32.xlu0 %v649, 127
        %v654 = vpop.permute.xlu0 %653
        %655 = vrot.lane.b32.xlu0 %v650, 127
        %v656 = vpop.permute.xlu0 %655
        %v659 = vadd.f32 %v547, %v654
        %v660 = vadd.f32 %v548, %v656
        %s661 = sld [smem:[#allocation2 + $0x37]]
        %v662 = vstv %s661
        %v663 = vmul.f32 %v662, %v322
        %v664 = vmul.f32 %v662, %v323
        %667 = vrot.lane.b32.xlu0 %v663, 127
        %v668 = vpop.permute.xlu0 %667
        %669 = vrot.lane.b32.xlu0 %v664, 127
        %v670 = vpop.permute.xlu0 %669
        %v673 = vadd.f32 %v561, %v668
        %v674 = vadd.f32 %v562, %v670
        %s675 = sld [smem:[#allocation2 + $0x5b]]
        %v676 = vstv %s675
        %v677 = vmul.f32 %v676, %v322
        %v678 = vmul.f32 %v676, %v323
        %681 = vrot.lane.b32.xlu0 %v677, 127
        %v682 = vpop.permute.xlu0 %681
        %683 = vrot.lane.b32.xlu0 %v678, 127
        %v684 = vpop.permute.xlu0 %683
        %v687 = vadd.f32 %v575, %v682
        %v688 = vadd.f32 %v576, %v684
        %s689 = sld [smem:[#allocation2 + $0x7f]]
        %v690 = vstv %s689
        %v691 = vmul.f32 %v690, %v322
        %v692 = vmul.f32 %v690, %v323
        %695 = vrot.lane.b32.xlu0 %v691, 127
        %v696 = vpop.permute.xlu0 %695
        %697 = vrot.lane.b32.xlu0 %v692, 127
        %v698 = vpop.permute.xlu0 %697
        %v701 = vadd.f32 %v589, %v696
        %v702 = vadd.f32 %v590, %v698
        %s703 = sld [smem:[#allocation2 + $0xa3]]
        %v704 = vstv %s703
        %v705 = vmul.f32 %v704, %v322
        %v706 = vmul.f32 %v704, %v323
        %709 = vrot.lane.b32.xlu0 %v705, 127
        %v710 = vpop.permute.xlu0 %709
        %711 = vrot.lane.b32.xlu0 %v706, 127
        %v712 = vpop.permute.xlu0 %711
        %v715 = vadd.f32 %v603, %v710
        %v716 = vadd.f32 %v604, %v712
        %s717 = sld [smem:[#allocation2 + $0xc7]]
        %v718 = vstv %s717
        %v719 = vmul.f32 %v718, %v322
        %v720 = vmul.f32 %v718, %v323
        %723 = vrot.lane.b32.xlu0 %v719, 127
        %v724 = vpop.permute.xlu0 %723
        %725 = vrot.lane.b32.xlu0 %v720, 127
        %v726 = vpop.permute.xlu0 %725
        %v729 = vadd.f32 %v617, %v724
        %v730 = vadd.f32 %v618, %v726
        %s731 = sld [smem:[#allocation2 + $0xeb]]
        %v732 = vstv %s731
        %v733 = vmul.f32 %v732, %v322
        %v734 = vmul.f32 %v732, %v323
        %737 = vrot.lane.b32.xlu0 %v733, 127
        %v738 = vpop.permute.xlu0 %737
        %739 = vrot.lane.b32.xlu0 %v734, 127
        %v740 = vpop.permute.xlu0 %739
        %v743 = vadd.f32 %v631, %v738
        %v744 = vadd.f32 %v632, %v740
        %s745 = sld [smem:[#allocation2 + $0x10f]]
        %v746 = vstv %s745
        %v747 = vmul.f32 %v746, %v322
        %v748 = vmul.f32 %v746, %v323
        %751 = vrot.lane.b32.xlu0 %v747, 127
        %v752 = vpop.permute.xlu0 %751
        %753 = vrot.lane.b32.xlu0 %v748, 127
        %v754 = vpop.permute.xlu0 %753
        %v757 = vadd.f32 %v645, %v752
        %v758 = vadd.f32 %v646, %v754
        %s759 = sld [smem:[#allocation2 + $0x1c]]
        %v760 = vstv %s759
        %v761 = vmul.f32 %v760, %v373
        %v762 = vmul.f32 %v760, %v374
        %765 = vrot.lane.b32.xlu0 %v761, 127
        %v766 = vpop.permute.xlu0 %765
        %767 = vrot.lane.b32.xlu0 %v762, 127
        %v768 = vpop.permute.xlu0 %767
        %v771 = vadd.f32 %v659, %v766
        %v772 = vadd.f32 %v660, %v768
        %s773 = sld [smem:[#allocation2 + $0x40]]
        %v774 = vstv %s773
        %v775 = vmul.f32 %v774, %v373
        %v776 = vmul.f32 %v774, %v374
        %779 = vrot.lane.b32.xlu0 %v775, 127
        %v780 = vpop.permute.xlu0 %779
        %781 = vrot.lane.b32.xlu0 %v776, 127
        %v782 = vpop.permute.xlu0 %781
        %v785 = vadd.f32 %v673, %v780
        %v786 = vadd.f32 %v674, %v782
        %s787 = sld [smem:[#allocation2 + $0x64]]
        %v788 = vstv %s787
        %v789 = vmul.f32 %v788, %v373
        %v790 = vmul.f32 %v788, %v374
        %793 = vrot.lane.b32.xlu0 %v789, 127
        %v794 = vpop.permute.xlu0 %793
        %795 = vrot.lane.b32.xlu0 %v790, 127
        %v796 = vpop.permute.xlu0 %795
        %v799 = vadd.f32 %v687, %v794
        %v800 = vadd.f32 %v688, %v796
        %s801 = sld [smem:[#allocation2 + $0x88]]
        %v802 = vstv %s801
        %v803 = vmul.f32 %v802, %v373
        %v804 = vmul.f32 %v802, %v374
        %807 = vrot.lane.b32.xlu0 %v803, 127
        %v808 = vpop.permute.xlu0 %807
        %809 = vrot.lane.b32.xlu0 %v804, 127
        %v810 = vpop.permute.xlu0 %809
        %v813 = vadd.f32 %v701, %v808
        %v814 = vadd.f32 %v702, %v810
        %s815 = sld [smem:[#allocation2 + $0xac]]
        %v816 = vstv %s815
        %v817 = vmul.f32 %v816, %v373
        %v818 = vmul.f32 %v816, %v374
        %821 = vrot.lane.b32.xlu0 %v817, 127
        %v822 = vpop.permute.xlu0 %821
        %823 = vrot.lane.b32.xlu0 %v818, 127
        %v824 = vpop.permute.xlu0 %823
        %v827 = vadd.f32 %v715, %v822
        %v828 = vadd.f32 %v716, %v824
        %s829 = sld [smem:[#allocation2 + $0xd0]]
        %v830 = vstv %s829
        %v831 = vmul.f32 %v830, %v373
        %v832 = vmul.f32 %v830, %v374
        %835 = vrot.lane.b32.xlu0 %v831, 127
        %v836 = vpop.permute.xlu0 %835
        %837 = vrot.lane.b32.xlu0 %v832, 127
        %v838 = vpop.permute.xlu0 %837
        %v841 = vadd.f32 %v729, %v836
        %v842 = vadd.f32 %v730, %v838
        %s843 = sld [smem:[#allocation2 + $0xf4]]
        %v844 = vstv %s843
        %v845 = vmul.f32 %v844, %v373
        %v846 = vmul.f32 %v844, %v374
        %849 = vrot.lane.b32.xlu0 %v845, 127
        %v850 = vpop.permute.xlu0 %849
        %851 = vrot.lane.b32.xlu0 %v846, 127
        %v852 = vpop.permute.xlu0 %851
        %v855 = vadd.f32 %v743, %v850
        %v856 = vadd.f32 %v744, %v852
        %s857 = sld [smem:[#allocation2 + $0x118]]
        %v858 = vstv %s857
        %v859 = vmul.f32 %v858, %v373
        %v860 = vmul.f32 %v858, %v374
        %863 = vrot.lane.b32.xlu0 %v859, 127
        %v864 = vpop.permute.xlu0 %863
        %865 = vrot.lane.b32.xlu0 %v860, 127
        %v866 = vpop.permute.xlu0 %865
        %v869 = vadd.f32 %v757, %v864
        %v870 = vadd.f32 %v758, %v866
        %s871 = sld [smem:[#allocation2 + $0x2]]
        %v872 = vstv %s871
        %v873 = vmul.f32 %v872, %v220
        %v874 = vmul.f32 %v872, %v221
        %877 = vrot.lane.b32.xlu0 %v873, 126
        %v878 = vpop.permute.xlu0 %877
        %879 = vrot.lane.b32.xlu0 %v874, 126
        %v880 = vpop.permute.xlu0 %879
        %v883 = vadd.f32 %v771, %v878
        %v884 = vadd.f32 %v772, %v880
        %s885 = sld [smem:[#allocation2 + $0x26]]
        %v886 = vstv %s885
        %v887 = vmul.f32 %v886, %v220
        %v888 = vmul.f32 %v886, %v221
        %891 = vrot.lane.b32.xlu0 %v887, 126
        %v892 = vpop.permute.xlu0 %891
        %893 = vrot.lane.b32.xlu0 %v888, 126
        %v894 = vpop.permute.xlu0 %893
        %v897 = vadd.f32 %v785, %v892
        %v898 = vadd.f32 %v786, %v894
        %s899 = sld [smem:[#allocation2 + $0x4a]]
        %v900 = vstv %s899
        %v901 = vmul.f32 %v900, %v220
        %v902 = vmul.f32 %v900, %v221
        %905 = vrot.lane.b32.xlu0 %v901, 126
        %v906 = vpop.permute.xlu0 %905
        %907 = vrot.lane.b32.xlu0 %v902, 126
        %v908 = vpop.permute.xlu0 %907
        %v911 = vadd.f32 %v799, %v906
        %v912 = vadd.f32 %v800, %v908
        %s913 = sld [smem:[#allocation2 + $0x6e]]
        %v914 = vstv %s913
        %v915 = vmul.f32 %v914, %v220
        %v916 = vmul.f32 %v914, %v221
        %919 = vrot.lane.b32.xlu0 %v915, 126
        %v920 = vpop.permute.xlu0 %919
        %921 = vrot.lane.b32.xlu0 %v916, 126
        %v922 = vpop.permute.xlu0 %921
        %v925 = vadd.f32 %v813, %v920
        %v926 = vadd.f32 %v814, %v922
        %s927 = sld [smem:[#allocation2 + $0x92]]
        %v928 = vstv %s927
        %v929 = vmul.f32 %v928, %v220
        %v930 = vmul.f32 %v928, %v221
        %933 = vrot.lane.b32.xlu0 %v929, 126
        %v934 = vpop.permute.xlu0 %933
        %935 = vrot.lane.b32.xlu0 %v930, 126
        %v936 = vpop.permute.xlu0 %935
        %v939 = vadd.f32 %v827, %v934
        %v940 = vadd.f32 %v828, %v936
        %s941 = sld [smem:[#allocation2 + $0xb6]]
        %v942 = vstv %s941
        %v943 = vmul.f32 %v942, %v220
        %v944 = vmul.f32 %v942, %v221
        %947 = vrot.lane.b32.xlu0 %v943, 126
        %v948 = vpop.permute.xlu0 %947
        %949 = vrot.lane.b32.xlu0 %v944, 126
        %v950 = vpop.permute.xlu0 %949
        %v953 = vadd.f32 %v841, %v948
        %v954 = vadd.f32 %v842, %v950
        %s955 = sld [smem:[#allocation2 + $0xda]]
        %v956 = vstv %s955
        %v957 = vmul.f32 %v956, %v220
        %v958 = vmul.f32 %v956, %v221
        %961 = vrot.lane.b32.xlu0 %v957, 126
        %v962 = vpop.permute.xlu0 %961
        %963 = vrot.lane.b32.xlu0 %v958, 126
        %v964 = vpop.permute.xlu0 %963
        %v967 = vadd.f32 %v855, %v962
        %v968 = vadd.f32 %v856, %v964
        %s969 = sld [smem:[#allocation2 + $0xfe]]
        %v970 = vstv %s969
        %v971 = vmul.f32 %v970, %v220
        %v972 = vmul.f32 %v970, %v221
        %975 = vrot.lane.b32.xlu0 %v971, 126
        %v976 = vpop.permute.xlu0 %975
        %977 = vrot.lane.b32.xlu0 %v972, 126
        %v978 = vpop.permute.xlu0 %977
        %v981 = vadd.f32 %v869, %v976
        %v982 = vadd.f32 %v870, %v978
        %s983 = sld [smem:[#allocation2 + $0xb]]
        %v984 = vstv %s983
        %v985 = vmul.f32 %v984, %v271
        %v986 = vmul.f32 %v984, %v272
        %989 = vrot.lane.b32.xlu0 %v985, 126
        %v990 = vpop.permute.xlu0 %989
        %991 = vrot.lane.b32.xlu0 %v986, 126
        %v992 = vpop.permute.xlu0 %991
        %v995 = vadd.f32 %v883, %v990
        %v996 = vadd.f32 %v884, %v992
        %s997 = sld [smem:[#allocation2 + $0x2f]]
        %v998 = vstv %s997
        %v999 = vmul.f32 %v998, %v271
        %v1000 = vmul.f32 %v998, %v272
        %1003 = vrot.lane.b32.xlu0 %v999, 126
        %v1004 = vpop.permute.xlu0 %1003
        %1005 = vrot.lane.b32.xlu0 %v1000, 126
        %v1006 = vpop.permute.xlu0 %1005
        %v1009 = vadd.f32 %v897, %v1004
        %v1010 = vadd.f32 %v898, %v1006
        %s1011 = sld [smem:[#allocation2 + $0x53]]
        %v1012 = vstv %s1011
        %v1013 = vmul.f32 %v1012, %v271
        %v1014 = vmul.f32 %v1012, %v272
        %1017 = vrot.lane.b32.xlu0 %v1013, 126
        %v1018 = vpop.permute.xlu0 %1017
        %1019 = vrot.lane.b32.xlu0 %v1014, 126
        %v1020 = vpop.permute.xlu0 %1019
        %v1023 = vadd.f32 %v911, %v1018
        %v1024 = vadd.f32 %v912, %v1020
        %s1025 = sld [smem:[#allocation2 + $0x77]]
        %v1026 = vstv %s1025
        %v1027 = vmul.f32 %v1026, %v271
        %v1028 = vmul.f32 %v1026, %v272
        %1031 = vrot.lane.b32.xlu0 %v1027, 126
        %v1032 = vpop.permute.xlu0 %1031
        %1033 = vrot.lane.b32.xlu0 %v1028, 126
        %v1034 = vpop.permute.xlu0 %1033
        %v1037 = vadd.f32 %v925, %v1032
        %v1038 = vadd.f32 %v926, %v1034
        %s1039 = sld [smem:[#allocation2 + $0x9b]]
        %v1040 = vstv %s1039
        %v1041 = vmul.f32 %v1040, %v271
        %v1042 = vmul.f32 %v1040, %v272
        %1045 = vrot.lane.b32.xlu0 %v1041, 126
        %v1046 = vpop.permute.xlu0 %1045
        %1047 = vrot.lane.b32.xlu0 %v1042, 126
        %v1048 = vpop.permute.xlu0 %1047
        %v1051 = vadd.f32 %v939, %v1046
        %v1052 = vadd.f32 %v940, %v1048
        %s1053 = sld [smem:[#allocation2 + $0xbf]]
        %v1054 = vstv %s1053
        %v1055 = vmul.f32 %v1054, %v271
        %v1056 = vmul.f32 %v1054, %v272
        %1059 = vrot.lane.b32.xlu0 %v1055, 126
        %v1060 = vpop.permute.xlu0 %1059
        %1061 = vrot.lane.b32.xlu0 %v1056, 126
        %v1062 = vpop.permute.xlu0 %1061
        %v1065 = vadd.f32 %v953, %v1060
        %v1066 = vadd.f32 %v954, %v1062
        %s1067 = sld [smem:[#allocation2 + $0xe3]]
        %v1068 = vstv %s1067
        %v1069 = vmul.f32 %v1068, %v271
        %v1070 = vmul.f32 %v1068, %v272
        %1073 = vrot.lane.b32.xlu0 %v1069, 126
        %v1074 = vpop.permute.xlu0 %1073
        %1075 = vrot.lane.b32.xlu0 %v1070, 126
        %v1076 = vpop.permute.xlu0 %1075
        %v1079 = vadd.f32 %v967, %v1074
        %v1080 = vadd.f32 %v968, %v1076
        %s1081 = sld [smem:[#allocation2 + $0x107]]
        %v1082 = vstv %s1081
        %v1083 = vmul.f32 %v1082, %v271
        %v1084 = vmul.f32 %v1082, %v272
        %1087 = vrot.lane.b32.xlu0 %v1083, 126
        %v1088 = vpop.permute.xlu0 %1087
        %1089 = vrot.lane.b32.xlu0 %v1084, 126
        %v1090 = vpop.permute.xlu0 %1089
        %v1093 = vadd.f32 %v981, %v1088
        %v1094 = vadd.f32 %v982, %v1090
        %s1095 = sld [smem:[#allocation2 + $0x14]]
        %v1096 = vstv %s1095
        %v1097 = vmul.f32 %v1096, %v322
        %v1098 = vmul.f32 %v1096, %v323
        %1101 = vrot.lane.b32.xlu0 %v1097, 126
        %v1102 = vpop.permute.xlu0 %1101
        %1103 = vrot.lane.b32.xlu0 %v1098, 126
        %v1104 = vpop.permute.xlu0 %1103
        %v1107 = vadd.f32 %v995, %v1102
        %v1108 = vadd.f32 %v996, %v1104
        %s1109 = sld [smem:[#allocation2 + $0x38]]
        %v1110 = vstv %s1109
        %v1111 = vmul.f32 %v1110, %v322
        %v1112 = vmul.f32 %v1110, %v323
        %1115 = vrot.lane.b32.xlu0 %v1111, 126
        %v1116 = vpop.permute.xlu0 %1115
        %1117 = vrot.lane.b32.xlu0 %v1112, 126
        %v1118 = vpop.permute.xlu0 %1117
        %v1121 = vadd.f32 %v1009, %v1116
        %v1122 = vadd.f32 %v1010, %v1118
        %s1123 = sld [smem:[#allocation2 + $0x5c]]
        %v1124 = vstv %s1123
        %v1125 = vmul.f32 %v1124, %v322
        %v1126 = vmul.f32 %v1124, %v323
        %1129 = vrot.lane.b32.xlu0 %v1125, 126
        %v1130 = vpop.permute.xlu0 %1129
        %1131 = vrot.lane.b32.xlu0 %v1126, 126
        %v1132 = vpop.permute.xlu0 %1131
        %v1135 = vadd.f32 %v1023, %v1130
        %v1136 = vadd.f32 %v1024, %v1132
        %s1137 = sld [smem:[#allocation2 + $0x80]]
        %v1138 = vstv %s1137
        %v1139 = vmul.f32 %v1138, %v322
        %v1140 = vmul.f32 %v1138, %v323
        %1143 = vrot.lane.b32.xlu0 %v1139, 126
        %v1144 = vpop.permute.xlu0 %1143
        %1145 = vrot.lane.b32.xlu0 %v1140, 126
        %v1146 = vpop.permute.xlu0 %1145
        %v1149 = vadd.f32 %v1037, %v1144
        %v1150 = vadd.f32 %v1038, %v1146
        %s1151 = sld [smem:[#allocation2 + $0xa4]]
        %v1152 = vstv %s1151
        %v1153 = vmul.f32 %v1152, %v322
        %v1154 = vmul.f32 %v1152, %v323
        %1157 = vrot.lane.b32.xlu0 %v1153, 126
        %v1158 = vpop.permute.xlu0 %1157
        %1159 = vrot.lane.b32.xlu0 %v1154, 126
        %v1160 = vpop.permute.xlu0 %1159
        %v1163 = vadd.f32 %v1051, %v1158
        %v1164 = vadd.f32 %v1052, %v1160
        %s1165 = sld [smem:[#allocation2 + $0xc8]]
        %v1166 = vstv %s1165
        %v1167 = vmul.f32 %v1166, %v322
        %v1168 = vmul.f32 %v1166, %v323
        %1171 = vrot.lane.b32.xlu0 %v1167, 126
        %v1172 = vpop.permute.xlu0 %1171
        %1173 = vrot.lane.b32.xlu0 %v1168, 126
        %v1174 = vpop.permute.xlu0 %1173
        %v1177 = vadd.f32 %v1065, %v1172
        %v1178 = vadd.f32 %v1066, %v1174
        %s1179 = sld [smem:[#allocation2 + $0xec]]
        %v1180 = vstv %s1179
        %v1181 = vmul.f32 %v1180, %v322
        %v1182 = vmul.f32 %v1180, %v323
        %1185 = vrot.lane.b32.xlu0 %v1181, 126
        %v1186 = vpop.permute.xlu0 %1185
        %1187 = vrot.lane.b32.xlu0 %v1182, 126
        %v1188 = vpop.permute.xlu0 %1187
        %v1191 = vadd.f32 %v1079, %v1186
        %v1192 = vadd.f32 %v1080, %v1188
        %s1193 = sld [smem:[#allocation2 + $0x110]]
        %v1194 = vstv %s1193
        %v1195 = vmul.f32 %v1194, %v322
        %v1196 = vmul.f32 %v1194, %v323
        %1199 = vrot.lane.b32.xlu0 %v1195, 126
        %v1200 = vpop.permute.xlu0 %1199
        %1201 = vrot.lane.b32.xlu0 %v1196, 126
        %v1202 = vpop.permute.xlu0 %1201
        %v1205 = vadd.f32 %v1093, %v1200
        %v1206 = vadd.f32 %v1094, %v1202
        %s1207 = sld [smem:[#allocation2 + $0x1d]]
        %v1208 = vstv %s1207
        %v1209 = vmul.f32 %v1208, %v373
        %v1210 = vmul.f32 %v1208, %v374
        %1213 = vrot.lane.b32.xlu0 %v1209, 126
        %v1214 = vpop.permute.xlu0 %1213
        %1215 = vrot.lane.b32.xlu0 %v1210, 126
        %v1216 = vpop.permute.xlu0 %1215
        %v1219 = vadd.f32 %v1107, %v1214
        %v1220 = vadd.f32 %v1108, %v1216
        %s1221 = sld [smem:[#allocation2 + $0x41]]
        %v1222 = vstv %s1221
        %v1223 = vmul.f32 %v1222, %v373
        %v1224 = vmul.f32 %v1222, %v374
        %1227 = vrot.lane.b32.xlu0 %v1223, 126
        %v1228 = vpop.permute.xlu0 %1227
        %1229 = vrot.lane.b32.xlu0 %v1224, 126
        %v1230 = vpop.permute.xlu0 %1229
        %v1233 = vadd.f32 %v1121, %v1228
        %v1234 = vadd.f32 %v1122, %v1230
        %s1235 = sld [smem:[#allocation2 + $0x65]]
        %v1236 = vstv %s1235
        %v1237 = vmul.f32 %v1236, %v373
        %v1238 = vmul.f32 %v1236, %v374
        %1241 = vrot.lane.b32.xlu0 %v1237, 126
        %v1242 = vpop.permute.xlu0 %1241
        %1243 = vrot.lane.b32.xlu0 %v1238, 126
        %v1244 = vpop.permute.xlu0 %1243
        %v1247 = vadd.f32 %v1135, %v1242
        %v1248 = vadd.f32 %v1136, %v1244
        %s1249 = sld [smem:[#allocation2 + $0x89]]
        %v1250 = vstv %s1249
        %v1251 = vmul.f32 %v1250, %v373
        %v1252 = vmul.f32 %v1250, %v374
        %1255 = vrot.lane.b32.xlu0 %v1251, 126
        %v1256 = vpop.permute.xlu0 %1255
        %1257 = vrot.lane.b32.xlu0 %v1252, 126
        %v1258 = vpop.permute.xlu0 %1257
        %v1261 = vadd.f32 %v1149, %v1256
        %v1262 = vadd.f32 %v1150, %v1258
        %s1263 = sld [smem:[#allocation2 + $0xad]]
        %v1264 = vstv %s1263
        %v1265 = vmul.f32 %v1264, %v373
        %v1266 = vmul.f32 %v1264, %v374
        %1269 = vrot.lane.b32.xlu0 %v1265, 126
        %v1270 = vpop.permute.xlu0 %1269
        %1271 = vrot.lane.b32.xlu0 %v1266, 126
        %v1272 = vpop.permute.xlu0 %1271
        %v1275 = vadd.f32 %v1163, %v1270
        %v1276 = vadd.f32 %v1164, %v1272
        %s1277 = sld [smem:[#allocation2 + $0xd1]]
        %v1278 = vstv %s1277
        %v1279 = vmul.f32 %v1278, %v373
        %v1280 = vmul.f32 %v1278, %v374
        %1283 = vrot.lane.b32.xlu0 %v1279, 126
        %v1284 = vpop.permute.xlu0 %1283
        %1285 = vrot.lane.b32.xlu0 %v1280, 126
        %v1286 = vpop.permute.xlu0 %1285
        %v1289 = vadd.f32 %v1177, %v1284
        %v1290 = vadd.f32 %v1178, %v1286
        %s1291 = sld [smem:[#allocation2 + $0xf5]]
        %v1292 = vstv %s1291
        %v1293 = vmul.f32 %v1292, %v373
        %v1294 = vmul.f32 %v1292, %v374
        %1297 = vrot.lane.b32.xlu0 %v1293, 126
        %v1298 = vpop.permute.xlu0 %1297
        %1299 = vrot.lane.b32.xlu0 %v1294, 126
        %v1300 = vpop.permute.xlu0 %1299
        %v1303 = vadd.f32 %v1191, %v1298
        %v1304 = vadd.f32 %v1192, %v1300
        %s1305 = sld [smem:[#allocation2 + $0x119]]
        %v1306 = vstv %s1305
        %v1307 = vmul.f32 %v1306, %v373
        %v1308 = vmul.f32 %v1306, %v374
        %1311 = vrot.lane.b32.xlu0 %v1307, 126
        %v1312 = vpop.permute.xlu0 %1311
        %1313 = vrot.lane.b32.xlu0 %v1308, 126
        %v1314 = vpop.permute.xlu0 %1313
        %v1317 = vadd.f32 %v1205, %v1312
        %v1318 = vadd.f32 %v1206, %v1314
        %v1319 = vld [vmem:[%s195 + $0x1] sm:$0xff]
        %v1320 = vld [vmem:[%s195 + $0x9] sm:$0xff]
        %s1321 = sld [smem:[#allocation2 + $0x3]]
        %v1322 = vstv %s1321
        %v1323 = vmul.f32 %v1322, %v1319
        %v1324 = vmul.f32 %v1322, %v1320
        %v1325 = vadd.f32 %v1219, %v1323
        %v1326 = vadd.f32 %v1220, %v1324
        %s1327 = sld [smem:[#allocation2 + $0x27]]
        %v1328 = vstv %s1327
        %v1329 = vmul.f32 %v1328, %v1319
        %v1330 = vmul.f32 %v1328, %v1320
        %v1331 = vadd.f32 %v1233, %v1329
        %v1332 = vadd.f32 %v1234, %v1330
        %s1333 = sld [smem:[#allocation2 + $0x4b]]
        %v1334 = vstv %s1333
        %v1335 = vmul.f32 %v1334, %v1319
        %v1336 = vmul.f32 %v1334, %v1320
        %v1337 = vadd.f32 %v1247, %v1335
        %v1338 = vadd.f32 %v1248, %v1336
        %s1339 = sld [smem:[#allocation2 + $0x6f]]
        %v1340 = vstv %s1339
        %v1341 = vmul.f32 %v1340, %v1319
        %v1342 = vmul.f32 %v1340, %v1320
        %v1343 = vadd.f32 %v1261, %v1341
        %v1344 = vadd.f32 %v1262, %v1342
        %s1345 = sld [smem:[#allocation2 + $0x93]]
        %v1346 = vstv %s1345
        %v1347 = vmul.f32 %v1346, %v1319
        %v1348 = vmul.f32 %v1346, %v1320
        %v1349 = vadd.f32 %v1275, %v1347
        %v1350 = vadd.f32 %v1276, %v1348
        %s1351 = sld [smem:[#allocation2 + $0xb7]]
        %v1352 = vstv %s1351
        %v1353 = vmul.f32 %v1352, %v1319
        %v1354 = vmul.f32 %v1352, %v1320
        %v1355 = vadd.f32 %v1289, %v1353
        %v1356 = vadd.f32 %v1290, %v1354
        %s1357 = sld [smem:[#allocation2 + $0xdb]]
        %v1358 = vstv %s1357
        %v1359 = vmul.f32 %v1358, %v1319
        %v1360 = vmul.f32 %v1358, %v1320
        %v1361 = vadd.f32 %v1303, %v1359
        %v1362 = vadd.f32 %v1304, %v1360
        %s1363 = sld [smem:[#allocation2 + $0xff]]
        %v1364 = vstv %s1363
        %v1365 = vmul.f32 %v1364, %v1319
        %v1366 = vmul.f32 %v1364, %v1320
        %v1367 = vadd.f32 %v1317, %v1365
        %v1368 = vadd.f32 %v1318, %v1366
        %v1369 = vld [vmem:[%s270 + $0x1] sm:$0xff]
        %v1370 = vld [vmem:[%s270 + $0x9] sm:$0xff]
        %s1371 = sld [smem:[#allocation2 + $0xc]]
        %v1372 = vstv %s1371
        %v1373 = vmul.f32 %v1372, %v1369
        %v1374 = vmul.f32 %v1372, %v1370
        %v1375 = vadd.f32 %v1325, %v1373
        %v1376 = vadd.f32 %v1326, %v1374
        %s1377 = sld [smem:[#allocation2 + $0x30]]
        %v1378 = vstv %s1377
        %v1379 = vmul.f32 %v1378, %v1369
        %v1380 = vmul.f32 %v1378, %v1370
        %v1381 = vadd.f32 %v1331, %v1379
        %v1382 = vadd.f32 %v1332, %v1380
        %s1383 = sld [smem:[#allocation2 + $0x54]]
        %v1384 = vstv %s1383
        %v1385 = vmul.f32 %v1384, %v1369
        %v1386 = vmul.f32 %v1384, %v1370
        %v1387 = vadd.f32 %v1337, %v1385
        %v1388 = vadd.f32 %v1338, %v1386
        %s1389 = sld [smem:[#allocation2 + $0x78]]
        %v1390 = vstv %s1389
        %v1391 = vmul.f32 %v1390, %v1369
        %v1392 = vmul.f32 %v1390, %v1370
        %v1393 = vadd.f32 %v1343, %v1391
        %v1394 = vadd.f32 %v1344, %v1392
        %s1395 = sld [smem:[#allocation2 + $0x9c]]
        %v1396 = vstv %s1395
        %v1397 = vmul.f32 %v1396, %v1369
        %v1398 = vmul.f32 %v1396, %v1370
        %v1399 = vadd.f32 %v1349, %v1397
        %v1400 = vadd.f32 %v1350, %v1398
        %s1401 = sld [smem:[#allocation2 + $0xc0]]
        %v1402 = vstv %s1401
        %v1403 = vmul.f32 %v1402, %v1369
        %v1404 = vmul.f32 %v1402, %v1370
        %v1405 = vadd.f32 %v1355, %v1403
        %v1406 = vadd.f32 %v1356, %v1404
        %s1407 = sld [smem:[#allocation2 + $0xe4]]
        %v1408 = vstv %s1407
        %v1409 = vmul.f32 %v1408, %v1369
        %v1410 = vmul.f32 %v1408, %v1370
        %v1411 = vadd.f32 %v1361, %v1409
        %v1412 = vadd.f32 %v1362, %v1410
        %s1413 = sld [smem:[#allocation2 + $0x108]]
        %v1414 = vstv %s1413
        %v1415 = vmul.f32 %v1414, %v1369
        %v1416 = vmul.f32 %v1414, %v1370
        %v1417 = vadd.f32 %v1367, %v1415
        %v1418 = vadd.f32 %v1368, %v1416
        %v1419 = vld [vmem:[%s321 + $0x1] sm:$0xff]
        %v1420 = vld [vmem:[%s321 + $0x9] sm:$0xff]
        %s1421 = sld [smem:[#allocation2 + $0x15]]
        %v1422 = vstv %s1421
        %v1423 = vmul.f32 %v1422, %v1419
        %v1424 = vmul.f32 %v1422, %v1420
        %v1425 = vadd.f32 %v1375, %v1423
        %v1426 = vadd.f32 %v1376, %v1424
        %s1427 = sld [smem:[#allocation2 + $0x39]]
        %v1428 = vstv %s1427
        %v1429 = vmul.f32 %v1428, %v1419
        %v1430 = vmul.f32 %v1428, %v1420
        %v1431 = vadd.f32 %v1381, %v1429
        %v1432 = vadd.f32 %v1382, %v1430
        %s1433 = sld [smem:[#allocation2 + $0x5d]]
        %v1434 = vstv %s1433
        %v1435 = vmul.f32 %v1434, %v1419
        %v1436 = vmul.f32 %v1434, %v1420
        %v1437 = vadd.f32 %v1387, %v1435
        %v1438 = vadd.f32 %v1388, %v1436
        %s1439 = sld [smem:[#allocation2 + $0x81]]
        %v1440 = vstv %s1439
        %v1441 = vmul.f32 %v1440, %v1419
        %v1442 = vmul.f32 %v1440, %v1420
        %v1443 = vadd.f32 %v1393, %v1441
        %v1444 = vadd.f32 %v1394, %v1442
        %s1445 = sld [smem:[#allocation2 + $0xa5]]
        %v1446 = vstv %s1445
        %v1447 = vmul.f32 %v1446, %v1419
        %v1448 = vmul.f32 %v1446, %v1420
        %v1449 = vadd.f32 %v1399, %v1447
        %v1450 = vadd.f32 %v1400, %v1448
        %s1451 = sld [smem:[#allocation2 + $0xc9]]
        %v1452 = vstv %s1451
        %v1453 = vmul.f32 %v1452, %v1419
        %v1454 = vmul.f32 %v1452, %v1420
        %v1455 = vadd.f32 %v1405, %v1453
        %v1456 = vadd.f32 %v1406, %v1454
        %s1457 = sld [smem:[#allocation2 + $0xed]]
        %v1458 = vstv %s1457
        %v1459 = vmul.f32 %v1458, %v1419
        %v1460 = vmul.f32 %v1458, %v1420
        %v1461 = vadd.f32 %v1411, %v1459
        %v1462 = vadd.f32 %v1412, %v1460
        %s1463 = sld [smem:[#allocation2 + $0x111]]
        %v1464 = vstv %s1463
        %v1465 = vmul.f32 %v1464, %v1419
        %v1466 = vmul.f32 %v1464, %v1420
        %v1467 = vadd.f32 %v1417, %v1465
        %v1468 = vadd.f32 %v1418, %v1466
        %v1469 = vld [vmem:[%s372 + $0x1] sm:$0xff]
        %v1470 = vld [vmem:[%s372 + $0x9] sm:$0xff]
        %s1471 = sld [smem:[#allocation2 + $0x1e]]
        %v1472 = vstv %s1471
        %v1473 = vmul.f32 %v1472, %v1469
        %v1474 = vmul.f32 %v1472, %v1470
        %v1475 = vadd.f32 %v1425, %v1473
        %v1476 = vadd.f32 %v1426, %v1474
        %s1477 = sld [smem:[#allocation2 + $0x42]]
        %v1478 = vstv %s1477
        %v1479 = vmul.f32 %v1478, %v1469
        %v1480 = vmul.f32 %v1478, %v1470
        %v1481 = vadd.f32 %v1431, %v1479
        %v1482 = vadd.f32 %v1432, %v1480
        %s1483 = sld [smem:[#allocation2 + $0x66]]
        %v1484 = vstv %s1483
        %v1485 = vmul.f32 %v1484, %v1469
        %v1486 = vmul.f32 %v1484, %v1470
        %v1487 = vadd.f32 %v1437, %v1485
        %v1488 = vadd.f32 %v1438, %v1486
        %s1489 = sld [smem:[#allocation2 + $0x8a]]
        %v1490 = vstv %s1489
        %v1491 = vmul.f32 %v1490, %v1469
        %v1492 = vmul.f32 %v1490, %v1470
        %v1493 = vadd.f32 %v1443, %v1491
        %v1494 = vadd.f32 %v1444, %v1492
        %s1495 = sld [smem:[#allocation2 + $0xae]]
        %v1496 = vstv %s1495
        %v1497 = vmul.f32 %v1496, %v1469
        %v1498 = vmul.f32 %v1496, %v1470
        %v1499 = vadd.f32 %v1449, %v1497
        %v1500 = vadd.f32 %v1450, %v1498
        %s1501 = sld [smem:[#allocation2 + $0xd2]]
        %v1502 = vstv %s1501
        %v1503 = vmul.f32 %v1502, %v1469
        %v1504 = vmul.f32 %v1502, %v1470
        %v1505 = vadd.f32 %v1455, %v1503
        %v1506 = vadd.f32 %v1456, %v1504
        %s1507 = sld [smem:[#allocation2 + $0xf6]]
        %v1508 = vstv %s1507
        %v1509 = vmul.f32 %v1508, %v1469
        %v1510 = vmul.f32 %v1508, %v1470
        %v1511 = vadd.f32 %v1461, %v1509
        %v1512 = vadd.f32 %v1462, %v1510
        %s1513 = sld [smem:[#allocation2 + $0x11a]]
        %v1514 = vstv %s1513
        %v1515 = vmul.f32 %v1514, %v1469
        %v1516 = vmul.f32 %v1514, %v1470
        %v1517 = vadd.f32 %v1467, %v1515
        %v1518 = vadd.f32 %v1468, %v1516
        %s1519 = sld [smem:[#allocation2 + $0x4]]
        %v1520 = vstv %s1519
        %v1521 = vmul.f32 %v1520, %v1319
        %v1522 = vmul.f32 %v1520, %v1320
        %1525 = vrot.lane.b32.xlu0 %v1521, 127
        %v1526 = vpop.permute.xlu0 %1525
        %1527 = vrot.lane.b32.xlu0 %v1522, 127
        %v1528 = vpop.permute.xlu0 %1527
        %v1531 = vadd.f32 %v1475, %v1526
        %v1532 = vadd.f32 %v1476, %v1528
        %s1533 = sld [smem:[#allocation2 + $0x28]]
        %v1534 = vstv %s1533
        %v1535 = vmul.f32 %v1534, %v1319
        %v1536 = vmul.f32 %v1534, %v1320
        %1539 = vrot.lane.b32.xlu0 %v1535, 127
        %v1540 = vpop.permute.xlu0 %1539
        %1541 = vrot.lane.b32.xlu0 %v1536, 127
        %v1542 = vpop.permute.xlu0 %1541
        %v1545 = vadd.f32 %v1481, %v1540
        %v1546 = vadd.f32 %v1482, %v1542
        %s1547 = sld [smem:[#allocation2 + $0x4c]]
        %v1548 = vstv %s1547
        %v1549 = vmul.f32 %v1548, %v1319
        %v1550 = vmul.f32 %v1548, %v1320
        %1553 = vrot.lane.b32.xlu0 %v1549, 127
        %v1554 = vpop.permute.xlu0 %1553
        %1555 = vrot.lane.b32.xlu0 %v1550, 127
        %v1556 = vpop.permute.xlu0 %1555
        %v1559 = vadd.f32 %v1487, %v1554
        %v1560 = vadd.f32 %v1488, %v1556
        %s1561 = sld [smem:[#allocation2 + $0x70]]
        %v1562 = vstv %s1561
        %v1563 = vmul.f32 %v1562, %v1319
        %v1564 = vmul.f32 %v1562, %v1320
        %1567 = vrot.lane.b32.xlu0 %v1563, 127
        %v1568 = vpop.permute.xlu0 %1567
        %1569 = vrot.lane.b32.xlu0 %v1564, 127
        %v1570 = vpop.permute.xlu0 %1569
        %v1573 = vadd.f32 %v1493, %v1568
        %v1574 = vadd.f32 %v1494, %v1570
        %s1575 = sld [smem:[#allocation2 + $0x94]]
        %v1576 = vstv %s1575
        %v1577 = vmul.f32 %v1576, %v1319
        %v1578 = vmul.f32 %v1576, %v1320
        %1581 = vrot.lane.b32.xlu0 %v1577, 127
        %v1582 = vpop.permute.xlu0 %1581
        %1583 = vrot.lane.b32.xlu0 %v1578, 127
        %v1584 = vpop.permute.xlu0 %1583
        %v1587 = vadd.f32 %v1499, %v1582
        %v1588 = vadd.f32 %v1500, %v1584
        %s1589 = sld [smem:[#allocation2 + $0xb8]]
        %v1590 = vstv %s1589
        %v1591 = vmul.f32 %v1590, %v1319
        %v1592 = vmul.f32 %v1590, %v1320
        %1595 = vrot.lane.b32.xlu0 %v1591, 127
        %v1596 = vpop.permute.xlu0 %1595
        %1597 = vrot.lane.b32.xlu0 %v1592, 127
        %v1598 = vpop.permute.xlu0 %1597
        %v1601 = vadd.f32 %v1505, %v1596
        %v1602 = vadd.f32 %v1506, %v1598
        %s1603 = sld [smem:[#allocation2 + $0xdc]]
        %v1604 = vstv %s1603
        %v1605 = vmul.f32 %v1604, %v1319
        %v1606 = vmul.f32 %v1604, %v1320
        %1609 = vrot.lane.b32.xlu0 %v1605, 127
        %v1610 = vpop.permute.xlu0 %1609
        %1611 = vrot.lane.b32.xlu0 %v1606, 127
        %v1612 = vpop.permute.xlu0 %1611
        %v1615 = vadd.f32 %v1511, %v1610
        %v1616 = vadd.f32 %v1512, %v1612
        %s1617 = sld [smem:[#allocation2 + $0x100]]
        %v1618 = vstv %s1617
        %v1619 = vmul.f32 %v1618, %v1319
        %v1620 = vmul.f32 %v1618, %v1320
        %1623 = vrot.lane.b32.xlu0 %v1619, 127
        %v1624 = vpop.permute.xlu0 %1623
        %1625 = vrot.lane.b32.xlu0 %v1620, 127
        %v1626 = vpop.permute.xlu0 %1625
        %v1629 = vadd.f32 %v1517, %v1624
        %v1630 = vadd.f32 %v1518, %v1626
        %s1631 = sld [smem:[#allocation2 + $0xd]]
        %v1632 = vstv %s1631
        %v1633 = vmul.f32 %v1632, %v1369
        %v1634 = vmul.f32 %v1632, %v1370
        %1637 = vrot.lane.b32.xlu0 %v1633, 127
        %v1638 = vpop.permute.xlu0 %1637
        %1639 = vrot.lane.b32.xlu0 %v1634, 127
        %v1640 = vpop.permute.xlu0 %1639
        %v1643 = vadd.f32 %v1531, %v1638
        %v1644 = vadd.f32 %v1532, %v1640
        %s1645 = sld [smem:[#allocation2 + $0x31]]
        %v1646 = vstv %s1645
        %v1647 = vmul.f32 %v1646, %v1369
        %v1648 = vmul.f32 %v1646, %v1370
        %1651 = vrot.lane.b32.xlu0 %v1647, 127
        %v1652 = vpop.permute.xlu0 %1651
        %1653 = vrot.lane.b32.xlu0 %v1648, 127
        %v1654 = vpop.permute.xlu0 %1653
        %v1657 = vadd.f32 %v1545, %v1652
        %v1658 = vadd.f32 %v1546, %v1654
        %s1659 = sld [smem:[#allocation2 + $0x55]]
        %v1660 = vstv %s1659
        %v1661 = vmul.f32 %v1660, %v1369
        %v1662 = vmul.f32 %v1660, %v1370
        %1665 = vrot.lane.b32.xlu0 %v1661, 127
        %v1666 = vpop.permute.xlu0 %1665
        %1667 = vrot.lane.b32.xlu0 %v1662, 127
        %v1668 = vpop.permute.xlu0 %1667
        %v1671 = vadd.f32 %v1559, %v1666
        %v1672 = vadd.f32 %v1560, %v1668
        %s1673 = sld [smem:[#allocation2 + $0x79]]
        %v1674 = vstv %s1673
        %v1675 = vmul.f32 %v1674, %v1369
        %v1676 = vmul.f32 %v1674, %v1370
        %1679 = vrot.lane.b32.xlu0 %v1675, 127
        %v1680 = vpop.permute.xlu0 %1679
        %1681 = vrot.lane.b32.xlu0 %v1676, 127
        %v1682 = vpop.permute.xlu0 %1681
        %v1685 = vadd.f32 %v1573, %v1680
        %v1686 = vadd.f32 %v1574, %v1682
        %s1687 = sld [smem:[#allocation2 + $0x9d]]
        %v1688 = vstv %s1687
        %v1689 = vmul.f32 %v1688, %v1369
        %v1690 = vmul.f32 %v1688, %v1370
        %1693 = vrot.lane.b32.xlu0 %v1689, 127
        %v1694 = vpop.permute.xlu0 %1693
        %1695 = vrot.lane.b32.xlu0 %v1690, 127
        %v1696 = vpop.permute.xlu0 %1695
        %v1699 = vadd.f32 %v1587, %v1694
        %v1700 = vadd.f32 %v1588, %v1696
        %s1701 = sld [smem:[#allocation2 + $0xc1]]
        %v1702 = vstv %s1701
        %v1703 = vmul.f32 %v1702, %v1369
        %v1704 = vmul.f32 %v1702, %v1370
        %1707 = vrot.lane.b32.xlu0 %v1703, 127
        %v1708 = vpop.permute.xlu0 %1707
        %1709 = vrot.lane.b32.xlu0 %v1704, 127
        %v1710 = vpop.permute.xlu0 %1709
        %v1713 = vadd.f32 %v1601, %v1708
        %v1714 = vadd.f32 %v1602, %v1710
        %s1715 = sld [smem:[#allocation2 + $0xe5]]
        %v1716 = vstv %s1715
        %v1717 = vmul.f32 %v1716, %v1369
        %v1718 = vmul.f32 %v1716, %v1370
        %1721 = vrot.lane.b32.xlu0 %v1717, 127
        %v1722 = vpop.permute.xlu0 %1721
        %1723 = vrot.lane.b32.xlu0 %v1718, 127
        %v1724 = vpop.permute.xlu0 %1723
        %v1727 = vadd.f32 %v1615, %v1722
        %v1728 = vadd.f32 %v1616, %v1724
        %s1729 = sld [smem:[#allocation2 + $0x109]]
        %v1730 = vstv %s1729
        %v1731 = vmul.f32 %v1730, %v1369
        %v1732 = vmul.f32 %v1730, %v1370
        %1735 = vrot.lane.b32.xlu0 %v1731, 127
        %v1736 = vpop.permute.xlu0 %1735
        %1737 = vrot.lane.b32.xlu0 %v1732, 127
        %v1738 = vpop.permute.xlu0 %1737
        %v1741 = vadd.f32 %v1629, %v1736
        %v1742 = vadd.f32 %v1630, %v1738
        %s1743 = sld [smem:[#allocation2 + $0x16]]
        %v1744 = vstv %s1743
        %v1745 = vmul.f32 %v1744, %v1419
        %v1746 = vmul.f32 %v1744, %v1420
        %1749 = vrot.lane.b32.xlu0 %v1745, 127
        %v1750 = vpop.permute.xlu0 %1749
        %1751 = vrot.lane.b32.xlu0 %v1746, 127
        %v1752 = vpop.permute.xlu0 %1751
        %v1755 = vadd.f32 %v1643, %v1750
        %v1756 = vadd.f32 %v1644, %v1752
        %s1757 = sld [smem:[#allocation2 + $0x3a]]
        %v1758 = vstv %s1757
        %v1759 = vmul.f32 %v1758, %v1419
        %v1760 = vmul.f32 %v1758, %v1420
        %1763 = vrot.lane.b32.xlu0 %v1759, 127
        %v1764 = vpop.permute.xlu0 %1763
        %1765 = vrot.lane.b32.xlu0 %v1760, 127
        %v1766 = vpop.permute.xlu0 %1765
        %v1769 = vadd.f32 %v1657, %v1764
        %v1770 = vadd.f32 %v1658, %v1766
        %s1771 = sld [smem:[#allocation2 + $0x5e]]
        %v1772 = vstv %s1771
        %v1773 = vmul.f32 %v1772, %v1419
        %v1774 = vmul.f32 %v1772, %v1420
        %1777 = vrot.lane.b32.xlu0 %v1773, 127
        %v1778 = vpop.permute.xlu0 %1777
        %1779 = vrot.lane.b32.xlu0 %v1774, 127
        %v1780 = vpop.permute.xlu0 %1779
        %v1783 = vadd.f32 %v1671, %v1778
        %v1784 = vadd.f32 %v1672, %v1780
        %s1785 = sld [smem:[#allocation2 + $0x82]]
        %v1786 = vstv %s1785
        %v1787 = vmul.f32 %v1786, %v1419
        %v1788 = vmul.f32 %v1786, %v1420
        %1791 = vrot.lane.b32.xlu0 %v1787, 127
        %v1792 = vpop.permute.xlu0 %1791
        %1793 = vrot.lane.b32.xlu0 %v1788, 127
        %v1794 = vpop.permute.xlu0 %1793
        %v1797 = vadd.f32 %v1685, %v1792
        %v1798 = vadd.f32 %v1686, %v1794
        %s1799 = sld [smem:[#allocation2 + $0xa6]]
        %v1800 = vstv %s1799
        %v1801 = vmul.f32 %v1800, %v1419
        %v1802 = vmul.f32 %v1800, %v1420
        %1805 = vrot.lane.b32.xlu0 %v1801, 127
        %v1806 = vpop.permute.xlu0 %1805
        %1807 = vrot.lane.b32.xlu0 %v1802, 127
        %v1808 = vpop.permute.xlu0 %1807
        %v1811 = vadd.f32 %v1699, %v1806
        %v1812 = vadd.f32 %v1700, %v1808
        %s1813 = sld [smem:[#allocation2 + $0xca]]
        %v1814 = vstv %s1813
        %v1815 = vmul.f32 %v1814, %v1419
        %v1816 = vmul.f32 %v1814, %v1420
        %1819 = vrot.lane.b32.xlu0 %v1815, 127
        %v1820 = vpop.permute.xlu0 %1819
        %1821 = vrot.lane.b32.xlu0 %v1816, 127
        %v1822 = vpop.permute.xlu0 %1821
        %v1825 = vadd.f32 %v1713, %v1820
        %v1826 = vadd.f32 %v1714, %v1822
        %s1827 = sld [smem:[#allocation2 + $0xee]]
        %v1828 = vstv %s1827
        %v1829 = vmul.f32 %v1828, %v1419
        %v1830 = vmul.f32 %v1828, %v1420
        %1833 = vrot.lane.b32.xlu0 %v1829, 127
        %v1834 = vpop.permute.xlu0 %1833
        %1835 = vrot.lane.b32.xlu0 %v1830, 127
        %v1836 = vpop.permute.xlu0 %1835
        %v1839 = vadd.f32 %v1727, %v1834
        %v1840 = vadd.f32 %v1728, %v1836
        %s1841 = sld [smem:[#allocation2 + $0x112]]
        %v1842 = vstv %s1841
        %v1843 = vmul.f32 %v1842, %v1419
        %v1844 = vmul.f32 %v1842, %v1420
        %1847 = vrot.lane.b32.xlu0 %v1843, 127
        %v1848 = vpop.permute.xlu0 %1847
        %1849 = vrot.lane.b32.xlu0 %v1844, 127
        %v1850 = vpop.permute.xlu0 %1849
        %v1853 = vadd.f32 %v1741, %v1848
        %v1854 = vadd.f32 %v1742, %v1850
        %s1855 = sld [smem:[#allocation2 + $0x1f]]
        %v1856 = vstv %s1855
        %v1857 = vmul.f32 %v1856, %v1469
        %v1858 = vmul.f32 %v1856, %v1470
        %1861 = vrot.lane.b32.xlu0 %v1857, 127
        %v1862 = vpop.permute.xlu0 %1861
        %1863 = vrot.lane.b32.xlu0 %v1858, 127
        %v1864 = vpop.permute.xlu0 %1863
        %v1867 = vadd.f32 %v1755, %v1862
        %v1868 = vadd.f32 %v1756, %v1864
        %s1869 = sld [smem:[#allocation2 + $0x43]]
        %v1870 = vstv %s1869
        %v1871 = vmul.f32 %v1870, %v1469
        %v1872 = vmul.f32 %v1870, %v1470
        %1875 = vrot.lane.b32.xlu0 %v1871, 127
        %v1876 = vpop.permute.xlu0 %1875
        %1877 = vrot.lane.b32.xlu0 %v1872, 127
        %v1878 = vpop.permute.xlu0 %1877
        %v1881 = vadd.f32 %v1769, %v1876
        %v1882 = vadd.f32 %v1770, %v1878
        %s1883 = sld [smem:[#allocation2 + $0x67]]
        %v1884 = vstv %s1883
        %v1885 = vmul.f32 %v1884, %v1469
        %v1886 = vmul.f32 %v1884, %v1470
        %1889 = vrot.lane.b32.xlu0 %v1885, 127
        %v1890 = vpop.permute.xlu0 %1889
        %1891 = vrot.lane.b32.xlu0 %v1886, 127
        %v1892 = vpop.permute.xlu0 %1891
        %v1895 = vadd.f32 %v1783, %v1890
        %v1896 = vadd.f32 %v1784, %v1892
        %s1897 = sld [smem:[#allocation2 + $0x8b]]
        %v1898 = vstv %s1897
        %v1899 = vmul.f32 %v1898, %v1469
        %v1900 = vmul.f32 %v1898, %v1470
        %1903 = vrot.lane.b32.xlu0 %v1899, 127
        %v1904 = vpop.permute.xlu0 %1903
        %1905 = vrot.lane.b32.xlu0 %v1900, 127
        %v1906 = vpop.permute.xlu0 %1905
        %v1909 = vadd.f32 %v1797, %v1904
        %v1910 = vadd.f32 %v1798, %v1906
        %s1911 = sld [smem:[#allocation2 + $0xaf]]
        %v1912 = vstv %s1911
        %v1913 = vmul.f32 %v1912, %v1469
        %v1914 = vmul.f32 %v1912, %v1470
        %1917 = vrot.lane.b32.xlu0 %v1913, 127
        %v1918 = vpop.permute.xlu0 %1917
        %1919 = vrot.lane.b32.xlu0 %v1914, 127
        %v1920 = vpop.permute.xlu0 %1919
        %v1923 = vadd.f32 %v1811, %v1918
        %v1924 = vadd.f32 %v1812, %v1920
        %s1925 = sld [smem:[#allocation2 + $0xd3]]
        %v1926 = vstv %s1925
        %v1927 = vmul.f32 %v1926, %v1469
        %v1928 = vmul.f32 %v1926, %v1470
        %1931 = vrot.lane.b32.xlu0 %v1927, 127
        %v1932 = vpop.permute.xlu0 %1931
        %1933 = vrot.lane.b32.xlu0 %v1928, 127
        %v1934 = vpop.permute.xlu0 %1933
        %v1937 = vadd.f32 %v1825, %v1932
        %v1938 = vadd.f32 %v1826, %v1934
        %s1939 = sld [smem:[#allocation2 + $0xf7]]
        %v1940 = vstv %s1939
        %v1941 = vmul.f32 %v1940, %v1469
        %v1942 = vmul.f32 %v1940, %v1470
        %1945 = vrot.lane.b32.xlu0 %v1941, 127
        %v1946 = vpop.permute.xlu0 %1945
        %1947 = vrot.lane.b32.xlu0 %v1942, 127
        %v1948 = vpop.permute.xlu0 %1947
        %v1951 = vadd.f32 %v1839, %v1946
        %v1952 = vadd.f32 %v1840, %v1948
        %s1953 = sld [smem:[#allocation2 + $0x11b]]
        %v1954 = vstv %s1953
        %v1955 = vmul.f32 %v1954, %v1469
        %v1956 = vmul.f32 %v1954, %v1470
        %1959 = vrot.lane.b32.xlu0 %v1955, 127
        %v1960 = vpop.permute.xlu0 %1959
        %1961 = vrot.lane.b32.xlu0 %v1956, 127
        %v1962 = vpop.permute.xlu0 %1961
        %v1965 = vadd.f32 %v1853, %v1960
        %v1966 = vadd.f32 %v1854, %v1962
        %s1967 = sld [smem:[#allocation2 + $0x5]]
        %v1968 = vstv %s1967
        %v1969 = vmul.f32 %v1968, %v1319
        %v1970 = vmul.f32 %v1968, %v1320
        %1973 = vrot.lane.b32.xlu0 %v1969, 126
        %v1974 = vpop.permute.xlu0 %1973
        %1975 = vrot.lane.b32.xlu0 %v1970, 126
        %v1976 = vpop.permute.xlu0 %1975
        %v1979 = vadd.f32 %v1867, %v1974
        %v1980 = vadd.f32 %v1868, %v1976
        %s1981 = sld [smem:[#allocation2 + $0x29]]
        %v1982 = vstv %s1981
        %v1983 = vmul.f32 %v1982, %v1319
        %v1984 = vmul.f32 %v1982, %v1320
        %1987 = vrot.lane.b32.xlu0 %v1983, 126
        %v1988 = vpop.permute.xlu0 %1987
        %1989 = vrot.lane.b32.xlu0 %v1984, 126
        %v1990 = vpop.permute.xlu0 %1989
        %v1993 = vadd.f32 %v1881, %v1988
        %v1994 = vadd.f32 %v1882, %v1990
        %s1995 = sld [smem:[#allocation2 + $0x4d]]
        %v1996 = vstv %s1995
        %v1997 = vmul.f32 %v1996, %v1319
        %v1998 = vmul.f32 %v1996, %v1320
        %2001 = vrot.lane.b32.xlu0 %v1997, 126
        %v2002 = vpop.permute.xlu0 %2001
        %2003 = vrot.lane.b32.xlu0 %v1998, 126
        %v2004 = vpop.permute.xlu0 %2003
        %v2007 = vadd.f32 %v1895, %v2002
        %v2008 = vadd.f32 %v1896, %v2004
        %s2009 = sld [smem:[#allocation2 + $0x71]]
        %v2010 = vstv %s2009
        %v2011 = vmul.f32 %v2010, %v1319
        %v2012 = vmul.f32 %v2010, %v1320
        %2015 = vrot.lane.b32.xlu0 %v2011, 126
        %v2016 = vpop.permute.xlu0 %2015
        %2017 = vrot.lane.b32.xlu0 %v2012, 126
        %v2018 = vpop.permute.xlu0 %2017
        %v2021 = vadd.f32 %v1909, %v2016
        %v2022 = vadd.f32 %v1910, %v2018
        %s2023 = sld [smem:[#allocation2 + $0x95]]
        %v2024 = vstv %s2023
        %v2025 = vmul.f32 %v2024, %v1319
        %v2026 = vmul.f32 %v2024, %v1320
        %2029 = vrot.lane.b32.xlu0 %v2025, 126
        %v2030 = vpop.permute.xlu0 %2029
        %2031 = vrot.lane.b32.xlu0 %v2026, 126
        %v2032 = vpop.permute.xlu0 %2031
        %v2035 = vadd.f32 %v1923, %v2030
        %v2036 = vadd.f32 %v1924, %v2032
        %s2037 = sld [smem:[#allocation2 + $0xb9]]
        %v2038 = vstv %s2037
        %v2039 = vmul.f32 %v2038, %v1319
        %v2040 = vmul.f32 %v2038, %v1320
        %2043 = vrot.lane.b32.xlu0 %v2039, 126
        %v2044 = vpop.permute.xlu0 %2043
        %2045 = vrot.lane.b32.xlu0 %v2040, 126
        %v2046 = vpop.permute.xlu0 %2045
        %v2049 = vadd.f32 %v1937, %v2044
        %v2050 = vadd.f32 %v1938, %v2046
        %s2051 = sld [smem:[#allocation2 + $0xdd]]
        %v2052 = vstv %s2051
        %v2053 = vmul.f32 %v2052, %v1319
        %v2054 = vmul.f32 %v2052, %v1320
        %2057 = vrot.lane.b32.xlu0 %v2053, 126
        %v2058 = vpop.permute.xlu0 %2057
        %2059 = vrot.lane.b32.xlu0 %v2054, 126
        %v2060 = vpop.permute.xlu0 %2059
        %v2063 = vadd.f32 %v1951, %v2058
        %v2064 = vadd.f32 %v1952, %v2060
        %s2065 = sld [smem:[#allocation2 + $0x101]]
        %v2066 = vstv %s2065
        %v2067 = vmul.f32 %v2066, %v1319
        %v2068 = vmul.f32 %v2066, %v1320
        %2071 = vrot.lane.b32.xlu0 %v2067, 126
        %v2072 = vpop.permute.xlu0 %2071
        %2073 = vrot.lane.b32.xlu0 %v2068, 126
        %v2074 = vpop.permute.xlu0 %2073
        %v2077 = vadd.f32 %v1965, %v2072
        %v2078 = vadd.f32 %v1966, %v2074
        %s2079 = sld [smem:[#allocation2 + $0xe]]
        %v2080 = vstv %s2079
        %v2081 = vmul.f32 %v2080, %v1369
        %v2082 = vmul.f32 %v2080, %v1370
        %2085 = vrot.lane.b32.xlu0 %v2081, 126
        %v2086 = vpop.permute.xlu0 %2085
        %2087 = vrot.lane.b32.xlu0 %v2082, 126
        %v2088 = vpop.permute.xlu0 %2087
        %v2091 = vadd.f32 %v1979, %v2086
        %v2092 = vadd.f32 %v1980, %v2088
        %s2093 = sld [smem:[#allocation2 + $0x32]]
        %v2094 = vstv %s2093
        %v2095 = vmul.f32 %v2094, %v1369
        %v2096 = vmul.f32 %v2094, %v1370
        %2099 = vrot.lane.b32.xlu0 %v2095, 126
        %v2100 = vpop.permute.xlu0 %2099
        %2101 = vrot.lane.b32.xlu0 %v2096, 126
        %v2102 = vpop.permute.xlu0 %2101
        %v2105 = vadd.f32 %v1993, %v2100
        %v2106 = vadd.f32 %v1994, %v2102
        %s2107 = sld [smem:[#allocation2 + $0x56]]
        %v2108 = vstv %s2107
        %v2109 = vmul.f32 %v2108, %v1369
        %v2110 = vmul.f32 %v2108, %v1370
        %2113 = vrot.lane.b32.xlu0 %v2109, 126
        %v2114 = vpop.permute.xlu0 %2113
        %2115 = vrot.lane.b32.xlu0 %v2110, 126
        %v2116 = vpop.permute.xlu0 %2115
        %v2119 = vadd.f32 %v2007, %v2114
        %v2120 = vadd.f32 %v2008, %v2116
        %s2121 = sld [smem:[#allocation2 + $0x7a]]
        %v2122 = vstv %s2121
        %v2123 = vmul.f32 %v2122, %v1369
        %v2124 = vmul.f32 %v2122, %v1370
        %2127 = vrot.lane.b32.xlu0 %v2123, 126
        %v2128 = vpop.permute.xlu0 %2127
        %2129 = vrot.lane.b32.xlu0 %v2124, 126
        %v2130 = vpop.permute.xlu0 %2129
        %v2133 = vadd.f32 %v2021, %v2128
        %v2134 = vadd.f32 %v2022, %v2130
        %s2135 = sld [smem:[#allocation2 + $0x9e]]
        %v2136 = vstv %s2135
        %v2137 = vmul.f32 %v2136, %v1369
        %v2138 = vmul.f32 %v2136, %v1370
        %2141 = vrot.lane.b32.xlu0 %v2137, 126
        %v2142 = vpop.permute.xlu0 %2141
        %2143 = vrot.lane.b32.xlu0 %v2138, 126
        %v2144 = vpop.permute.xlu0 %2143
        %v2147 = vadd.f32 %v2035, %v2142
        %v2148 = vadd.f32 %v2036, %v2144
        %s2149 = sld [smem:[#allocation2 + $0xc2]]
        %v2150 = vstv %s2149
        %v2151 = vmul.f32 %v2150, %v1369
        %v2152 = vmul.f32 %v2150, %v1370
        %2155 = vrot.lane.b32.xlu0 %v2151, 126
        %v2156 = vpop.permute.xlu0 %2155
        %2157 = vrot.lane.b32.xlu0 %v2152, 126
        %v2158 = vpop.permute.xlu0 %2157
        %v2161 = vadd.f32 %v2049, %v2156
        %v2162 = vadd.f32 %v2050, %v2158
        %s2163 = sld [smem:[#allocation2 + $0xe6]]
        %v2164 = vstv %s2163
        %v2165 = vmul.f32 %v2164, %v1369
        %v2166 = vmul.f32 %v2164, %v1370
        %2169 = vrot.lane.b32.xlu0 %v2165, 126
        %v2170 = vpop.permute.xlu0 %2169
        %2171 = vrot.lane.b32.xlu0 %v2166, 126
        %v2172 = vpop.permute.xlu0 %2171
        %v2175 = vadd.f32 %v2063, %v2170
        %v2176 = vadd.f32 %v2064, %v2172
        %s2177 = sld [smem:[#allocation2 + $0x10a]]
        %v2178 = vstv %s2177
        %v2179 = vmul.f32 %v2178, %v1369
        %v2180 = vmul.f32 %v2178, %v1370
        %2183 = vrot.lane.b32.xlu0 %v2179, 126
        %v2184 = vpop.permute.xlu0 %2183
        %2185 = vrot.lane.b32.xlu0 %v2180, 126
        %v2186 = vpop.permute.xlu0 %2185
        %v2189 = vadd.f32 %v2077, %v2184
        %v2190 = vadd.f32 %v2078, %v2186
        %s2191 = sld [smem:[#allocation2 + $0x17]]
        %v2192 = vstv %s2191
        %v2193 = vmul.f32 %v2192, %v1419
        %v2194 = vmul.f32 %v2192, %v1420
        %2197 = vrot.lane.b32.xlu0 %v2193, 126
        %v2198 = vpop.permute.xlu0 %2197
        %2199 = vrot.lane.b32.xlu0 %v2194, 126
        %v2200 = vpop.permute.xlu0 %2199
        %v2203 = vadd.f32 %v2091, %v2198
        %v2204 = vadd.f32 %v2092, %v2200
        %s2205 = sld [smem:[#allocation2 + $0x3b]]
        %v2206 = vstv %s2205
        %v2207 = vmul.f32 %v2206, %v1419
        %v2208 = vmul.f32 %v2206, %v1420
        %2211 = vrot.lane.b32.xlu0 %v2207, 126
        %v2212 = vpop.permute.xlu0 %2211
        %2213 = vrot.lane.b32.xlu0 %v2208, 126
        %v2214 = vpop.permute.xlu0 %2213
        %v2217 = vadd.f32 %v2105, %v2212
        %v2218 = vadd.f32 %v2106, %v2214
        %s2219 = sld [smem:[#allocation2 + $0x5f]]
        %v2220 = vstv %s2219
        %v2221 = vmul.f32 %v2220, %v1419
        %v2222 = vmul.f32 %v2220, %v1420
        %2225 = vrot.lane.b32.xlu0 %v2221, 126
        %v2226 = vpop.permute.xlu0 %2225
        %2227 = vrot.lane.b32.xlu0 %v2222, 126
        %v2228 = vpop.permute.xlu0 %2227
        %v2231 = vadd.f32 %v2119, %v2226
        %v2232 = vadd.f32 %v2120, %v2228
        %s2233 = sld [smem:[#allocation2 + $0x83]]
        %v2234 = vstv %s2233
        %v2235 = vmul.f32 %v2234, %v1419
        %v2236 = vmul.f32 %v2234, %v1420
        %2239 = vrot.lane.b32.xlu0 %v2235, 126
        %v2240 = vpop.permute.xlu0 %2239
        %2241 = vrot.lane.b32.xlu0 %v2236, 126
        %v2242 = vpop.permute.xlu0 %2241
        %v2245 = vadd.f32 %v2133, %v2240
        %v2246 = vadd.f32 %v2134, %v2242
        %s2247 = sld [smem:[#allocation2 + $0xa7]]
        %v2248 = vstv %s2247
        %v2249 = vmul.f32 %v2248, %v1419
        %v2250 = vmul.f32 %v2248, %v1420
        %2253 = vrot.lane.b32.xlu0 %v2249, 126
        %v2254 = vpop.permute.xlu0 %2253
        %2255 = vrot.lane.b32.xlu0 %v2250, 126
        %v2256 = vpop.permute.xlu0 %2255
        %v2259 = vadd.f32 %v2147, %v2254
        %v2260 = vadd.f32 %v2148, %v2256
        %s2261 = sld [smem:[#allocation2 + $0xcb]]
        %v2262 = vstv %s2261
        %v2263 = vmul.f32 %v2262, %v1419
        %v2264 = vmul.f32 %v2262, %v1420
        %2267 = vrot.lane.b32.xlu0 %v2263, 126
        %v2268 = vpop.permute.xlu0 %2267
        %2269 = vrot.lane.b32.xlu0 %v2264, 126
        %v2270 = vpop.permute.xlu0 %2269
        %v2273 = vadd.f32 %v2161, %v2268
        %v2274 = vadd.f32 %v2162, %v2270
        %s2275 = sld [smem:[#allocation2 + $0xef]]
        %v2276 = vstv %s2275
        %v2277 = vmul.f32 %v2276, %v1419
        %v2278 = vmul.f32 %v2276, %v1420
        %2281 = vrot.lane.b32.xlu0 %v2277, 126
        %v2282 = vpop.permute.xlu0 %2281
        %2283 = vrot.lane.b32.xlu0 %v2278, 126
        %v2284 = vpop.permute.xlu0 %2283
        %v2287 = vadd.f32 %v2175, %v2282
        %v2288 = vadd.f32 %v2176, %v2284
        %s2289 = sld [smem:[#allocation2 + $0x113]]
        %v2290 = vstv %s2289
        %v2291 = vmul.f32 %v2290, %v1419
        %v2292 = vmul.f32 %v2290, %v1420
        %2295 = vrot.lane.b32.xlu0 %v2291, 126
        %v2296 = vpop.permute.xlu0 %2295
        %2297 = vrot.lane.b32.xlu0 %v2292, 126
        %v2298 = vpop.permute.xlu0 %2297
        %v2301 = vadd.f32 %v2189, %v2296
        %v2302 = vadd.f32 %v2190, %v2298
        %s2303 = sld [smem:[#allocation2 + $0x20]]
        %v2304 = vstv %s2303
        %v2305 = vmul.f32 %v2304, %v1469
        %v2306 = vmul.f32 %v2304, %v1470
        %2309 = vrot.lane.b32.xlu0 %v2305, 126
        %v2310 = vpop.permute.xlu0 %2309
        %2311 = vrot.lane.b32.xlu0 %v2306, 126
        %v2312 = vpop.permute.xlu0 %2311
        %v2315 = vadd.f32 %v2203, %v2310
        %v2316 = vadd.f32 %v2204, %v2312
        %s2317 = sld [smem:[#allocation2 + $0x44]]
        %v2318 = vstv %s2317
        %v2319 = vmul.f32 %v2318, %v1469
        %v2320 = vmul.f32 %v2318, %v1470
        %2323 = vrot.lane.b32.xlu0 %v2319, 126
        %v2324 = vpop.permute.xlu0 %2323
        %2325 = vrot.lane.b32.xlu0 %v2320, 126
        %v2326 = vpop.permute.xlu0 %2325
        %v2329 = vadd.f32 %v2217, %v2324
        %v2330 = vadd.f32 %v2218, %v2326
        %s2331 = sld [smem:[#allocation2 + $0x68]]
        %v2332 = vstv %s2331
        %v2333 = vmul.f32 %v2332, %v1469
        %v2334 = vmul.f32 %v2332, %v1470
        %2337 = vrot.lane.b32.xlu0 %v2333, 126
        %v2338 = vpop.permute.xlu0 %2337
        %2339 = vrot.lane.b32.xlu0 %v2334, 126
        %v2340 = vpop.permute.xlu0 %2339
        %v2343 = vadd.f32 %v2231, %v2338
        %v2344 = vadd.f32 %v2232, %v2340
        %s2345 = sld [smem:[#allocation2 + $0x8c]]
        %v2346 = vstv %s2345
        %v2347 = vmul.f32 %v2346, %v1469
        %v2348 = vmul.f32 %v2346, %v1470
        %2351 = vrot.lane.b32.xlu0 %v2347, 126
        %v2352 = vpop.permute.xlu0 %2351
        %2353 = vrot.lane.b32.xlu0 %v2348, 126
        %v2354 = vpop.permute.xlu0 %2353
        %v2357 = vadd.f32 %v2245, %v2352
        %v2358 = vadd.f32 %v2246, %v2354
        %s2359 = sld [smem:[#allocation2 + $0xb0]]
        %v2360 = vstv %s2359
        %v2361 = vmul.f32 %v2360, %v1469
        %v2362 = vmul.f32 %v2360, %v1470
        %2365 = vrot.lane.b32.xlu0 %v2361, 126
        %v2366 = vpop.permute.xlu0 %2365
        %2367 = vrot.lane.b32.xlu0 %v2362, 126
        %v2368 = vpop.permute.xlu0 %2367
        %v2371 = vadd.f32 %v2259, %v2366
        %v2372 = vadd.f32 %v2260, %v2368
        %s2373 = sld [smem:[#allocation2 + $0xd4]]
        %v2374 = vstv %s2373
        %v2375 = vmul.f32 %v2374, %v1469
        %v2376 = vmul.f32 %v2374, %v1470
        %2379 = vrot.lane.b32.xlu0 %v2375, 126
        %v2380 = vpop.permute.xlu0 %2379
        %2381 = vrot.lane.b32.xlu0 %v2376, 126
        %v2382 = vpop.permute.xlu0 %2381
        %v2385 = vadd.f32 %v2273, %v2380
        %v2386 = vadd.f32 %v2274, %v2382
        %s2387 = sld [smem:[#allocation2 + $0xf8]]
        %v2388 = vstv %s2387
        %v2389 = vmul.f32 %v2388, %v1469
        %v2390 = vmul.f32 %v2388, %v1470
        %2393 = vrot.lane.b32.xlu0 %v2389, 126
        %v2394 = vpop.permute.xlu0 %2393
        %2395 = vrot.lane.b32.xlu0 %v2390, 126
        %v2396 = vpop.permute.xlu0 %2395
        %v2399 = vadd.f32 %v2287, %v2394
        %v2400 = vadd.f32 %v2288, %v2396
        %s2401 = sld [smem:[#allocation2 + $0x11c]]
        %v2402 = vstv %s2401
        %v2403 = vmul.f32 %v2402, %v1469
        %v2404 = vmul.f32 %v2402, %v1470
        %2407 = vrot.lane.b32.xlu0 %v2403, 126
        %v2408 = vpop.permute.xlu0 %2407
        %2409 = vrot.lane.b32.xlu0 %v2404, 126
        %v2410 = vpop.permute.xlu0 %2409
        %v2413 = vadd.f32 %v2301, %v2408
        %v2414 = vadd.f32 %v2302, %v2410
        %v2415 = vld [vmem:[%s195 + $0x2] sm:$0xff]
        %v2416 = vld [vmem:[%s195 + $0xa] sm:$0xff]
        %s2417 = sld [smem:[#allocation2 + $0x6]]
        %v2418 = vstv %s2417
        %v2419 = vmul.f32 %v2418, %v2415
        %v2420 = vmul.f32 %v2418, %v2416
        %v2421 = vadd.f32 %v2315, %v2419
        %v2422 = vadd.f32 %v2316, %v2420
        %s2423 = sld [smem:[#allocation2 + $0x2a]]
        %v2424 = vstv %s2423
        %v2425 = vmul.f32 %v2424, %v2415
        %v2426 = vmul.f32 %v2424, %v2416
        %v2427 = vadd.f32 %v2329, %v2425
        %v2428 = vadd.f32 %v2330, %v2426
        %s2429 = sld [smem:[#allocation2 + $0x4e]]
        %v2430 = vstv %s2429
        %v2431 = vmul.f32 %v2430, %v2415
        %v2432 = vmul.f32 %v2430, %v2416
        %v2433 = vadd.f32 %v2343, %v2431
        %v2434 = vadd.f32 %v2344, %v2432
        %s2435 = sld [smem:[#allocation2 + $0x72]]
        %v2436 = vstv %s2435
        %v2437 = vmul.f32 %v2436, %v2415
        %v2438 = vmul.f32 %v2436, %v2416
        %v2439 = vadd.f32 %v2357, %v2437
        %v2440 = vadd.f32 %v2358, %v2438
        %s2441 = sld [smem:[#allocation2 + $0x96]]
        %v2442 = vstv %s2441
        %v2443 = vmul.f32 %v2442, %v2415
        %v2444 = vmul.f32 %v2442, %v2416
        %v2445 = vadd.f32 %v2371, %v2443
        %v2446 = vadd.f32 %v2372, %v2444
        %s2447 = sld [smem:[#allocation2 + $0xba]]
        %v2448 = vstv %s2447
        %v2449 = vmul.f32 %v2448, %v2415
        %v2450 = vmul.f32 %v2448, %v2416
        %v2451 = vadd.f32 %v2385, %v2449
        %v2452 = vadd.f32 %v2386, %v2450
        %s2453 = sld [smem:[#allocation2 + $0xde]]
        %v2454 = vstv %s2453
        %v2455 = vmul.f32 %v2454, %v2415
        %v2456 = vmul.f32 %v2454, %v2416
        %v2457 = vadd.f32 %v2399, %v2455
        %v2458 = vadd.f32 %v2400, %v2456
        %s2459 = sld [smem:[#allocation2 + $0x102]]
        %v2460 = vstv %s2459
        %v2461 = vmul.f32 %v2460, %v2415
        %v2462 = vmul.f32 %v2460, %v2416
        %v2463 = vadd.f32 %v2413, %v2461
        %v2464 = vadd.f32 %v2414, %v2462
        %v2465 = vld [vmem:[%s270 + $0x2] sm:$0xff]
        %v2466 = vld [vmem:[%s270 + $0xa] sm:$0xff]
        %s2467 = sld [smem:[#allocation2 + $0xf]]
        %v2468 = vstv %s2467
        %v2469 = vmul.f32 %v2468, %v2465
        %v2470 = vmul.f32 %v2468, %v2466
        %v2471 = vadd.f32 %v2421, %v2469
        %v2472 = vadd.f32 %v2422, %v2470
        %s2473 = sld [smem:[#allocation2 + $0x33]]
        %v2474 = vstv %s2473
        %v2475 = vmul.f32 %v2474, %v2465
        %v2476 = vmul.f32 %v2474, %v2466
        %v2477 = vadd.f32 %v2427, %v2475
        %v2478 = vadd.f32 %v2428, %v2476
        %s2479 = sld [smem:[#allocation2 + $0x57]]
        %v2480 = vstv %s2479
        %v2481 = vmul.f32 %v2480, %v2465
        %v2482 = vmul.f32 %v2480, %v2466
        %v2483 = vadd.f32 %v2433, %v2481
        %v2484 = vadd.f32 %v2434, %v2482
        %s2485 = sld [smem:[#allocation2 + $0x7b]]
        %v2486 = vstv %s2485
        %v2487 = vmul.f32 %v2486, %v2465
        %v2488 = vmul.f32 %v2486, %v2466
        %v2489 = vadd.f32 %v2439, %v2487
        %v2490 = vadd.f32 %v2440, %v2488
        %s2491 = sld [smem:[#allocation2 + $0x9f]]
        %v2492 = vstv %s2491
        %v2493 = vmul.f32 %v2492, %v2465
        %v2494 = vmul.f32 %v2492, %v2466
        %v2495 = vadd.f32 %v2445, %v2493
        %v2496 = vadd.f32 %v2446, %v2494
        %s2497 = sld [smem:[#allocation2 + $0xc3]]
        %v2498 = vstv %s2497
        %v2499 = vmul.f32 %v2498, %v2465
        %v2500 = vmul.f32 %v2498, %v2466
        %v2501 = vadd.f32 %v2451, %v2499
        %v2502 = vadd.f32 %v2452, %v2500
        %s2503 = sld [smem:[#allocation2 + $0xe7]]
        %v2504 = vstv %s2503
        %v2505 = vmul.f32 %v2504, %v2465
        %v2506 = vmul.f32 %v2504, %v2466
        %v2507 = vadd.f32 %v2457, %v2505
        %v2508 = vadd.f32 %v2458, %v2506
        %s2509 = sld [smem:[#allocation2 + $0x10b]]
        %v2510 = vstv %s2509
        %v2511 = vmul.f32 %v2510, %v2465
        %v2512 = vmul.f32 %v2510, %v2466
        %v2513 = vadd.f32 %v2463, %v2511
        %v2514 = vadd.f32 %v2464, %v2512
        %v2515 = vld [vmem:[%s321 + $0x2] sm:$0xff]
        %v2516 = vld [vmem:[%s321 + $0xa] sm:$0xff]
        %s2517 = sld [smem:[#allocation2 + $0x18]]
        %v2518 = vstv %s2517
        %v2519 = vmul.f32 %v2518, %v2515
        %v2520 = vmul.f32 %v2518, %v2516
        %v2521 = vadd.f32 %v2471, %v2519
        %v2522 = vadd.f32 %v2472, %v2520
        %s2523 = sld [smem:[#allocation2 + $0x3c]]
        %v2524 = vstv %s2523
        %v2525 = vmul.f32 %v2524, %v2515
        %v2526 = vmul.f32 %v2524, %v2516
        %v2527 = vadd.f32 %v2477, %v2525
        %v2528 = vadd.f32 %v2478, %v2526
        %s2529 = sld [smem:[#allocation2 + $0x60]]
        %v2530 = vstv %s2529
        %v2531 = vmul.f32 %v2530, %v2515
        %v2532 = vmul.f32 %v2530, %v2516
        %v2533 = vadd.f32 %v2483, %v2531
        %v2534 = vadd.f32 %v2484, %v2532
        %s2535 = sld [smem:[#allocation2 + $0x84]]
        %v2536 = vstv %s2535
        %v2537 = vmul.f32 %v2536, %v2515
        %v2538 = vmul.f32 %v2536, %v2516
        %v2539 = vadd.f32 %v2489, %v2537
        %v2540 = vadd.f32 %v2490, %v2538
        %s2541 = sld [smem:[#allocation2 + $0xa8]]
        %v2542 = vstv %s2541
        %v2543 = vmul.f32 %v2542, %v2515
        %v2544 = vmul.f32 %v2542, %v2516
        %v2545 = vadd.f32 %v2495, %v2543
        %v2546 = vadd.f32 %v2496, %v2544
        %s2547 = sld [smem:[#allocation2 + $0xcc]]
        %v2548 = vstv %s2547
        %v2549 = vmul.f32 %v2548, %v2515
        %v2550 = vmul.f32 %v2548, %v2516
        %v2551 = vadd.f32 %v2501, %v2549
        %v2552 = vadd.f32 %v2502, %v2550
        %s2553 = sld [smem:[#allocation2 + $0xf0]]
        %v2554 = vstv %s2553
        %v2555 = vmul.f32 %v2554, %v2515
        %v2556 = vmul.f32 %v2554, %v2516
        %v2557 = vadd.f32 %v2507, %v2555
        %v2558 = vadd.f32 %v2508, %v2556
        %s2559 = sld [smem:[#allocation2 + $0x114]]
        %v2560 = vstv %s2559
        %v2561 = vmul.f32 %v2560, %v2515
        %v2562 = vmul.f32 %v2560, %v2516
        %v2563 = vadd.f32 %v2513, %v2561
        %v2564 = vadd.f32 %v2514, %v2562
        %v2565 = vld [vmem:[%s372 + $0x2] sm:$0xff]
        %v2566 = vld [vmem:[%s372 + $0xa] sm:$0xff]
        %s2567 = sld [smem:[#allocation2 + $0x21]]
        %v2568 = vstv %s2567
        %v2569 = vmul.f32 %v2568, %v2565
        %v2570 = vmul.f32 %v2568, %v2566
        %v2571 = vadd.f32 %v2521, %v2569
        %v2572 = vadd.f32 %v2522, %v2570
        %s2573 = sld [smem:[#allocation2 + $0x45]]
        %v2574 = vstv %s2573
        %v2575 = vmul.f32 %v2574, %v2565
        %v2576 = vmul.f32 %v2574, %v2566
        %v2577 = vadd.f32 %v2527, %v2575
        %v2578 = vadd.f32 %v2528, %v2576
        %s2579 = sld [smem:[#allocation2 + $0x69]]
        %v2580 = vstv %s2579
        %v2581 = vmul.f32 %v2580, %v2565
        %v2582 = vmul.f32 %v2580, %v2566
        %v2583 = vadd.f32 %v2533, %v2581
        %v2584 = vadd.f32 %v2534, %v2582
        %s2585 = sld [smem:[#allocation2 + $0x8d]]
        %v2586 = vstv %s2585
        %v2587 = vmul.f32 %v2586, %v2565
        %v2588 = vmul.f32 %v2586, %v2566
        %v2589 = vadd.f32 %v2539, %v2587
        %v2590 = vadd.f32 %v2540, %v2588
        %s2591 = sld [smem:[#allocation2 + $0xb1]]
        %v2592 = vstv %s2591
        %v2593 = vmul.f32 %v2592, %v2565
        %v2594 = vmul.f32 %v2592, %v2566
        %v2595 = vadd.f32 %v2545, %v2593
        %v2596 = vadd.f32 %v2546, %v2594
        %s2597 = sld [smem:[#allocation2 + $0xd5]]
        %v2598 = vstv %s2597
        %v2599 = vmul.f32 %v2598, %v2565
        %v2600 = vmul.f32 %v2598, %v2566
        %v2601 = vadd.f32 %v2551, %v2599
        %v2602 = vadd.f32 %v2552, %v2600
        %s2603 = sld [smem:[#allocation2 + $0xf9]]
        %v2604 = vstv %s2603
        %v2605 = vmul.f32 %v2604, %v2565
        %v2606 = vmul.f32 %v2604, %v2566
        %v2607 = vadd.f32 %v2557, %v2605
        %v2608 = vadd.f32 %v2558, %v2606
        %s2609 = sld [smem:[#allocation2 + $0x11d]]
        %v2610 = vstv %s2609
        %v2611 = vmul.f32 %v2610, %v2565
        %v2612 = vmul.f32 %v2610, %v2566
        %v2613 = vadd.f32 %v2563, %v2611
        %v2614 = vadd.f32 %v2564, %v2612
        %s2615 = sld [smem:[#allocation2 + $0x7]]
        %v2616 = vstv %s2615
        %v2617 = vmul.f32 %v2616, %v2415
        %v2618 = vmul.f32 %v2616, %v2416
        %2621 = vrot.lane.b32.xlu0 %v2617, 127
        %v2622 = vpop.permute.xlu0 %2621
        %2623 = vrot.lane.b32.xlu0 %v2618, 127
        %v2624 = vpop.permute.xlu0 %2623
        %v2627 = vadd.f32 %v2571, %v2622
        %v2628 = vadd.f32 %v2572, %v2624
        %s2629 = sld [smem:[#allocation2 + $0x2b]]
        %v2630 = vstv %s2629
        %v2631 = vmul.f32 %v2630, %v2415
        %v2632 = vmul.f32 %v2630, %v2416
        %2635 = vrot.lane.b32.xlu0 %v2631, 127
        %v2636 = vpop.permute.xlu0 %2635
        %2637 = vrot.lane.b32.xlu0 %v2632, 127
        %v2638 = vpop.permute.xlu0 %2637
        %v2641 = vadd.f32 %v2577, %v2636
        %v2642 = vadd.f32 %v2578, %v2638
        %s2643 = sld [smem:[#allocation2 + $0x4f]]
        %v2644 = vstv %s2643
        %v2645 = vmul.f32 %v2644, %v2415
        %v2646 = vmul.f32 %v2644, %v2416
        %2649 = vrot.lane.b32.xlu0 %v2645, 127
        %v2650 = vpop.permute.xlu0 %2649
        %2651 = vrot.lane.b32.xlu0 %v2646, 127
        %v2652 = vpop.permute.xlu0 %2651
        %v2655 = vadd.f32 %v2583, %v2650
        %v2656 = vadd.f32 %v2584, %v2652
        %s2657 = sld [smem:[#allocation2 + $0x73]]
        %v2658 = vstv %s2657
        %v2659 = vmul.f32 %v2658, %v2415
        %v2660 = vmul.f32 %v2658, %v2416
        %2663 = vrot.lane.b32.xlu0 %v2659, 127
        %v2664 = vpop.permute.xlu0 %2663
        %2665 = vrot.lane.b32.xlu0 %v2660, 127
        %v2666 = vpop.permute.xlu0 %2665
        %v2669 = vadd.f32 %v2589, %v2664
        %v2670 = vadd.f32 %v2590, %v2666
        %s2671 = sld [smem:[#allocation2 + $0x97]]
        %v2672 = vstv %s2671
        %v2673 = vmul.f32 %v2672, %v2415
        %v2674 = vmul.f32 %v2672, %v2416
        %2677 = vrot.lane.b32.xlu0 %v2673, 127
        %v2678 = vpop.permute.xlu0 %2677
        %2679 = vrot.lane.b32.xlu0 %v2674, 127
        %v2680 = vpop.permute.xlu0 %2679
        %v2683 = vadd.f32 %v2595, %v2678
        %v2684 = vadd.f32 %v2596, %v2680
        %s2685 = sld [smem:[#allocation2 + $0xbb]]
        %v2686 = vstv %s2685
        %v2687 = vmul.f32 %v2686, %v2415
        %v2688 = vmul.f32 %v2686, %v2416
        %2691 = vrot.lane.b32.xlu0 %v2687, 127
        %v2692 = vpop.permute.xlu0 %2691
        %2693 = vrot.lane.b32.xlu0 %v2688, 127
        %v2694 = vpop.permute.xlu0 %2693
        %v2697 = vadd.f32 %v2601, %v2692
        %v2698 = vadd.f32 %v2602, %v2694
        %s2699 = sld [smem:[#allocation2 + $0xdf]]
        %v2700 = vstv %s2699
        %v2701 = vmul.f32 %v2700, %v2415
        %v2702 = vmul.f32 %v2700, %v2416
        %2705 = vrot.lane.b32.xlu0 %v2701, 127
        %v2706 = vpop.permute.xlu0 %2705
        %2707 = vrot.lane.b32.xlu0 %v2702, 127
        %v2708 = vpop.permute.xlu0 %2707
        %v2711 = vadd.f32 %v2607, %v2706
        %v2712 = vadd.f32 %v2608, %v2708
        %s2713 = sld [smem:[#allocation2 + $0x103]]
        %v2714 = vstv %s2713
        %v2715 = vmul.f32 %v2714, %v2415
        %v2716 = vmul.f32 %v2714, %v2416
        %2719 = vrot.lane.b32.xlu0 %v2715, 127
        %v2720 = vpop.permute.xlu0 %2719
        %2721 = vrot.lane.b32.xlu0 %v2716, 127
        %v2722 = vpop.permute.xlu0 %2721
        %v2725 = vadd.f32 %v2613, %v2720
        %v2726 = vadd.f32 %v2614, %v2722
        %s2727 = sld [smem:[#allocation2 + $0x10]]
        %v2728 = vstv %s2727
        %v2729 = vmul.f32 %v2728, %v2465
        %v2730 = vmul.f32 %v2728, %v2466
        %2733 = vrot.lane.b32.xlu0 %v2729, 127
        %v2734 = vpop.permute.xlu0 %2733
        %2735 = vrot.lane.b32.xlu0 %v2730, 127
        %v2736 = vpop.permute.xlu0 %2735
        %v2739 = vadd.f32 %v2627, %v2734
        %v2740 = vadd.f32 %v2628, %v2736
        %s2741 = sld [smem:[#allocation2 + $0x34]]
        %v2742 = vstv %s2741
        %v2743 = vmul.f32 %v2742, %v2465
        %v2744 = vmul.f32 %v2742, %v2466
        %2747 = vrot.lane.b32.xlu0 %v2743, 127
        %v2748 = vpop.permute.xlu0 %2747
        %2749 = vrot.lane.b32.xlu0 %v2744, 127
        %v2750 = vpop.permute.xlu0 %2749
        %v2753 = vadd.f32 %v2641, %v2748
        %v2754 = vadd.f32 %v2642, %v2750
        %s2755 = sld [smem:[#allocation2 + $0x58]]
        %v2756 = vstv %s2755
        %v2757 = vmul.f32 %v2756, %v2465
        %v2758 = vmul.f32 %v2756, %v2466
        %2761 = vrot.lane.b32.xlu0 %v2757, 127
        %v2762 = vpop.permute.xlu0 %2761
        %2763 = vrot.lane.b32.xlu0 %v2758, 127
        %v2764 = vpop.permute.xlu0 %2763
        %v2767 = vadd.f32 %v2655, %v2762
        %v2768 = vadd.f32 %v2656, %v2764
        %s2769 = sld [smem:[#allocation2 + $0x7c]]
        %v2770 = vstv %s2769
        %v2771 = vmul.f32 %v2770, %v2465
        %v2772 = vmul.f32 %v2770, %v2466
        %2775 = vrot.lane.b32.xlu0 %v2771, 127
        %v2776 = vpop.permute.xlu0 %2775
        %2777 = vrot.lane.b32.xlu0 %v2772, 127
        %v2778 = vpop.permute.xlu0 %2777
        %v2781 = vadd.f32 %v2669, %v2776
        %v2782 = vadd.f32 %v2670, %v2778
        %s2783 = sld [smem:[#allocation2 + $0xa0]]
        %v2784 = vstv %s2783
        %v2785 = vmul.f32 %v2784, %v2465
        %v2786 = vmul.f32 %v2784, %v2466
        %2789 = vrot.lane.b32.xlu0 %v2785, 127
        %v2790 = vpop.permute.xlu0 %2789
        %2791 = vrot.lane.b32.xlu0 %v2786, 127
        %v2792 = vpop.permute.xlu0 %2791
        %v2795 = vadd.f32 %v2683, %v2790
        %v2796 = vadd.f32 %v2684, %v2792
        %s2797 = sld [smem:[#allocation2 + $0xc4]]
        %v2798 = vstv %s2797
        %v2799 = vmul.f32 %v2798, %v2465
        %v2800 = vmul.f32 %v2798, %v2466
        %2803 = vrot.lane.b32.xlu0 %v2799, 127
        %v2804 = vpop.permute.xlu0 %2803
        %2805 = vrot.lane.b32.xlu0 %v2800, 127
        %v2806 = vpop.permute.xlu0 %2805
        %v2809 = vadd.f32 %v2697, %v2804
        %v2810 = vadd.f32 %v2698, %v2806
        %s2811 = sld [smem:[#allocation2 + $0xe8]]
        %v2812 = vstv %s2811
        %v2813 = vmul.f32 %v2812, %v2465
        %v2814 = vmul.f32 %v2812, %v2466
        %2817 = vrot.lane.b32.xlu0 %v2813, 127
        %v2818 = vpop.permute.xlu0 %2817
        %2819 = vrot.lane.b32.xlu0 %v2814, 127
        %v2820 = vpop.permute.xlu0 %2819
        %v2823 = vadd.f32 %v2711, %v2818
        %v2824 = vadd.f32 %v2712, %v2820
        %s2825 = sld [smem:[#allocation2 + $0x10c]]
        %v2826 = vstv %s2825
        %v2827 = vmul.f32 %v2826, %v2465
        %v2828 = vmul.f32 %v2826, %v2466
        %2831 = vrot.lane.b32.xlu0 %v2827, 127
        %v2832 = vpop.permute.xlu0 %2831
        %2833 = vrot.lane.b32.xlu0 %v2828, 127
        %v2834 = vpop.permute.xlu0 %2833
        %v2837 = vadd.f32 %v2725, %v2832
        %v2838 = vadd.f32 %v2726, %v2834
        %s2839 = sld [smem:[#allocation2 + $0x19]]
        %v2840 = vstv %s2839
        %v2841 = vmul.f32 %v2840, %v2515
        %v2842 = vmul.f32 %v2840, %v2516
        %2845 = vrot.lane.b32.xlu0 %v2841, 127
        %v2846 = vpop.permute.xlu0 %2845
        %2847 = vrot.lane.b32.xlu0 %v2842, 127
        %v2848 = vpop.permute.xlu0 %2847
        %v2851 = vadd.f32 %v2739, %v2846
        %v2852 = vadd.f32 %v2740, %v2848
        %s2853 = sld [smem:[#allocation2 + $0x3d]]
        %v2854 = vstv %s2853
        %v2855 = vmul.f32 %v2854, %v2515
        %v2856 = vmul.f32 %v2854, %v2516
        %2859 = vrot.lane.b32.xlu0 %v2855, 127
        %v2860 = vpop.permute.xlu0 %2859
        %2861 = vrot.lane.b32.xlu0 %v2856, 127
        %v2862 = vpop.permute.xlu0 %2861
        %v2865 = vadd.f32 %v2753, %v2860
        %v2866 = vadd.f32 %v2754, %v2862
        %s2867 = sld [smem:[#allocation2 + $0x61]]
        %v2868 = vstv %s2867
        %v2869 = vmul.f32 %v2868, %v2515
        %v2870 = vmul.f32 %v2868, %v2516
        %2873 = vrot.lane.b32.xlu0 %v2869, 127
        %v2874 = vpop.permute.xlu0 %2873
        %2875 = vrot.lane.b32.xlu0 %v2870, 127
        %v2876 = vpop.permute.xlu0 %2875
        %v2879 = vadd.f32 %v2767, %v2874
        %v2880 = vadd.f32 %v2768, %v2876
        %s2881 = sld [smem:[#allocation2 + $0x85]]
        %v2882 = vstv %s2881
        %v2883 = vmul.f32 %v2882, %v2515
        %v2884 = vmul.f32 %v2882, %v2516
        %2887 = vrot.lane.b32.xlu0 %v2883, 127
        %v2888 = vpop.permute.xlu0 %2887
        %2889 = vrot.lane.b32.xlu0 %v2884, 127
        %v2890 = vpop.permute.xlu0 %2889
        %v2893 = vadd.f32 %v2781, %v2888
        %v2894 = vadd.f32 %v2782, %v2890
        %s2895 = sld [smem:[#allocation2 + $0xa9]]
        %v2896 = vstv %s2895
        %v2897 = vmul.f32 %v2896, %v2515
        %v2898 = vmul.f32 %v2896, %v2516
        %2901 = vrot.lane.b32.xlu0 %v2897, 127
        %v2902 = vpop.permute.xlu0 %2901
        %2903 = vrot.lane.b32.xlu0 %v2898, 127
        %v2904 = vpop.permute.xlu0 %2903
        %v2907 = vadd.f32 %v2795, %v2902
        %v2908 = vadd.f32 %v2796, %v2904
        %s2909 = sld [smem:[#allocation2 + $0xcd]]
        %v2910 = vstv %s2909
        %v2911 = vmul.f32 %v2910, %v2515
        %v2912 = vmul.f32 %v2910, %v2516
        %2915 = vrot.lane.b32.xlu0 %v2911, 127
        %v2916 = vpop.permute.xlu0 %2915
        %2917 = vrot.lane.b32.xlu0 %v2912, 127
        %v2918 = vpop.permute.xlu0 %2917
        %v2921 = vadd.f32 %v2809, %v2916
        %v2922 = vadd.f32 %v2810, %v2918
        %s2923 = sld [smem:[#allocation2 + $0xf1]]
        %v2924 = vstv %s2923
        %v2925 = vmul.f32 %v2924, %v2515
        %v2926 = vmul.f32 %v2924, %v2516
        %2929 = vrot.lane.b32.xlu0 %v2925, 127
        %v2930 = vpop.permute.xlu0 %2929
        %2931 = vrot.lane.b32.xlu0 %v2926, 127
        %v2932 = vpop.permute.xlu0 %2931
        %v2935 = vadd.f32 %v2823, %v2930
        %v2936 = vadd.f32 %v2824, %v2932
        %s2937 = sld [smem:[#allocation2 + $0x115]]
        %v2938 = vstv %s2937
        %v2939 = vmul.f32 %v2938, %v2515
        %v2940 = vmul.f32 %v2938, %v2516
        %2943 = vrot.lane.b32.xlu0 %v2939, 127
        %v2944 = vpop.permute.xlu0 %2943
        %2945 = vrot.lane.b32.xlu0 %v2940, 127
        %v2946 = vpop.permute.xlu0 %2945
        %v2949 = vadd.f32 %v2837, %v2944
        %v2950 = vadd.f32 %v2838, %v2946
        %s2951 = sld [smem:[#allocation2 + $0x22]]
        %v2952 = vstv %s2951
        %v2953 = vmul.f32 %v2952, %v2565
        %v2954 = vmul.f32 %v2952, %v2566
        %2957 = vrot.lane.b32.xlu0 %v2953, 127
        %v2958 = vpop.permute.xlu0 %2957
        %2959 = vrot.lane.b32.xlu0 %v2954, 127
        %v2960 = vpop.permute.xlu0 %2959
        %v2963 = vadd.f32 %v2851, %v2958
        %v2964 = vadd.f32 %v2852, %v2960
        %s2965 = sld [smem:[#allocation2 + $0x46]]
        %v2966 = vstv %s2965
        %v2967 = vmul.f32 %v2966, %v2565
        %v2968 = vmul.f32 %v2966, %v2566
        %2971 = vrot.lane.b32.xlu0 %v2967, 127
        %v2972 = vpop.permute.xlu0 %2971
        %2973 = vrot.lane.b32.xlu0 %v2968, 127
        %v2974 = vpop.permute.xlu0 %2973
        %v2977 = vadd.f32 %v2865, %v2972
        %v2978 = vadd.f32 %v2866, %v2974
        %s2979 = sld [smem:[#allocation2 + $0x6a]]
        %v2980 = vstv %s2979
        %v2981 = vmul.f32 %v2980, %v2565
        %v2982 = vmul.f32 %v2980, %v2566
        %2985 = vrot.lane.b32.xlu0 %v2981, 127
        %v2986 = vpop.permute.xlu0 %2985
        %2987 = vrot.lane.b32.xlu0 %v2982, 127
        %v2988 = vpop.permute.xlu0 %2987
        %v2991 = vadd.f32 %v2879, %v2986
        %v2992 = vadd.f32 %v2880, %v2988
        %s2993 = sld [smem:[#allocation2 + $0x8e]]
        %v2994 = vstv %s2993
        %v2995 = vmul.f32 %v2994, %v2565
        %v2996 = vmul.f32 %v2994, %v2566
        %2999 = vrot.lane.b32.xlu0 %v2995, 127
        %v3000 = vpop.permute.xlu0 %2999
        %3001 = vrot.lane.b32.xlu0 %v2996, 127
        %v3002 = vpop.permute.xlu0 %3001
        %v3005 = vadd.f32 %v2893, %v3000
        %v3006 = vadd.f32 %v2894, %v3002
        %s3007 = sld [smem:[#allocation2 + $0xb2]]
        %v3008 = vstv %s3007
        %v3009 = vmul.f32 %v3008, %v2565
        %v3010 = vmul.f32 %v3008, %v2566
        %3013 = vrot.lane.b32.xlu0 %v3009, 127
        %v3014 = vpop.permute.xlu0 %3013
        %3015 = vrot.lane.b32.xlu0 %v3010, 127
        %v3016 = vpop.permute.xlu0 %3015
        %v3019 = vadd.f32 %v2907, %v3014
        %v3020 = vadd.f32 %v2908, %v3016
        %s3021 = sld [smem:[#allocation2 + $0xd6]]
        %v3022 = vstv %s3021
        %v3023 = vmul.f32 %v3022, %v2565
        %v3024 = vmul.f32 %v3022, %v2566
        %3027 = vrot.lane.b32.xlu0 %v3023, 127
        %v3028 = vpop.permute.xlu0 %3027
        %3029 = vrot.lane.b32.xlu0 %v3024, 127
        %v3030 = vpop.permute.xlu0 %3029
        %v3033 = vadd.f32 %v2921, %v3028
        %v3034 = vadd.f32 %v2922, %v3030
        %s3035 = sld [smem:[#allocation2 + $0xfa]]
        %v3036 = vstv %s3035
        %v3037 = vmul.f32 %v3036, %v2565
        %v3038 = vmul.f32 %v3036, %v2566
        %3041 = vrot.lane.b32.xlu0 %v3037, 127
        %v3042 = vpop.permute.xlu0 %3041
        %3043 = vrot.lane.b32.xlu0 %v3038, 127
        %v3044 = vpop.permute.xlu0 %3043
        %v3047 = vadd.f32 %v2935, %v3042
        %v3048 = vadd.f32 %v2936, %v3044
        %s3049 = sld [smem:[#allocation2 + $0x11e]]
        %v3050 = vstv %s3049
        %v3051 = vmul.f32 %v3050, %v2565
        %v3052 = vmul.f32 %v3050, %v2566
        %3055 = vrot.lane.b32.xlu0 %v3051, 127
        %v3056 = vpop.permute.xlu0 %3055
        %3057 = vrot.lane.b32.xlu0 %v3052, 127
        %v3058 = vpop.permute.xlu0 %3057
        %v3061 = vadd.f32 %v2949, %v3056
        %v3062 = vadd.f32 %v2950, %v3058
        %s3063 = sld [smem:[#allocation2 + $0x8]]
        %v3064 = vstv %s3063
        %v3065 = vmul.f32 %v3064, %v2415
        %v3066 = vmul.f32 %v3064, %v2416
        %3069 = vrot.lane.b32.xlu0 %v3065, 126
        %v3070 = vpop.permute.xlu0 %3069
        %3071 = vrot.lane.b32.xlu0 %v3066, 126
        %v3072 = vpop.permute.xlu0 %3071
        %v3075 = vadd.f32 %v2963, %v3070
        %v3076 = vadd.f32 %v2964, %v3072
        %s3077 = sld [smem:[#allocation2 + $0x2c]]
        %v3078 = vstv %s3077
        %v3079 = vmul.f32 %v3078, %v2415
        %v3080 = vmul.f32 %v3078, %v2416
        %3083 = vrot.lane.b32.xlu0 %v3079, 126
        %v3084 = vpop.permute.xlu0 %3083
        %3085 = vrot.lane.b32.xlu0 %v3080, 126
        %v3086 = vpop.permute.xlu0 %3085
        %v3089 = vadd.f32 %v2977, %v3084
        %v3090 = vadd.f32 %v2978, %v3086
        %s3091 = sld [smem:[#allocation2 + $0x50]]
        %v3092 = vstv %s3091
        %v3093 = vmul.f32 %v3092, %v2415
        %v3094 = vmul.f32 %v3092, %v2416
        %3097 = vrot.lane.b32.xlu0 %v3093, 126
        %v3098 = vpop.permute.xlu0 %3097
        %3099 = vrot.lane.b32.xlu0 %v3094, 126
        %v3100 = vpop.permute.xlu0 %3099
        %v3103 = vadd.f32 %v2991, %v3098
        %v3104 = vadd.f32 %v2992, %v3100
        %s3105 = sld [smem:[#allocation2 + $0x74]]
        %v3106 = vstv %s3105
        %v3107 = vmul.f32 %v3106, %v2415
        %v3108 = vmul.f32 %v3106, %v2416
        %3111 = vrot.lane.b32.xlu0 %v3107, 126
        %v3112 = vpop.permute.xlu0 %3111
        %3113 = vrot.lane.b32.xlu0 %v3108, 126
        %v3114 = vpop.permute.xlu0 %3113
        %v3117 = vadd.f32 %v3005, %v3112
        %v3118 = vadd.f32 %v3006, %v3114
        %s3119 = sld [smem:[#allocation2 + $0x98]]
        %v3120 = vstv %s3119
        %v3121 = vmul.f32 %v3120, %v2415
        %v3122 = vmul.f32 %v3120, %v2416
        %3125 = vrot.lane.b32.xlu0 %v3121, 126
        %v3126 = vpop.permute.xlu0 %3125
        %3127 = vrot.lane.b32.xlu0 %v3122, 126
        %v3128 = vpop.permute.xlu0 %3127
        %v3131 = vadd.f32 %v3019, %v3126
        %v3132 = vadd.f32 %v3020, %v3128
        %s3133 = sld [smem:[#allocation2 + $0xbc]]
        %v3134 = vstv %s3133
        %v3135 = vmul.f32 %v3134, %v2415
        %v3136 = vmul.f32 %v3134, %v2416
        %3139 = vrot.lane.b32.xlu0 %v3135, 126
        %v3140 = vpop.permute.xlu0 %3139
        %3141 = vrot.lane.b32.xlu0 %v3136, 126
        %v3142 = vpop.permute.xlu0 %3141
        %v3145 = vadd.f32 %v3033, %v3140
        %v3146 = vadd.f32 %v3034, %v3142
        %s3147 = sld [smem:[#allocation2 + $0xe0]]
        %v3148 = vstv %s3147
        %v3149 = vmul.f32 %v3148, %v2415
        %v3150 = vmul.f32 %v3148, %v2416
        %3153 = vrot.lane.b32.xlu0 %v3149, 126
        %v3154 = vpop.permute.xlu0 %3153
        %3155 = vrot.lane.b32.xlu0 %v3150, 126
        %v3156 = vpop.permute.xlu0 %3155
        %v3159 = vadd.f32 %v3047, %v3154
        %v3160 = vadd.f32 %v3048, %v3156
        %s3161 = sld [smem:[#allocation2 + $0x104]]
        %v3162 = vstv %s3161
        %v3163 = vmul.f32 %v3162, %v2415
        %v3164 = vmul.f32 %v3162, %v2416
        %3167 = vrot.lane.b32.xlu0 %v3163, 126
        %v3168 = vpop.permute.xlu0 %3167
        %3169 = vrot.lane.b32.xlu0 %v3164, 126
        %v3170 = vpop.permute.xlu0 %3169
        %v3173 = vadd.f32 %v3061, %v3168
        %v3174 = vadd.f32 %v3062, %v3170
        %s3175 = sld [smem:[#allocation2 + $0x11]]
        %v3176 = vstv %s3175
        %v3177 = vmul.f32 %v3176, %v2465
        %v3178 = vmul.f32 %v3176, %v2466
        %3181 = vrot.lane.b32.xlu0 %v3177, 126
        %v3182 = vpop.permute.xlu0 %3181
        %3183 = vrot.lane.b32.xlu0 %v3178, 126
        %v3184 = vpop.permute.xlu0 %3183
        %v3187 = vadd.f32 %v3075, %v3182
        %v3188 = vadd.f32 %v3076, %v3184
        %s3189 = sld [smem:[#allocation2 + $0x35]]
        %v3190 = vstv %s3189
        %v3191 = vmul.f32 %v3190, %v2465
        %v3192 = vmul.f32 %v3190, %v2466
        %3195 = vrot.lane.b32.xlu0 %v3191, 126
        %v3196 = vpop.permute.xlu0 %3195
        %3197 = vrot.lane.b32.xlu0 %v3192, 126
        %v3198 = vpop.permute.xlu0 %3197
        %v3201 = vadd.f32 %v3089, %v3196
        %v3202 = vadd.f32 %v3090, %v3198
        %s3203 = sld [smem:[#allocation2 + $0x59]]
        %v3204 = vstv %s3203
        %v3205 = vmul.f32 %v3204, %v2465
        %v3206 = vmul.f32 %v3204, %v2466
        %3209 = vrot.lane.b32.xlu0 %v3205, 126
        %v3210 = vpop.permute.xlu0 %3209
        %3211 = vrot.lane.b32.xlu0 %v3206, 126
        %v3212 = vpop.permute.xlu0 %3211
        %v3215 = vadd.f32 %v3103, %v3210
        %v3216 = vadd.f32 %v3104, %v3212
        %s3217 = sld [smem:[#allocation2 + $0x7d]]
        %v3218 = vstv %s3217
        %v3219 = vmul.f32 %v3218, %v2465
        %v3220 = vmul.f32 %v3218, %v2466
        %3223 = vrot.lane.b32.xlu0 %v3219, 126
        %v3224 = vpop.permute.xlu0 %3223
        %3225 = vrot.lane.b32.xlu0 %v3220, 126
        %v3226 = vpop.permute.xlu0 %3225
        %v3229 = vadd.f32 %v3117, %v3224
        %v3230 = vadd.f32 %v3118, %v3226
        %s3231 = sld [smem:[#allocation2 + $0xa1]]
        %v3232 = vstv %s3231
        %v3233 = vmul.f32 %v3232, %v2465
        %v3234 = vmul.f32 %v3232, %v2466
        %3237 = vrot.lane.b32.xlu0 %v3233, 126
        %v3238 = vpop.permute.xlu0 %3237
        %3239 = vrot.lane.b32.xlu0 %v3234, 126
        %v3240 = vpop.permute.xlu0 %3239
        %v3243 = vadd.f32 %v3131, %v3238
        %v3244 = vadd.f32 %v3132, %v3240
        %s3245 = sld [smem:[#allocation2 + $0xc5]]
        %v3246 = vstv %s3245
        %v3247 = vmul.f32 %v3246, %v2465
        %v3248 = vmul.f32 %v3246, %v2466
        %3251 = vrot.lane.b32.xlu0 %v3247, 126
        %v3252 = vpop.permute.xlu0 %3251
        %3253 = vrot.lane.b32.xlu0 %v3248, 126
        %v3254 = vpop.permute.xlu0 %3253
        %v3257 = vadd.f32 %v3145, %v3252
        %v3258 = vadd.f32 %v3146, %v3254
        %s3259 = sld [smem:[#allocation2 + $0xe9]]
        %v3260 = vstv %s3259
        %v3261 = vmul.f32 %v3260, %v2465
        %v3262 = vmul.f32 %v3260, %v2466
        %3265 = vrot.lane.b32.xlu0 %v3261, 126
        %v3266 = vpop.permute.xlu0 %3265
        %3267 = vrot.lane.b32.xlu0 %v3262, 126
        %v3268 = vpop.permute.xlu0 %3267
        %v3271 = vadd.f32 %v3159, %v3266
        %v3272 = vadd.f32 %v3160, %v3268
        %s3273 = sld [smem:[#allocation2 + $0x10d]]
        %v3274 = vstv %s3273
        %v3275 = vmul.f32 %v3274, %v2465
        %v3276 = vmul.f32 %v3274, %v2466
        %3279 = vrot.lane.b32.xlu0 %v3275, 126
        %v3280 = vpop.permute.xlu0 %3279
        %3281 = vrot.lane.b32.xlu0 %v3276, 126
        %v3282 = vpop.permute.xlu0 %3281
        %v3285 = vadd.f32 %v3173, %v3280
        %v3286 = vadd.f32 %v3174, %v3282
        %s3287 = sld [smem:[#allocation2 + $0x1a]]
        %v3288 = vstv %s3287
        %v3289 = vmul.f32 %v3288, %v2515
        %v3290 = vmul.f32 %v3288, %v2516
        %3293 = vrot.lane.b32.xlu0 %v3289, 126
        %v3294 = vpop.permute.xlu0 %3293
        %3295 = vrot.lane.b32.xlu0 %v3290, 126
        %v3296 = vpop.permute.xlu0 %3295
        %v3299 = vadd.f32 %v3187, %v3294
        %v3300 = vadd.f32 %v3188, %v3296
        %s3301 = sld [smem:[#allocation2 + $0x3e]]
        %v3302 = vstv %s3301
        %v3303 = vmul.f32 %v3302, %v2515
        %v3304 = vmul.f32 %v3302, %v2516
        %3307 = vrot.lane.b32.xlu0 %v3303, 126
        %v3308 = vpop.permute.xlu0 %3307
        %3309 = vrot.lane.b32.xlu0 %v3304, 126
        %v3310 = vpop.permute.xlu0 %3309
        %v3313 = vadd.f32 %v3201, %v3308
        %v3314 = vadd.f32 %v3202, %v3310
        %s3315 = sld [smem:[#allocation2 + $0x62]]
        %v3316 = vstv %s3315
        %v3317 = vmul.f32 %v3316, %v2515
        %v3318 = vmul.f32 %v3316, %v2516
        %3321 = vrot.lane.b32.xlu0 %v3317, 126
        %v3322 = vpop.permute.xlu0 %3321
        %3323 = vrot.lane.b32.xlu0 %v3318, 126
        %v3324 = vpop.permute.xlu0 %3323
        %v3327 = vadd.f32 %v3215, %v3322
        %v3328 = vadd.f32 %v3216, %v3324
        %s3329 = sld [smem:[#allocation2 + $0x86]]
        %v3330 = vstv %s3329
        %v3331 = vmul.f32 %v3330, %v2515
        %v3332 = vmul.f32 %v3330, %v2516
        %3335 = vrot.lane.b32.xlu0 %v3331, 126
        %v3336 = vpop.permute.xlu0 %3335
        %3337 = vrot.lane.b32.xlu0 %v3332, 126
        %v3338 = vpop.permute.xlu0 %3337
        %v3341 = vadd.f32 %v3229, %v3336
        %v3342 = vadd.f32 %v3230, %v3338
        %s3343 = sld [smem:[#allocation2 + $0xaa]]
        %v3344 = vstv %s3343
        %v3345 = vmul.f32 %v3344, %v2515
        %v3346 = vmul.f32 %v3344, %v2516
        %3349 = vrot.lane.b32.xlu0 %v3345, 126
        %v3350 = vpop.permute.xlu0 %3349
        %3351 = vrot.lane.b32.xlu0 %v3346, 126
        %v3352 = vpop.permute.xlu0 %3351
        %v3355 = vadd.f32 %v3243, %v3350
        %v3356 = vadd.f32 %v3244, %v3352
        %s3357 = sld [smem:[#allocation2 + $0xce]]
        %v3358 = vstv %s3357
        %v3359 = vmul.f32 %v3358, %v2515
        %v3360 = vmul.f32 %v3358, %v2516
        %3363 = vrot.lane.b32.xlu0 %v3359, 126
        %v3364 = vpop.permute.xlu0 %3363
        %3365 = vrot.lane.b32.xlu0 %v3360, 126
        %v3366 = vpop.permute.xlu0 %3365
        %v3369 = vadd.f32 %v3257, %v3364
        %v3370 = vadd.f32 %v3258, %v3366
        %s3371 = sld [smem:[#allocation2 + $0xf2]]
        %v3372 = vstv %s3371
        %v3373 = vmul.f32 %v3372, %v2515
        %v3374 = vmul.f32 %v3372, %v2516
        %3377 = vrot.lane.b32.xlu0 %v3373, 126
        %v3378 = vpop.permute.xlu0 %3377
        %3379 = vrot.lane.b32.xlu0 %v3374, 126
        %v3380 = vpop.permute.xlu0 %3379
        %v3383 = vadd.f32 %v3271, %v3378
        %v3384 = vadd.f32 %v3272, %v3380
        %s3385 = sld [smem:[#allocation2 + $0x116]]
        %v3386 = vstv %s3385
        %v3387 = vmul.f32 %v3386, %v2515
        %v3388 = vmul.f32 %v3386, %v2516
        %3391 = vrot.lane.b32.xlu0 %v3387, 126
        %v3392 = vpop.permute.xlu0 %3391
        %3393 = vrot.lane.b32.xlu0 %v3388, 126
        %v3394 = vpop.permute.xlu0 %3393
        %v3397 = vadd.f32 %v3285, %v3392
        %v3398 = vadd.f32 %v3286, %v3394
        %s3399 = sld [smem:[#allocation2 + $0x23]]
        %v3400 = vstv %s3399
        %v3401 = vmul.f32 %v3400, %v2565
        %v3402 = vmul.f32 %v3400, %v2566
        %3405 = vrot.lane.b32.xlu0 %v3401, 126
        %v3406 = vpop.permute.xlu0 %3405
        %3407 = vrot.lane.b32.xlu0 %v3402, 126
        %v3408 = vpop.permute.xlu0 %3407
        %v3411 = vadd.f32 %v3299, %v3406
        %v3412 = vadd.f32 %v3300, %v3408
        %s3413 = sld [smem:[#allocation2 + $0x47]]
        %v3414 = vstv %s3413
        %v3415 = vmul.f32 %v3414, %v2565
        %v3416 = vmul.f32 %v3414, %v2566
        %3419 = vrot.lane.b32.xlu0 %v3415, 126
        %v3420 = vpop.permute.xlu0 %3419
        %3421 = vrot.lane.b32.xlu0 %v3416, 126
        %v3422 = vpop.permute.xlu0 %3421
        %v3425 = vadd.f32 %v3313, %v3420
        %v3426 = vadd.f32 %v3314, %v3422
        %s3427 = sld [smem:[#allocation2 + $0x6b]]
        %v3428 = vstv %s3427
        %v3429 = vmul.f32 %v3428, %v2565
        %v3430 = vmul.f32 %v3428, %v2566
        %3433 = vrot.lane.b32.xlu0 %v3429, 126
        %v3434 = vpop.permute.xlu0 %3433
        %3435 = vrot.lane.b32.xlu0 %v3430, 126
        %v3436 = vpop.permute.xlu0 %3435
        %v3439 = vadd.f32 %v3327, %v3434
        %v3440 = vadd.f32 %v3328, %v3436
        %s3441 = sld [smem:[#allocation2 + $0x8f]]
        %v3442 = vstv %s3441
        %v3443 = vmul.f32 %v3442, %v2565
        %v3444 = vmul.f32 %v3442, %v2566
        %3447 = vrot.lane.b32.xlu0 %v3443, 126
        %v3448 = vpop.permute.xlu0 %3447
        %3449 = vrot.lane.b32.xlu0 %v3444, 126
        %v3450 = vpop.permute.xlu0 %3449
        %v3453 = vadd.f32 %v3341, %v3448
        %v3454 = vadd.f32 %v3342, %v3450
        %s3455 = sld [smem:[#allocation2 + $0xb3]]
        %v3456 = vstv %s3455
        %v3457 = vmul.f32 %v3456, %v2565
        %v3458 = vmul.f32 %v3456, %v2566
        %3461 = vrot.lane.b32.xlu0 %v3457, 126
        %v3462 = vpop.permute.xlu0 %3461
        %3463 = vrot.lane.b32.xlu0 %v3458, 126
        %v3464 = vpop.permute.xlu0 %3463
        %v3467 = vadd.f32 %v3355, %v3462
        %v3468 = vadd.f32 %v3356, %v3464
        %s3469 = sld [smem:[#allocation2 + $0xd7]]
        %v3470 = vstv %s3469
        %v3471 = vmul.f32 %v3470, %v2565
        %v3472 = vmul.f32 %v3470, %v2566
        %3475 = vrot.lane.b32.xlu0 %v3471, 126
        %v3476 = vpop.permute.xlu0 %3475
        %3477 = vrot.lane.b32.xlu0 %v3472, 126
        %v3478 = vpop.permute.xlu0 %3477
        %v3481 = vadd.f32 %v3369, %v3476
        %v3482 = vadd.f32 %v3370, %v3478
        %s3483 = sld [smem:[#allocation2 + $0xfb]]
        %v3484 = vstv %s3483
        %v3485 = vmul.f32 %v3484, %v2565
        %v3486 = vmul.f32 %v3484, %v2566
        %3489 = vrot.lane.b32.xlu0 %v3485, 126
        %v3490 = vpop.permute.xlu0 %3489
        %3491 = vrot.lane.b32.xlu0 %v3486, 126
        %v3492 = vpop.permute.xlu0 %3491
        %v3495 = vadd.f32 %v3383, %v3490
        %v3496 = vadd.f32 %v3384, %v3492
        %s3497 = sld [smem:[#allocation2 + $0x11f]]
        %v3498 = vstv %s3497
        %v3499 = vmul.f32 %v3498, %v2565
        %v3500 = vmul.f32 %v3498, %v2566
        %3503 = vrot.lane.b32.xlu0 %v3499, 126
        %v3504 = vpop.permute.xlu0 %3503
        %3505 = vrot.lane.b32.xlu0 %v3500, 126
        %v3506 = vpop.permute.xlu0 %3505
        %v3509 = vadd.f32 %v3397, %v3504
        %v3510 = vadd.f32 %v3398, %v3506
        %vm3511 = vcmask 130048
        %v3512 = vsel %vm3511, %v3411, 0.0
        %v3513 = vsel %vm3511, %v3412, 0.0
        %v3514 = vadd.f32 %v3512, %v3513
        %3515 = vadd.xlane.f32.xlu0 %v3514
        %v3516 = vpop.xlane.xlu0 %3515
        %v3517 = vrot.slane %v3516, 4
        %v3518 = vadd.f32 %v3516, %v3517
        %v3519 = vrot.slane %v3518, 2
        %v3520 = vadd.f32 %v3518, %v3519
        %v3521 = vrot.slane %v3520, 1
        %v3522 = vadd.f32 %v3520, %v3521
        %s3523 = vtos %v3522
        %s3524 = smul.f32 %s3523, 0.00390625
        %v3525 = vstv %s3524
        %v3526 = vsub.f32 %v3411, %v3525
        %v3527 = vsub.f32 %v3412, %v3525
        %v3528 = vmul.f32 %v3526, %v3526
        %v3529 = vmul.f32 %v3527, %v3527
        %v3530 = vsel %vm3511, %v3528, 0.0
        %v3531 = vsel %vm3511, %v3529, 0.0
        %v3532 = vadd.f32 %v3530, %v3531
        %3533 = vadd.xlane.f32.xlu0 %v3532
        %v3534 = vpop.xlane.xlu0 %3533
        %v3535 = vrot.slane %v3534, 4
        %v3536 = vadd.f32 %v3534, %v3535
        %v3537 = vrot.slane %v3536, 2
        %v3538 = vadd.f32 %v3536, %v3537
        %v3539 = vrot.slane %v3538, 1
        %v3540 = vadd.f32 %v3538, %v3539
        %s3541 = vtos %v3540
        %s3542 = smul.f32 %s3541, 0.00390625
        %s3543 = sadd.f32 %s3542, 1e-05
        %v3544 = vstv %s3543
        %v3545 = vrsqrt.pop %v3544
        %s3546 = vtos %v3545
        %v3547 = vstv %s3546
        %v3548 = vmul.f32 %v3526, %v3547
        %v3549 = vmul.f32 %v3527, %v3547
        %3550 = vst.msk [vmem:[%s190] sm:$0xff] %vm3511, %v3548
        %3551 = vst.msk [vmem:[%s190 + $0x8] sm:$0xff] %vm3511, %v3549
        %v3552 = vsel %vm3511, %v3425, 0.0
        %v3553 = vsel %vm3511, %v3426, 0.0
        %v3554 = vadd.f32 %v3552, %v3553
        %3555 = vadd.xlane.f32.xlu0 %v3554
        %v3556 = vpop.xlane.xlu0 %3555
        %v3557 = vrot.slane %v3556, 4
        %v3558 = vadd.f32 %v3556, %v3557
        %v3559 = vrot.slane %v3558, 2
        %v3560 = vadd.f32 %v3558, %v3559
        %v3561 = vrot.slane %v3560, 1
        %v3562 = vadd.f32 %v3560, %v3561
        %s3563 = vtos %v3562
        %s3564 = smul.f32 %s3563, 0.00390625
        %v3565 = vstv %s3564
        %v3566 = vsub.f32 %v3425, %v3565
        %v3567 = vsub.f32 %v3426, %v3565
        %v3568 = vmul.f32 %v3566, %v3566
        %v3569 = vmul.f32 %v3567, %v3567
        %v3570 = vsel %vm3511, %v3568, 0.0
        %v3571 = vsel %vm3511, %v3569, 0.0
        %v3572 = vadd.f32 %v3570, %v3571
        %3573 = vadd.xlane.f32.xlu0 %v3572
        %v3574 = vpop.xlane.xlu0 %3573
        %v3575 = vrot.slane %v3574, 4
        %v3576 = vadd.f32 %v3574, %v3575
        %v3577 = vrot.slane %v3576, 2
        %v3578 = vadd.f32 %v3576, %v3577
        %v3579 = vrot.slane %v3578, 1
        %v3580 = vadd.f32 %v3578, %v3579
        %s3581 = vtos %v3580
        %s3582 = smul.f32 %s3581, 0.00390625
        %s3583 = sadd.f32 %s3582, 1e-05
        %v3584 = vstv %s3583
        %v3585 = vrsqrt.pop %v3584
        %s3586 = vtos %v3585
        %v3587 = vstv %s3586
        %v3588 = vmul.f32 %v3566, %v3587
        %v3589 = vmul.f32 %v3567, %v3587
        %s3590 = scalar_lea.vmem %s190, 16 [#allocation7]
        %3591 = vst.msk [vmem:[%s3590] sm:$0xff] %vm3511, %v3588
        %3592 = vst.msk [vmem:[%s3590 + $0x8] sm:$0xff] %vm3511, %v3589
        %v3593 = vsel %vm3511, %v3439, 0.0
        %v3594 = vsel %vm3511, %v3440, 0.0
        %v3595 = vadd.f32 %v3593, %v3594
        %3596 = vadd.xlane.f32.xlu0 %v3595
        %v3597 = vpop.xlane.xlu0 %3596
        %v3598 = vrot.slane %v3597, 4
        %v3599 = vadd.f32 %v3597, %v3598
        %v3600 = vrot.slane %v3599, 2
        %v3601 = vadd.f32 %v3599, %v3600
        %v3602 = vrot.slane %v3601, 1
        %v3603 = vadd.f32 %v3601, %v3602
        %s3604 = vtos %v3603
        %s3605 = smul.f32 %s3604, 0.00390625
        %v3606 = vstv %s3605
        %v3607 = vsub.f32 %v3439, %v3606
        %v3608 = vsub.f32 %v3440, %v3606
        %v3609 = vmul.f32 %v3607, %v3607
        %v3610 = vmul.f32 %v3608, %v3608
        %v3611 = vsel %vm3511, %v3609, 0.0
        %v3612 = vsel %vm3511, %v3610, 0.0
        %v3613 = vadd.f32 %v3611, %v3612
        %3614 = vadd.xlane.f32.xlu0 %v3613
        %v3615 = vpop.xlane.xlu0 %3614
        %v3616 = vrot.slane %v3615, 4
        %v3617 = vadd.f32 %v3615, %v3616
        %v3618 = vrot.slane %v3617, 2
        %v3619 = vadd.f32 %v3617, %v3618
        %v3620 = vrot.slane %v3619, 1
        %v3621 = vadd.f32 %v3619, %v3620
        %s3622 = vtos %v3621
        %s3623 = smul.f32 %s3622, 0.00390625
        %s3624 = sadd.f32 %s3623, 1e-05
        %v3625 = vstv %s3624
        %v3626 = vrsqrt.pop %v3625
        %s3627 = vtos %v3626
        %v3628 = vstv %s3627
        %v3629 = vmul.f32 %v3607, %v3628
        %v3630 = vmul.f32 %v3608, %v3628
        %s3631 = scalar_lea.vmem %s190, 32 [#allocation7]
        %3632 = vst.msk [vmem:[%s3631] sm:$0xff] %vm3511, %v3629
        %3633 = vst.msk [vmem:[%s3631 + $0x8] sm:$0xff] %vm3511, %v3630
        %v3634 = vsel %vm3511, %v3453, 0.0
        %v3635 = vsel %vm3511, %v3454, 0.0
        %v3636 = vadd.f32 %v3634, %v3635
        %3637 = vadd.xlane.f32.xlu0 %v3636
        %v3638 = vpop.xlane.xlu0 %3637
        %v3639 = vrot.slane %v3638, 4
        %v3640 = vadd.f32 %v3638, %v3639
        %v3641 = vrot.slane %v3640, 2
        %v3642 = vadd.f32 %v3640, %v3641
        %v3643 = vrot.slane %v3642, 1
        %v3644 = vadd.f32 %v3642, %v3643
        %s3645 = vtos %v3644
        %s3646 = smul.f32 %s3645, 0.00390625
        %v3647 = vstv %s3646
        %v3648 = vsub.f32 %v3453, %v3647
        %v3649 = vsub.f32 %v3454, %v3647
        %v3650 = vmul.f32 %v3648, %v3648
        %v3651 = vmul.f32 %v3649, %v3649
        %v3652 = vsel %vm3511, %v3650, 0.0
        %v3653 = vsel %vm3511, %v3651, 0.0
        %v3654 = vadd.f32 %v3652, %v3653
        %3655 = vadd.xlane.f32.xlu0 %v3654
        %v3656 = vpop.xlane.xlu0 %3655
        %v3657 = vrot.slane %v3656, 4
        %v3658 = vadd.f32 %v3656, %v3657
        %v3659 = vrot.slane %v3658, 2
        %v3660 = vadd.f32 %v3658, %v3659
        %v3661 = vrot.slane %v3660, 1
        %v3662 = vadd.f32 %v3660, %v3661
        %s3663 = vtos %v3662
        %s3664 = smul.f32 %s3663, 0.00390625
        %s3665 = sadd.f32 %s3664, 1e-05
        %v3666 = vstv %s3665
        %v3667 = vrsqrt.pop %v3666
        %s3668 = vtos %v3667
        %v3669 = vstv %s3668
        %v3670 = vmul.f32 %v3648, %v3669
        %v3671 = vmul.f32 %v3649, %v3669
        %s3672 = scalar_lea.vmem %s190, 48 [#allocation7]
        %3673 = vst.msk [vmem:[%s3672] sm:$0xff] %vm3511, %v3670
        %3674 = vst.msk [vmem:[%s3672 + $0x8] sm:$0xff] %vm3511, %v3671
        %v3675 = vsel %vm3511, %v3467, 0.0
        %v3676 = vsel %vm3511, %v3468, 0.0
        %v3677 = vadd.f32 %v3675, %v3676
        %3678 = vadd.xlane.f32.xlu0 %v3677
        %v3679 = vpop.xlane.xlu0 %3678
        %v3680 = vrot.slane %v3679, 4
        %v3681 = vadd.f32 %v3679, %v3680
        %v3682 = vrot.slane %v3681, 2
        %v3683 = vadd.f32 %v3681, %v3682
        %v3684 = vrot.slane %v3683, 1
        %v3685 = vadd.f32 %v3683, %v3684
        %s3686 = vtos %v3685
        %s3687 = smul.f32 %s3686, 0.00390625
        %v3688 = vstv %s3687
        %v3689 = vsub.f32 %v3467, %v3688
        %v3690 = vsub.f32 %v3468, %v3688
        %v3691 = vmul.f32 %v3689, %v3689
        %v3692 = vmul.f32 %v3690, %v3690
        %v3693 = vsel %vm3511, %v3691, 0.0
        %v3694 = vsel %vm3511, %v3692, 0.0
        %v3695 = vadd.f32 %v3693, %v3694
        %3696 = vadd.xlane.f32.xlu0 %v3695
        %v3697 = vpop.xlane.xlu0 %3696
        %v3698 = vrot.slane %v3697, 4
        %v3699 = vadd.f32 %v3697, %v3698
        %v3700 = vrot.slane %v3699, 2
        %v3701 = vadd.f32 %v3699, %v3700
        %v3702 = vrot.slane %v3701, 1
        %v3703 = vadd.f32 %v3701, %v3702
        %s3704 = vtos %v3703
        %s3705 = smul.f32 %s3704, 0.00390625
        %s3706 = sadd.f32 %s3705, 1e-05
        %v3707 = vstv %s3706
        %v3708 = vrsqrt.pop %v3707
        %s3709 = vtos %v3708
        %v3710 = vstv %s3709
        %v3711 = vmul.f32 %v3689, %v3710
        %v3712 = vmul.f32 %v3690, %v3710
        %s3713 = scalar_lea.vmem %s190, 64 [#allocation7]
        %3714 = vst.msk [vmem:[%s3713] sm:$0xff] %vm3511, %v3711
        %3715 = vst.msk [vmem:[%s3713 + $0x8] sm:$0xff] %vm3511, %v3712
        %v3716 = vsel %vm3511, %v3481, 0.0
        %v3717 = vsel %vm3511, %v3482, 0.0
        %v3718 = vadd.f32 %v3716, %v3717
        %3719 = vadd.xlane.f32.xlu0 %v3718
        %v3720 = vpop.xlane.xlu0 %3719
        %v3721 = vrot.slane %v3720, 4
        %v3722 = vadd.f32 %v3720, %v3721
        %v3723 = vrot.slane %v3722, 2
        %v3724 = vadd.f32 %v3722, %v3723
        %v3725 = vrot.slane %v3724, 1
        %v3726 = vadd.f32 %v3724, %v3725
        %s3727 = vtos %v3726
        %s3728 = smul.f32 %s3727, 0.00390625
        %v3729 = vstv %s3728
        %v3730 = vsub.f32 %v3481, %v3729
        %v3731 = vsub.f32 %v3482, %v3729
        %v3732 = vmul.f32 %v3730, %v3730
        %v3733 = vmul.f32 %v3731, %v3731
        %v3734 = vsel %vm3511, %v3732, 0.0
        %v3735 = vsel %vm3511, %v3733, 0.0
        %v3736 = vadd.f32 %v3734, %v3735
        %3737 = vadd.xlane.f32.xlu0 %v3736
        %v3738 = vpop.xlane.xlu0 %3737
        %v3739 = vrot.slane %v3738, 4
        %v3740 = vadd.f32 %v3738, %v3739
        %v3741 = vrot.slane %v3740, 2
        %v3742 = vadd.f32 %v3740, %v3741
        %v3743 = vrot.slane %v3742, 1
        %v3744 = vadd.f32 %v3742, %v3743
        %s3745 = vtos %v3744
        %s3746 = smul.f32 %s3745, 0.00390625
        %s3747 = sadd.f32 %s3746, 1e-05
        %v3748 = vstv %s3747
        %v3749 = vrsqrt.pop %v3748
        %s3750 = vtos %v3749
        %v3751 = vstv %s3750
        %v3752 = vmul.f32 %v3730, %v3751
        %v3753 = vmul.f32 %v3731, %v3751
        %s3754 = scalar_lea.vmem %s190, 80 [#allocation7]
        %3755 = vst.msk [vmem:[%s3754] sm:$0xff] %vm3511, %v3752
        %3756 = vst.msk [vmem:[%s3754 + $0x8] sm:$0xff] %vm3511, %v3753
        %v3757 = vsel %vm3511, %v3495, 0.0
        %v3758 = vsel %vm3511, %v3496, 0.0
        %v3759 = vadd.f32 %v3757, %v3758
        %3760 = vadd.xlane.f32.xlu0 %v3759
        %v3761 = vpop.xlane.xlu0 %3760
        %v3762 = vrot.slane %v3761, 4
        %v3763 = vadd.f32 %v3761, %v3762
        %v3764 = vrot.slane %v3763, 2
        %v3765 = vadd.f32 %v3763, %v3764
        %v3766 = vrot.slane %v3765, 1
        %v3767 = vadd.f32 %v3765, %v3766
        %s3768 = vtos %v3767
        %s3769 = smul.f32 %s3768, 0.00390625
        %v3770 = vstv %s3769
        %v3771 = vsub.f32 %v3495, %v3770
        %v3772 = vsub.f32 %v3496, %v3770
        %v3773 = vmul.f32 %v3771, %v3771
        %v3774 = vmul.f32 %v3772, %v3772
        %v3775 = vsel %vm3511, %v3773, 0.0
        %v3776 = vsel %vm3511, %v3774, 0.0
        %v3777 = vadd.f32 %v3775, %v3776
        %3778 = vadd.xlane.f32.xlu0 %v3777
        %v3779 = vpop.xlane.xlu0 %3778
        %v3780 = vrot.slane %v3779, 4
        %v3781 = vadd.f32 %v3779, %v3780
        %v3782 = vrot.slane %v3781, 2
        %v3783 = vadd.f32 %v3781, %v3782
        %v3784 = vrot.slane %v3783, 1
        %v3785 = vadd.f32 %v3783, %v3784
        %s3786 = vtos %v3785
        %s3787 = smul.f32 %s3786, 0.00390625
        %s3788 = sadd.f32 %s3787, 1e-05
        %v3789 = vstv %s3788
        %v3790 = vrsqrt.pop %v3789
        %s3791 = vtos %v3790
        %v3792 = vstv %s3791
        %v3793 = vmul.f32 %v3771, %v3792
        %v3794 = vmul.f32 %v3772, %v3792
        %s3795 = scalar_lea.vmem %s190, 96 [#allocation7]
        %3796 = vst.msk [vmem:[%s3795] sm:$0xff] %vm3511, %v3793
        %3797 = vst.msk [vmem:[%s3795 + $0x8] sm:$0xff] %vm3511, %v3794
        %v3798 = vsel %vm3511, %v3509, 0.0
        %v3799 = vsel %vm3511, %v3510, 0.0
        %v3800 = vadd.f32 %v3798, %v3799
        %3801 = vadd.xlane.f32.xlu0 %v3800
        %v3802 = vpop.xlane.xlu0 %3801
        %v3803 = vrot.slane %v3802, 4
        %v3804 = vadd.f32 %v3802, %v3803
        %v3805 = vrot.slane %v3804, 2
        %v3806 = vadd.f32 %v3804, %v3805
        %v3807 = vrot.slane %v3806, 1
        %v3808 = vadd.f32 %v3806, %v3807
        %s3809 = vtos %v3808
        %s3810 = smul.f32 %s3809, 0.00390625
        %v3811 = vstv %s3810
        %v3812 = vsub.f32 %v3509, %v3811
        %v3813 = vsub.f32 %v3510, %v3811
        %v3814 = vmul.f32 %v3812, %v3812
        %v3815 = vmul.f32 %v3813, %v3813
        %v3816 = vsel %vm3511, %v3814, 0.0
        %v3817 = vsel %vm3511, %v3815, 0.0
        %v3818 = vadd.f32 %v3816, %v3817
        %3819 = vadd.xlane.f32.xlu0 %v3818
        %v3820 = vpop.xlane.xlu0 %3819
        %v3821 = vrot.slane %v3820, 4
        %v3822 = vadd.f32 %v3820, %v3821
        %v3823 = vrot.slane %v3822, 2
        %v3824 = vadd.f32 %v3822, %v3823
        %v3825 = vrot.slane %v3824, 1
        %v3826 = vadd.f32 %v3824, %v3825
        %s3827 = vtos %v3826
        %s3828 = smul.f32 %s3827, 0.00390625
        %s3829 = sadd.f32 %s3828, 1e-05
        %v3830 = vstv %s3829
        %v3831 = vrsqrt.pop %v3830
        %s3832 = vtos %v3831
        %v3833 = vstv %s3832
        %v3834 = vmul.f32 %v3812, %v3833
        %v3835 = vmul.f32 %v3813, %v3833
        %s3836 = scalar_lea.vmem %s190, 112 [#allocation7]
        %3837 = vst.msk [vmem:[%s3836] sm:$0xff] %vm3511, %v3834
        %3838 = vst.msk [vmem:[%s3836 + $0x8] sm:$0xff] %vm3511, %v3835
        %s3839 = sand.u32 %s95, 1
        %s3840 = scalar_lea.sflag [#allocation3], %s3839
        %s3841 = sand.u32 %s95, 1
        %s3842 = smul.addr %s3841, 128
        %s3843 = scalar_lea.vmem [#allocation7], %s3842
        // Predicated region
        $region41: #{tpu_custom_call.1} parent=31 // pred_check
          %p3844 = pneg %p105
        $region42: #{tpu_custom_call.1} parent=31 // pred_check_branch
          %3846 = sbr.rel (%p3844) target = $region44
        $region43: #{tpu_custom_call.1} parent=31 // pred_region
          %s3848 = ssub.s32 2048, 2048
          %3849 = vsyncadd %s3840, %s3848
          %s3850 = smul.addr %s19, 16
          %s3851 = smul.addr %s3850, 128
          %s3852 = scalar_lea.hbm %s3, %s3851
          %s3853 = sshll.u32 %s3843, 4
          %s3854 = int_to_ptr.vmem [resolvable:$true] %s3853
          %3859 = dma.vmem_to_hbm [thread:$0]  %s3854, 2048, %s3852, %s3840, 128, 128, 8
        $region44: #{tpu_custom_call.1} parent=31 // pred_fallthru
          _
      $region32: #{tpu_custom_call.1} parent=5 // pred_fallthru
        _
      %p3860 = scmp.le.s32.totalorder 2, %s14
      // Predicated region
      $region45: #{tpu_custom_call.1} parent=5 // pred_check
        %p3861 = pneg %p3860
      $region46: #{tpu_custom_call.1} parent=5 // pred_check_branch
        %3863 = sbr.rel (%p3861) target = $region48
      $region47: #{tpu_custom_call.1} parent=5 // pred_region
        %s3864 = ssub.s32 %s14, 2
        // Predicated region
        $region49: #{tpu_custom_call.1} parent=47 // pred_check
          %p3865 = pneg %p111
        $region50: #{tpu_custom_call.1} parent=47 // pred_check_branch
          %3867 = sbr.rel (%p3865) target = $region52
        $region51: #{tpu_custom_call.1} parent=47 // pred_region
          %s3868 = sand.u32 %s96, 1
          %s3869 = scalar_lea.sflag [#allocation3], %s3868
          %s3870 = sand.u32 %s96, 1
          %s3871 = smul.addr %s3870, 128
          %s3872 = scalar_lea.vmem [#allocation7], %s3871
          %3873 = dma.done %s3869, 2048
        $region52: #{tpu_custom_call.1} parent=47 // pred_fallthru
          _
      $region48: #{tpu_custom_call.1} parent=5 // pred_fallthru
        _
    $region6: #{tpu_custom_call.1} parent=1 // loop_footer
      %s18 = sadd.s32 1, %s14
    $region7: #{tpu_custom_call.1} parent=1 // loop_footer_branch
      %13 = sbr.rel target = $region3
    $region8: #{tpu_custom_call.1} parent=1 // loop_exit
      _
    %3874 = vsyncpa [#allocation3], 1
    %s3875 = scalar_lea.sflag [#allocation3], 1
    %3876 = vsyncpa %s3875, 1
    %3877 = vsyncpa [#allocation4], 1
    %s3878 = scalar_lea.sflag [#allocation4], 1
    %3879 = vsyncpa %s3878, 1
    %3880 = vsyncpa [#allocation6], 1

</llo_original>
